<compile_context>
chip_gen: v5e
topology: v5e:2x2
jax: 0.10.0
libtpu: 0.0.40
codegen_flags: <defaults>
</compile_context>

<pallas_src>
import functools
import math

import jax
import jax.numpy as jnp
from jax.experimental import pallas as pl
from jax.experimental.pallas import tpu as pltpu


def _round_up(x, m):
    return (x + m - 1) // m * m


def _pick_tile(n, max_tile):
    """Pick a row/col tile (multiple of 128) and the padded N it implies."""
    n128 = _round_up(n, 128)
    cap = max(128, (max_tile // 128) * 128)
    if n128 <= cap:
        return n128, n128                       # one block covers the whole axis
    for t in (2048, 1024, 512, 256):
        if t <= cap and (_round_up(n, t) - n128) * 4 <= n128:   # <=25% extra pad
            return t, _round_up(n, t)
    return 128, n128


def _make_cheb_kernel(K, nbuf, tn, tc, out_dtype, resident_gso):
    """Grid = (K-1 stages, row blocks, gso-column blocks); stage s builds T_{s+1}."""

    def kernel(x_hbm, gso_in, w_ref, b_ref, o_ref, *scratch):
        if resident_gso:
            t_ref, oacc_ref, acc_ref, gso_vmem, sem = scratch
        else:
            t_ref, oacc_ref, acc_ref, sem = scratch

        s = pl.program_id(0)        # Chebyshev stage: computes T_{s+1}
        i = pl.program_id(1)        # output / gso row block
        j = pl.program_id(2)        # gso column block (reduction axis)
        nj = pl.num_programs(2)

        row_start = pl.multiple_of(i * tn, 128)
        col_start = pl.multiple_of(j * tc, 128)

        # One-time seeding at the very first grid step: T_0 <- x via a single DMA
        # (x is never re-fetched), and on the resident path gso HBM -> VMEM once.
        @pl.when((s == 0) & (i == 0) & (j == 0))
        def _seed():
            cx = pltpu.make_async_copy(x_hbm, t_ref.at[0], sem.at[0])
            cx.start()
            if resident_gso:
                cg = pltpu.make_async_copy(gso_in, gso_vmem, sem.at[1])
                cg.start()
                cg.wait()
            cx.wait()

        @pl.when(j == 0)
        def _zero_acc():
            acc_ref[...] = jnp.zeros_like(acc_ref)

        # Partial product gso[rows_i, cols_j] @ T_s[cols_j, :].  gso may be bf16
        # (wrapper choice) -> cast the T operand to match (narrow MXU rate);
        # accumulation stays f32.
        if resident_gso:
            g_blk = gso_vmem[pl.ds(row_start, tn), pl.ds(col_start, tc)]
        else:
            g_blk = gso_in[...]
        t_blk = t_ref[s % nbuf, pl.ds(col_start, tc), :].astype(g_blk.dtype)
        acc_ref[...] += jnp.dot(g_blk, t_blk, preferred_element_type=jnp.float32)

        # Column reduction done for this row block:
        #   T_1     =     gso @ T_0
        #   T_{s+1} = 2 * gso @ T_s - T_{s-1}      (s >= 1)
        # then fold T_{s+1} @ W_{s+1} straight into the projection accumulator
        # (rolling nbuf<=3 deep T ring => VMEM independent of K).
        @pl.when(j == nj - 1)
        def _finalize():
            rows = pl.ds(row_start, tn)
            nxt = (s + 1) % nbuf
            prev = jnp.maximum(s - 1, 0) % nbuf       # initialized buffer at s == 0
            scale = jnp.where(s == 0, 1.0, 2.0).astype(jnp.float32)
            sub = jnp.where(s == 0, 0.0, 1.0).astype(jnp.float32)
            t_new = scale * acc_ref[...] - sub * t_ref[prev, rows, :]
            t_ref[nxt, rows, :] = t_new

            @pl.when(s == 0)
            def _():    # out[rows] = bias + T_0 @ W_0 + T_1 @ W_1
                oacc_ref[rows, :] = (
                    b_ref[...]
                    + jnp.dot(t_ref[0, rows, :], w_ref[0],
                              preferred_element_type=jnp.float32)
                    + jnp.dot(t_new, w_ref[1],
                              preferred_element_type=jnp.float32))

            @pl.when(s > 0)
            def _():    # out[rows] += T_{s+1} @ W_{s+1}
                oacc_ref[rows, :] = oacc_ref[rows, :] + jnp.dot(
                    t_new, w_ref[s + 1], preferred_element_type=jnp.float32)

            # Write the running sum; the last stage's write is the final result.
            o_ref[...] = oacc_ref[rows, :].astype(out_dtype)

    return kernel


def _make_linear_kernel(out_dtype):
    """K == 1 degenerate case: out = x @ W_0 + bias."""

    def kernel(x_ref, w_ref, b_ref, o_ref):
        o_ref[...] = (jnp.dot(x_ref[...], w_ref[...],
                              preferred_element_type=jnp.float32)
                      + b_ref[...]).astype(out_dtype)

    return kernel


@functools.partial(jax.jit,
                   static_argnames=("gso_dtype", "gso_resident", "max_tile"))
def cheb_graph_conv(x, gso, weight, bias=None, *, gso_dtype=jnp.float32,
                    gso_resident=None, max_tile=1024):
    """Chebyshev graph convolution forward.

    x: [N, Fin] f32, gso: [N, N] dense, weight: [K, Fin, Fout], bias: [Fout]/None.
    gso_dtype: dtype of the streamed/resident gso operand (bf16 halves its HBM/VMEM
      traffic; accumulation stays f32).  gso_resident: force/disable the resident-gso
      fast path (None = auto from VMEM capacity).  max_tile: cap on the node tile.
    """
    K, fin_w, fout = weight.shape
    n, fin = x.shape
    assert fin == fin_w, "x feature dim must match weight in_features"
    if K < 1:
        raise ValueError("K must be >= 1")

    out_dtype = x.dtype
    fin_pad = _round_up(fin, 128)        # lane-dense T / acc stores
    fout_pad = _round_up(fout, 128)      # lane-dense output stores
    tile, n_pad = _pick_tile(n, max_tile)
    tn = tc = tile

    x_p = jnp.zeros((n_pad, fin_pad), jnp.float32).at[:n, :fin].set(
        x.astype(jnp.float32))
    w_p = jnp.zeros((K, fin_pad, fout_pad), jnp.float32).at[:, :fin, :fout].set(
        weight.astype(jnp.float32))
    if bias is None:
        b_p = jnp.zeros((1, fout_pad), jnp.float32)
    else:
        b_p = jnp.zeros((1, fout_pad), jnp.float32).at[0, :fout].set(
            jnp.reshape(bias, (-1,)).astype(jnp.float32))

    if K == 1:
        out = pl.pallas_call(
            _make_linear_kernel(out_dtype),
            out_shape=jax.ShapeDtypeStruct((n_pad, fout_pad), out_dtype),
            grid_spec=pltpu.PrefetchScalarGridSpec(
                num_scalar_prefetch=0,
                grid=(n_pad // tn,),
                in_specs=[
                    pl.BlockSpec((tn, fin_pad), lambda i: (i, 0)),
                    pl.BlockSpec((fin_pad, fout_pad), lambda i: (0, 0)),
                    pl.BlockSpec((1, fout_pad), lambda i: (0, 0)),
                ],
                out_specs=pl.BlockSpec((tn, fout_pad), lambda i: (i, 0)),
            ),
            compiler_params=pltpu.CompilerParams(
                dimension_semantics=("parallel",)),
        )(x_p, w_p[0], b_p)
        return out[:n, :fout]

    gso_p = jnp.zeros((n_pad, n_pad), jnp.float32).at[:n, :n].set(
        gso.astype(jnp.float32)).astype(gso_dtype)

    num_stages = K - 1
    nbuf = min(K, 3)
    gso_elem = jnp.dtype(gso_dtype).itemsize
    out_elem = jnp.dtype(out_dtype).itemsize

    # VMEM accounting: all minor dims are already 128-lane padded, so this is exact.
    fixed_vmem = (
        nbuf * n_pad * fin_pad * 4           # rolling T ring
        + n_pad * fout_pad * 4               # projection accumulator
        + tn * fin_pad * 4                   # column-reduction accumulator
        + 2 * K * fin_pad * fout_pad * 4     # weight (double-buffered input block)
        + 2 * 8 * fout_pad * 4               # bias (sublane-padded)
        + 2 * tn * fout_pad * out_elem)      # output block (double-buffered)
    resident_vmem = fixed_vmem + n_pad * n_pad * gso_elem     # gso fetched once
    streamed_vmem = fixed_vmem + 2 * tn * tc * gso_elem       # gso streamed (K-1)x

    try:
        vmem_cap = int(pltpu.get_tpu_info().vmem_capacity_bytes)
    except Exception:  # conservative default that is legal on every generation
        vmem_cap = 64 * 1024 * 1024
    if gso_resident is None:
        resident = resident_vmem <= vmem_cap - 8 * 1024 * 1024
    else:
        resident = bool(gso_resident)

    need = resident_vmem if resident else streamed_vmem
    vmem_limit = int(min(vmem_cap, max(need + 4 * 1024 * 1024, 16 * 1024 * 1024)))

    gso_passes = 1 if resident else num_stages
    flops = (2.0 * n_pad * n_pad * fin_pad * num_stages          # recurrence matmuls
             + 2.0 * n_pad * K * fin_pad * fout_pad)             # projection
    bytes_accessed = (gso_passes * n_pad * n_pad * gso_elem
                      + n_pad * fin_pad * 4
                      + K * fin_pad * fout_pad * 4
                      + num_stages * n_pad * fout_pad * out_elem)

    if resident:
        gso_spec = pl.BlockSpec(memory_space=pl.ANY)              # one manual DMA
    else:
        gso_spec = pl.BlockSpec((tn, tc), lambda s, i, j: (i, j)) # pipelined stream

    scratch = [
        pltpu.VMEM((nbuf, n_pad, fin_pad), jnp.float32),   # rolling T ring
        pltpu.VMEM((n_pad, fout_pad), jnp.float32),        # projection accumulator
        pltpu.VMEM((tn, fin_pad), jnp.float32),            # column-reduction acc
    ]
    if resident:
        scratch.append(pltpu.VMEM((n_pad, n_pad), gso_dtype))     # resident gso
    scratch.append(pltpu.SemaphoreType.DMA((2,)))

    out = pl.pallas_call(
        _make_cheb_kernel(K, nbuf, tn, tc, out_dtype, resident),
        out_shape=jax.ShapeDtypeStruct((n_pad, fout_pad), out_dtype),
        grid_spec=pltpu.PrefetchScalarGridSpec(
            num_scalar_prefetch=0,
            grid=(num_stages, n_pad // tn, n_pad // tc),
            in_specs=[
                pl.BlockSpec(memory_space=pl.ANY),                 # x: DMA'd once
                gso_spec,                                          # gso
                pl.BlockSpec((K, fin_pad, fout_pad), lambda s, i, j: (0, 0, 0)),
                pl.BlockSpec((1, fout_pad), lambda s, i, j: (0, 0)),
            ],
            out_specs=pl.BlockSpec((tn, fout_pad), lambda s, i, j: (i, 0)),
            scratch_shapes=scratch,
        ),
        compiler_params=pltpu.CompilerParams(
            # Stage s+1 needs every row of T_s through the shared VMEM ring, so
            # neither the stage nor the row axis may be sharded across cores.
            dimension_semantics=("arbitrary", "arbitrary", "arbitrary"),
            vmem_limit_bytes=vmem_limit,
        ),
        cost_estimate=pl.CostEstimate(
            flops=int(flops), transcendentals=0,
            bytes_accessed=int(bytes_accessed)),
    )(x_p, gso_p, w_p, b_p)

    return out[:n, :fout]


def reference_cheb(x, gso, weight, bias):
    K = weight.shape[0]
    feats = [x]
    if K >= 2:
        feats.append(gso @ x)
        for k in range(2, K):
            feats.append(2.0 * (gso @ feats[k - 1]) - feats[k - 2])
    feature = jnp.stack(feats, axis=0)
    out = jnp.einsum("bij,bjk->ik", feature, weight)
    return out + bias[None, :]


if __name__ == "__main__":
    # Small, module-consistent shapes; N deliberately not a multiple of 128 and
    # Fout < 128 so padding / multi-block / streaming paths are all exercised.
    K = 3            # Chebyshev order
    N = 300          # number of graph nodes
    Fin = 32         # in_features
    Fout = 64        # out_features

    key = jax.random.PRNGKey(0)
    kx, kg, kw, kw4, kb = jax.random.split(key, 5)

    x = jax.random.normal(kx, (N, Fin), dtype=jnp.float32)
    g = jax.random.normal(kg, (N, N), dtype=jnp.float32)
    gso = (g + g.T) / (2.0 * math.sqrt(N))       # symmetric, scaled dense GSO

    # Init mimicking kaiming_uniform_(a=sqrt(5)) + uniform bias (fan_in = Fin*Fout).
    fan_in = Fin * Fout
    w_bound = math.sqrt(6.0 / ((1.0 + 5.0) * fan_in))
    weight = jax.random.uniform(kw, (K, Fin, Fout), minval=-w_bound, maxval=w_bound,
                                dtype=jnp.float32)
    b_bound = 1.0 / math.sqrt(fan_in)
    bias = jax.random.uniform(kb, (Fout,), minval=-b_bound, maxval=b_bound,
                              dtype=jnp.float32)

    ref = reference_cheb(x, gso, weight, bias)

    # Auto path: resident gso, single row/col block at this size.
    out = jax.block_until_ready(cheb_graph_conv(x, gso, weight, bias))
    assert out.shape == (N, Fout)
    assert jnp.allclose(out, ref, atol=2e-3, rtol=2e-3), "f32 resident mismatch"

    # Forced streamed-gso, multi-block grid (exercises the pipelined gso stream).
    out_s = jax.block_until_ready(
        cheb_graph_conv(x, gso, weight, bias, gso_resident=False, max_tile=128))
    assert jnp.allclose(out_s, ref, atol=2e-3, rtol=2e-3), "f32 streamed mismatch"

    # bf16 gso fast path (f32 accumulation) — opt-in, reduced precision.
    out_bf = jax.block_until_ready(
        cheb_graph_conv(x, gso, weight, bias, gso_dtype=jnp.bfloat16))
    assert jnp.allclose(out_bf, ref, atol=5e-2, rtol=5e-2), "bf16 mismatch"

    # K == 4 exercises the rolling 3-deep T ring wrap-around + streaming grid.
    weight4 = jax.random.uniform(kw4, (4, Fin, Fout), minval=-w_bound,
                                 maxval=w_bound, dtype=jnp.float32)
    ref4 = reference_cheb(x, gso, weight4, bias)
    out4 = jax.block_until_ready(
        cheb_graph_conv(x, gso, weight4, bias, gso_resident=False, max_tile=128))
    assert jnp.allclose(out4, ref4, atol=2e-3, rtol=2e-3), "K=4 mismatch"

    # K == 1 degenerate path.
    out1 = jax.block_until_ready(cheb_graph_conv(x, gso, weight[:1], bias))
    ref1 = x @ weight[0] + bias[None, :]
    assert jnp.allclose(out1, ref1, atol=2e-3, rtol=2e-3), "K=1 mismatch"

    print("KERNEL_OK")
</pallas_src>

<mosaic_0001>
module attributes {stable_mosaic.version = 11 : i64} {
  func.func @kernel(%arg0: i32, %arg1: i32, %arg2: i32, %arg3: memref<384x128xf32, #tpu.memory_space<any>>, %arg4: memref<384x384xf32, #tpu.memory_space<any>>, %arg5: memref<3x128x128xf32, #tpu.memory_space<vmem>>, %arg6: memref<1x128xf32, #tpu.memory_space<vmem>>, %arg7: memref<384x128xf32, #tpu.memory_space<vmem>>, %arg8: memref<3x384x128xf32, #tpu.memory_space<vmem>>, %arg9: memref<384x128xf32, #tpu.memory_space<vmem>>, %arg10: memref<384x128xf32, #tpu.memory_space<vmem>>, %arg11: memref<384x384xf32, #tpu.memory_space<vmem>>, %arg12: memref<2x!tpu.dma_semaphore, #tpu.memory_space<semaphore_mem>>) attributes {dimension_semantics = [#tpu.dimension_semantics<arbitrary>, #tpu.dimension_semantics<arbitrary>, #tpu.dimension_semantics<arbitrary>], iteration_bounds = array<i64: 2, 1, 1>, scalar_prefetch = 0 : i64, scratch_operands = 5 : i64, tpu.core_type = #tpu.core_type<tc>, window_params = [{}, {}, {pipeline_mode = #tpu.pipeline_mode<synchronous>, transform_indices = @transform_2, window_bounds = array<i64: 3, 128, 128>}, {pipeline_mode = #tpu.pipeline_mode<synchronous>, transform_indices = @transform_3, window_bounds = array<i64: 1, 128>}, {transform_indices = @transform_4, window_bounds = array<i64: 384, 128>}]} {
    %c384_i32 = arith.constant 384 : i32
    %0 = arith.muli %arg1, %c384_i32 : i32
    %1 = tpu.assume_multiple %0, 128 : i32
    %c384_i32_0 = arith.constant 384 : i32
    %2 = arith.muli %arg2, %c384_i32_0 : i32
    %3 = tpu.assume_multiple %2, 128 : i32
    %c0_i32 = arith.constant 0 : i32
    %4 = arith.cmpi eq, %arg0, %c0_i32 : i32
    %c0_i32_1 = arith.constant 0 : i32
    %5 = arith.cmpi eq, %arg1, %c0_i32_1 : i32
    %6 = arith.andi %4, %5 : i1
    %c0_i32_2 = arith.constant 0 : i32
    %7 = arith.cmpi eq, %arg2, %c0_i32_2 : i32
    %8 = arith.andi %6, %7 : i1
    %9 = arith.extui %8 : i1 to i32
    %c0_i32_3 = arith.constant 0 : i32
    %10 = arith.cmpi ne, %9, %c0_i32_3 : i32
    scf.if %10 {
      %c0_i32_16 = arith.constant 0 : i32
      %c0_i32_17 = arith.constant 0 : i32
      %c0_i32_18 = arith.constant 0 : i32
      %c0_i32_19 = arith.constant 0 : i32
      %38 = tpu.memref_slice %arg8[%c0_i32_16, %c0_i32_18, %c0_i32_19] : memref<3x384x128xf32, #tpu.memory_space<vmem>> -> memref<1x384x128xf32, #tpu.memory_space<vmem>>
      %39 = tpu.memref_squeeze %38 : memref<1x384x128xf32, #tpu.memory_space<vmem>> -> memref<384x128xf32, #tpu.memory_space<vmem>>
      %40 = tpu.memref_slice %arg12[%c0_i32_17] : memref<2x!tpu.dma_semaphore, #tpu.memory_space<semaphore_mem>> -> memref<1x!tpu.dma_semaphore, #tpu.memory_space<semaphore_mem>>
      %41 = tpu.memref_squeeze %40 : memref<1x!tpu.dma_semaphore, #tpu.memory_space<semaphore_mem>> -> memref<!tpu.dma_semaphore, #tpu.memory_space<semaphore_mem>>
      tpu.enqueue_dma source(%arg3 : memref<384x128xf32, #tpu.memory_space<any>>) target(%39 : memref<384x128xf32, #tpu.memory_space<vmem>>) target_semaphore(%41 : memref<!tpu.dma_semaphore, #tpu.memory_space<semaphore_mem>>)
      %c1_i32_20 = arith.constant 1 : i32
      %42 = tpu.memref_slice %arg12[%c1_i32_20] : memref<2x!tpu.dma_semaphore, #tpu.memory_space<semaphore_mem>> -> memref<1x!tpu.dma_semaphore, #tpu.memory_space<semaphore_mem>>
      %43 = tpu.memref_squeeze %42 : memref<1x!tpu.dma_semaphore, #tpu.memory_space<semaphore_mem>> -> memref<!tpu.dma_semaphore, #tpu.memory_space<semaphore_mem>>
      tpu.enqueue_dma source(%arg4 : memref<384x384xf32, #tpu.memory_space<any>>) target(%arg11 : memref<384x384xf32, #tpu.memory_space<vmem>>) target_semaphore(%43 : memref<!tpu.dma_semaphore, #tpu.memory_space<semaphore_mem>>)
      %c1_i32_21 = arith.constant 1 : i32
      %44 = tpu.memref_slice %arg12[%c1_i32_21] : memref<2x!tpu.dma_semaphore, #tpu.memory_space<semaphore_mem>> -> memref<1x!tpu.dma_semaphore, #tpu.memory_space<semaphore_mem>>
      %45 = tpu.memref_squeeze %44 : memref<1x!tpu.dma_semaphore, #tpu.memory_space<semaphore_mem>> -> memref<!tpu.dma_semaphore, #tpu.memory_space<semaphore_mem>>
      tpu.wait_dma2 semaphore(%45 : memref<!tpu.dma_semaphore, #tpu.memory_space<semaphore_mem>>) src(%arg4 : memref<384x384xf32, #tpu.memory_space<any>>) dst(%arg11 : memref<384x384xf32, #tpu.memory_space<vmem>>)
      %c0_i32_22 = arith.constant 0 : i32
      %c0_i32_23 = arith.constant 0 : i32
      %c0_i32_24 = arith.constant 0 : i32
      %c0_i32_25 = arith.constant 0 : i32
      %46 = tpu.memref_slice %arg8[%c0_i32_22, %c0_i32_24, %c0_i32_25] : memref<3x384x128xf32, #tpu.memory_space<vmem>> -> memref<1x384x128xf32, #tpu.memory_space<vmem>>
      %47 = tpu.memref_squeeze %46 : memref<1x384x128xf32, #tpu.memory_space<vmem>> -> memref<384x128xf32, #tpu.memory_space<vmem>>
      %48 = tpu.memref_slice %arg12[%c0_i32_23] : memref<2x!tpu.dma_semaphore, #tpu.memory_space<semaphore_mem>> -> memref<1x!tpu.dma_semaphore, #tpu.memory_space<semaphore_mem>>
      %49 = tpu.memref_squeeze %48 : memref<1x!tpu.dma_semaphore, #tpu.memory_space<semaphore_mem>> -> memref<!tpu.dma_semaphore, #tpu.memory_space<semaphore_mem>>
      tpu.wait_dma2 semaphore(%49 : memref<!tpu.dma_semaphore, #tpu.memory_space<semaphore_mem>>) src(%arg3 : memref<384x128xf32, #tpu.memory_space<any>>) dst(%47 : memref<384x128xf32, #tpu.memory_space<vmem>>)
    } else {
    }
    %c0_i32_4 = arith.constant 0 : i32
    %11 = arith.cmpi eq, %arg2, %c0_i32_4 : i32
    %12 = arith.extui %11 : i1 to i32
    %c0_i32_5 = arith.constant 0 : i32
    %13 = arith.cmpi ne, %12, %c0_i32_5 : i32
    scf.if %13 {
      %cst_16 = arith.constant 0.000000e+00 : f32
      %38 = vector.broadcast %cst_16 : f32 to vector<384x128xf32>
      %c0_17 = arith.constant 0 : index
      %c0_18 = arith.constant 0 : index
      %39 = vector.load %arg10[%c0_17, %c0_18] : memref<384x128xf32, #tpu.memory_space<vmem>>, vector<384x128xf32>
      tpu.vector_store %arg10[%c0_17, %c0_18], %38 {strides = array<i32>} : memref<384x128xf32, #tpu.memory_space<vmem>>, vector<384x128xf32>,
    } else {
    }
    %14 = arith.index_cast %1 : i32 to index
    %15 = arith.index_cast %3 : i32 to index
    %16 = vector.load %arg11[%14, %15] : memref<384x384xf32, #tpu.memory_space<vmem>>, vector<384x384xf32>
    %c3_i32 = arith.constant 3 : i32
    %c0_i32_6 = arith.constant 0 : i32
    %17 = arith.cmpi eq, %c3_i32, %c0_i32_6 : i32
    %c1_i32 = arith.constant 1 : i32
    %18 = arith.select %17, %c1_i32, %c3_i32 : i32
    %19 = arith.remsi %arg0, %18 : i32
    %c0_i32_7 = arith.constant 0 : i32
    %20 = arith.cmpi ne, %19, %c0_i32_7 : i32
    %c0_i32_8 = arith.constant 0 : i32
    %21 = arith.cmpi slt, %19, %c0_i32_8 : i32
    %c0_i32_9 = arith.constant 0 : i32
    %22 = arith.cmpi slt, %18, %c0_i32_9 : i32
    %23 = arith.xori %21, %22 : i1
    %24 = arith.andi %23, %20 : i1
    %25 = arith.addi %19, %18 : i32
    %26 = arith.select %24, %25, %19 : i32
    %27 = arith.index_cast %26 : i32 to index
    %28 = arith.index_cast %3 : i32 to index
    %c0 = arith.constant 0 : index
    %29 = vector.load %arg8[%27, %28, %c0] : memref<3x384x128xf32, #tpu.memory_space<vmem>>, vector<1x384x128xf32>
    %30 = vector.shape_cast %29 : vector<1x384x128xf32> to vector<384x128xf32>
    %c0_10 = arith.constant 0 : index
    %c0_11 = arith.constant 0 : index
    %31 = vector.load %arg10[%c0_10, %c0_11] : memref<384x128xf32, #tpu.memory_space<vmem>>, vector<384x128xf32>
    %cst = arith.constant dense<0.000000e+00> : vector<384x128xf32>
    %32 = tpu.matmul %16, %30, %cst {dimension_numbers = #tpu.dot_dimension_numbers<[1], [0], [0], [1], [0, 0, 1, 1], [], []>} : vector<384x384xf32>, vector<384x128xf32>, vector<384x128xf32> -> vector<384x128xf32>
    %33 = arith.addf %31, %32 : vector<384x128xf32>
    %c0_12 = arith.constant 0 : index
    %c0_13 = arith.constant 0 : index
    %34 = vector.load %arg10[%c0_12, %c0_13] : memref<384x128xf32, #tpu.memory_space<vmem>>, vector<384x128xf32>
    tpu.vector_store %arg10[%c0_12, %c0_13], %33 {strides = array<i32>} : memref<384x128xf32, #tpu.memory_space<vmem>>, vector<384x128xf32>,
    %c0_i32_14 = arith.constant 0 : i32
    %35 = arith.cmpi eq, %arg2, %c0_i32_14 : i32
    %36 = arith.extui %35 : i1 to i32
    %c0_i32_15 = arith.constant 0 : i32
    %37 = arith.cmpi ne, %36, %c0_i32_15 : i32
    scf.if %37 {
      %c1_i32_16 = arith.constant 1 : i32
      %38 = arith.addi %arg0, %c1_i32_16 : i32
      %c3_i32_17 = arith.constant 3 : i32
      %c0_i32_18 = arith.constant 0 : i32
      %39 = arith.cmpi eq, %c3_i32_17, %c0_i32_18 : i32
      %c1_i32_19 = arith.constant 1 : i32
      %40 = arith.select %39, %c1_i32_19, %c3_i32_17 : i32
      %41 = arith.remsi %38, %40 : i32
      %c0_i32_20 = arith.constant 0 : i32
      %42 = arith.cmpi ne, %41, %c0_i32_20 : i32
      %c0_i32_21 = arith.constant 0 : i32
      %43 = arith.cmpi slt, %41, %c0_i32_21 : i32
      %c0_i32_22 = arith.constant 0 : i32
      %44 = arith.cmpi slt, %40, %c0_i32_22 : i32
      %45 = arith.xori %43, %44 : i1
      %46 = arith.andi %45, %42 : i1
      %47 = arith.addi %41, %40 : i32
      %48 = arith.select %46, %47, %41 : i32
      %c1_i32_23 = arith.constant 1 : i32
      %49 = arith.subi %arg0, %c1_i32_23 : i32
      %c0_i32_24 = arith.constant 0 : i32
      %50 = arith.maxsi %49, %c0_i32_24 : i32
      %c3_i32_25 = arith.constant 3 : i32
      %c0_i32_26 = arith.constant 0 : i32
      %51 = arith.cmpi eq, %c3_i32_25, %c0_i32_26 : i32
      %c1_i32_27 = arith.constant 1 : i32
      %52 = arith.select %51, %c1_i32_27, %c3_i32_25 : i32
      %53 = arith.remsi %50, %52 : i32
      %c0_i32_28 = arith.constant 0 : i32
      %54 = arith.cmpi ne, %53, %c0_i32_28 : i32
      %c0_i32_29 = arith.constant 0 : i32
      %55 = arith.cmpi slt, %53, %c0_i32_29 : i32
      %c0_i32_30 = arith.constant 0 : i32
      %56 = arith.cmpi slt, %52, %c0_i32_30 : i32
      %57 = arith.xori %55, %56 : i1
      %58 = arith.andi %57, %54 : i1
      %59 = arith.addi %53, %52 : i32
      %60 = arith.select %58, %59, %53 : i32
      %c0_i32_31 = arith.constant 0 : i32
      %61 = arith.cmpi eq, %arg0, %c0_i32_31 : i32
      %cst_32 = arith.constant 1.000000e+00 : f32
      %cst_33 = arith.constant 2.000000e+00 : f32
      %62 = arith.select %61, %cst_32, %cst_33 : f32
      %c0_i32_34 = arith.constant 0 : i32
      %63 = arith.cmpi eq, %arg0, %c0_i32_34 : i32
      %cst_35 = arith.constant 0.000000e+00 : f32
      %cst_36 = arith.constant 1.000000e+00 : f32
      %64 = arith.select %63, %cst_35, %cst_36 : f32
      %c0_37 = arith.constant 0 : index
      %c0_38 = arith.constant 0 : index
      %65 = vector.load %arg10[%c0_37, %c0_38] : memref<384x128xf32, #tpu.memory_space<vmem>>, vector<384x128xf32>
      %66 = vector.broadcast %62 : f32 to vector<384x128xf32>
      %67 = arith.mulf %66, %65 : vector<384x128xf32>
      %68 = arith.index_cast %60 : i32 to index
      %69 = arith.index_cast %1 : i32 to index
      %c0_39 = arith.constant 0 : index
      %70 = vector.load %arg8[%68, %69, %c0_39] : memref<3x384x128xf32, #tpu.memory_space<vmem>>, vector<1x384x128xf32>
      %71 = vector.shape_cast %70 : vector<1x384x128xf32> to vector<384x128xf32>
      %72 = vector.broadcast %64 : f32 to vector<384x128xf32>
      %73 = arith.mulf %72, %71 : vector<384x128xf32>
      %74 = arith.subf %67, %73 : vector<384x128xf32>
      %75 = arith.index_cast %48 : i32 to index
      %76 = arith.index_cast %1 : i32 to index
      %c0_40 = arith.constant 0 : index
      %77 = vector.load %arg8[%75, %76, %c0_40] : memref<3x384x128xf32, #tpu.memory_space<vmem>>, vector<1x384x128xf32>
      %78 = vector.shape_cast %77 : vector<1x384x128xf32> to vector<384x128xf32>
      %79 = vector.shape_cast %74 : vector<384x128xf32> to vector<1x384x128xf32>
      tpu.vector_store %arg8[%75, %76, %c0_40], %79 {strides = array<i32>} : memref<3x384x128xf32, #tpu.memory_space<vmem>>, vector<1x384x128xf32>,
      %c0_i32_41 = arith.constant 0 : i32
      %80 = arith.cmpi eq, %arg0, %c0_i32_41 : i32
      %81 = arith.extui %80 : i1 to i32
      %c0_i32_42 = arith.constant 0 : i32
      %82 = arith.cmpi ne, %81, %c0_i32_42 : i32
      scf.if %82 {
        %c0_48 = arith.constant 0 : index
        %c0_49 = arith.constant 0 : index
        %89 = vector.load %arg6[%c0_48, %c0_49] : memref<1x128xf32, #tpu.memory_space<vmem>>, vector<1x128xf32>
        %c0_50 = arith.constant 0 : index
        %90 = arith.index_cast %1 : i32 to index
        %c0_51 = arith.constant 0 : index
        %91 = vector.load %arg8[%c0_50, %90, %c0_51] : memref<3x384x128xf32, #tpu.memory_space<vmem>>, vector<1x384x128xf32>
        %92 = vector.shape_cast %91 : vector<1x384x128xf32> to vector<384x128xf32>
        %c0_52 = arith.constant 0 : index
        %c0_53 = arith.constant 0 : index
        %c0_54 = arith.constant 0 : index
        %93 = vector.load %arg5[%c0_52, %c0_53, %c0_54] : memref<3x128x128xf32, #tpu.memory_space<vmem>>, vector<1x128x128xf32>
        %94 = vector.shape_cast %93 : vector<1x128x128xf32> to vector<128x128xf32>
        %cst_55 = arith.constant dense<0.000000e+00> : vector<384x128xf32>
        %95 = tpu.matmul %92, %94, %cst_55 {dimension_numbers = #tpu.dot_dimension_numbers<[1], [0], [0], [1], [0, 0, 1, 1], [], []>} : vector<384x128xf32>, vector<128x128xf32>, vector<384x128xf32> -> vector<384x128xf32>
        %96 = vector.broadcast %89 : vector<1x128xf32> to vector<384x128xf32>
        %97 = arith.addf %96, %95 : vector<384x128xf32>
        %c1 = arith.constant 1 : index
        %c0_56 = arith.constant 0 : index
        %c0_57 = arith.constant 0 : index
        %98 = vector.load %arg5[%c1, %c0_56, %c0_57] : memref<3x128x128xf32, #tpu.memory_space<vmem>>, vector<1x128x128xf32>
        %99 = vector.shape_cast %98 : vector<1x128x128xf32> to vector<128x128xf32>
        %cst_58 = arith.constant dense<0.000000e+00> : vector<384x128xf32>
        %100 = tpu.matmul %74, %99, %cst_58 {dimension_numbers = #tpu.dot_dimension_numbers<[1], [0], [0], [1], [0, 0, 1, 1], [], []>} : vector<384x128xf32>, vector<128x128xf32>, vector<384x128xf32> -> vector<384x128xf32>
        %101 = arith.addf %97, %100 : vector<384x128xf32>
        %102 = arith.index_cast %1 : i32 to index
        %c0_59 = arith.constant 0 : index
        %103 = vector.load %arg9[%102, %c0_59] : memref<384x128xf32, #tpu.memory_space<vmem>>, vector<384x128xf32>
        tpu.vector_store %arg9[%102, %c0_59], %101 {strides = array<i32>} : memref<384x128xf32, #tpu.memory_space<vmem>>, vector<384x128xf32>,
      } else {
      }
      %c0_i32_43 = arith.constant 0 : i32
      %83 = arith.cmpi sgt, %arg0, %c0_i32_43 : i32
      %84 = arith.extui %83 : i1 to i32
      %c0_i32_44 = arith.constant 0 : i32
      %85 = arith.cmpi ne, %84, %c0_i32_44 : i32
      scf.if %85 {
        %89 = arith.index_cast %1 : i32 to index
        %c0_48 = arith.constant 0 : index
        %90 = vector.load %arg9[%89, %c0_48] : memref<384x128xf32, #tpu.memory_space<vmem>>, vector<384x128xf32>
        %c1_i32_49 = arith.constant 1 : i32
        %91 = arith.addi %arg0, %c1_i32_49 : i32
        %92 = arith.index_cast %91 : i32 to index
        %c0_50 = arith.constant 0 : index
        %c0_51 = arith.constant 0 : index
        %93 = vector.load %arg5[%92, %c0_50, %c0_51] : memref<3x128x128xf32, #tpu.memory_space<vmem>>, vector<1x128x128xf32>
        %94 = vector.shape_cast %93 : vector<1x128x128xf32> to vector<128x128xf32>
        %cst_52 = arith.constant dense<0.000000e+00> : vector<384x128xf32>
        %95 = tpu.matmul %74, %94, %cst_52 {dimension_numbers = #tpu.dot_dimension_numbers<[1], [0], [0], [1], [0, 0, 1, 1], [], []>} : vector<384x128xf32>, vector<128x128xf32>, vector<384x128xf32> -> vector<384x128xf32>
        %96 = arith.addf %90, %95 : vector<384x128xf32>
        %97 = arith.index_cast %1 : i32 to index
        %c0_53 = arith.constant 0 : index
        %98 = vector.load %arg9[%97, %c0_53] : memref<384x128xf32, #tpu.memory_space<vmem>>, vector<384x128xf32>
        tpu.vector_store %arg9[%97, %c0_53], %96 {strides = array<i32>} : memref<384x128xf32, #tpu.memory_space<vmem>>, vector<384x128xf32>,
      } else {
      }
      %86 = arith.index_cast %1 : i32 to index
      %c0_45 = arith.constant 0 : index
      %87 = vector.load %arg9[%86, %c0_45] : memref<384x128xf32, #tpu.memory_space<vmem>>, vector<384x128xf32>
      %c0_46 = arith.constant 0 : index
      %c0_47 = arith.constant 0 : index
      %88 = vector.load %arg7[%c0_46, %c0_47] : memref<384x128xf32, #tpu.memory_space<vmem>>, vector<384x128xf32>
      tpu.vector_store %arg7[%c0_46, %c0_47], %87 {strides = array<i32>} : memref<384x128xf32, #tpu.memory_space<vmem>>, vector<384x128xf32>,
    } else {
    }
    return
  }
  func.func @transform_2(%arg0: i32, %arg1: i32, %arg2: i32) -> (i32, i32, i32) {
    %c0_i32 = arith.constant 0 : i32
    %c0_i32_0 = arith.constant 0 : i32
    %c0_i32_1 = arith.constant 0 : i32
    %c0_i32_2 = arith.constant 0 : i32
    return %c0_i32, %c0_i32_0, %c0_i32_1 : i32, i32, i32
  }
  func.func @transform_3(%arg0: i32, %arg1: i32, %arg2: i32) -> (i32, i32) {
    %c0_i32 = arith.constant 0 : i32
    %c0_i32_0 = arith.constant 0 : i32
    %c0_i32_1 = arith.constant 0 : i32
    return %c0_i32, %c0_i32_0 : i32, i32
  }
  func.func @transform_4(%arg0: i32, %arg1: i32, %arg2: i32) -> (i32, i32) {
    %c0_i32 = arith.constant 0 : i32
    %c0_i32_0 = arith.constant 0 : i32
    return %arg1, %c0_i32 : i32, i32
  }
}

</mosaic_0001>

<llo_original>
// kernel: cheb_graph_conv.1
$region0: #{cheb_graph_conv.1}
  #allocation0 [shape = 'u32[]', space=smem, size = 0x4, offset = 0x4, fixed_abs, tag = 'smem constant byte address 0x4 - core index']
  #allocation1 [shape = 'u32[72,128]{1,0:T(1,128)}', space=vmem, size = 0x9000, scoped, tag = 'internal scratch']
  #allocation2 [shape = 'f32[3,384,128]{2,1,0:T(8,128)}', space=vmem, size = 0x90000, scoped, tag = 'scratch operand']
  #allocation3 [shape = 'f32[384,128]{1,0:T(8,128)}', space=vmem, size = 0x30000, scoped, tag = 'scratch operand']
  #allocation4 [shape = 'f32[384,128]{1,0:T(8,128)}', space=vmem, size = 0x30000, scoped, tag = 'scratch operand']
  #allocation5 [shape = 'f32[384,384]{1,0:T(8,128)}', space=vmem, size = 0x90000, scoped, tag = 'scratch operand']
  #allocation6 [shape = 's32[2]{0}', space=sflag, size = 0x8, scoped, tag = 'scratch operand']
  #allocation7 [shape = 's32[]', space=sflag, size = 0x4, offset = 0, fixed_abs, tag = 'sflag constant byte address 0x0 - dummy sync flag']
  #allocation8 [shape = 's32[]', space=sflag, size = 0x4, offset = 0, fixed_abs, tag = 'sflag constant byte address 0x0 - dummy sync flag']
  %s0 = inlined_call_operand.vmem [shape: f32[384,128], index: 0, kind: input, shape index: {}]
  %s1 = inlined_call_operand.vmem [shape: f32[384,384], index: 1, kind: input, shape index: {}]
  %s2 = inlined_call_operand.vmem [shape: f32[3,128,128], index: 2, kind: input, shape index: {}]
  %s3 = inlined_call_operand.vmem [shape: f32[1,128], index: 3, kind: input, shape index: {}]
  %s4 = inlined_call_operand.vmem [shape: f32[384,128], index: 4, kind: output, shape index: {}]
  %s5 = sld [smem:[#allocation0]]
  $region99: #{cheb_graph_conv.1} parent=0
    _
  %s7 = ssub.s32 1, %s5
  %s8 = scalar_select 0, %s7, %s5
  loop: start=0, step=1, limit=4
  $region2: #{cheb_graph_conv.1} parent=0 // loop_pre_header
    _
  $region3: #{cheb_graph_conv.1} parent=0 // loop_header
    %s10 = sphi 0, %s14
    %p11 = scmp.ge.s32.totalorder %s10, 4
    %s17 = sphi 0, %s36
    %s18 = sphi 0, %s32
    %s19 = sphi 0, %s28
    %s20 = sphi 0, %s17
    %s21 = sphi 0, %s18
    %s22 = sphi 0, %s19
    %s23 = sphi 0, %s20
    %s24 = sphi 0, %s21
    %s25 = sphi 0, %s22
    %s37 = sphi 0, %s37
    %s39 = sphi 0, %s37
    %s40 = sphi 0, %s39
    %s54 = sphi 0, %s40
    %s58 = sphi 0, %s58
    %s60 = sphi 0, %s58
    %s61 = sphi 0, %s60
    %s75 = sphi 0, %s61
    %s81 = sphi 0, %s83
    %s84 = sphi 0, %s81
    %s85 = sphi 0, %s84
    %s101 = sphi 0, %s85
  $region4: #{cheb_graph_conv.1} parent=0 // loop_header_branch
    %13 = sbr.rel (%p11) target = $region8
  $region5: #{cheb_graph_conv.1} parent=0 // loop_body
    %s15 = ssub.s32 %s10, 1
    %s16 = ssub.s32 %s10, 2
    %s26 = sadd.s32 1, %s19
    %p27 = scmp.ge.s32.totalorder %s26, 1
    %s28 = scalar_select %p27, 0, %s26
    %s29 = sadd.s32 1, %s18
    %s30 = scalar_select %p27, %s29, %s18
    %p31 = scmp.ge.s32.totalorder %s30, 1
    %s32 = scalar_select %p31, 0, %s30
    %s33 = sadd.s32 1, %s17
    %s34 = scalar_select %p31, %s33, %s17
    %p35 = scmp.ge.s32.totalorder %s34, 2
    %s36 = scalar_select %p35, 0, %s34
    %s38 = sadd.s32 %s37, 1
    %p41 = scmp.eq.s32.totalorder %s10, 1
    %p42 = scmp.ne.s32.totalorder %s37, %s39
    %p43 = scmp.eq.s32.totalorder %s10, 0
    %p44 = por %p42, %p43
    %p45 = scmp.ne.s32.totalorder %s37, %s39
    %p46 = scmp.eq.s32.totalorder %s15, 1
    %p47 = por %p45, %p46
    %p48 = scmp.ne.s32.totalorder %s39, %s40
    %p49 = scmp.eq.s32.totalorder %s15, 0
    %p50 = por %p48, %p49
    %p51 = scmp.ne.s32.totalorder %s39, %s40
    %p52 = scmp.eq.s32.totalorder %s16, 1
    %p53 = por %p51, %p52
    %p55 = scmp.ne.s32.totalorder %s40, %s54
    %p56 = scmp.eq.s32.totalorder %s16, 0
    %p57 = por %p55, %p56
    %s59 = sadd.s32 %s58, 1
    %p62 = scmp.eq.s32.totalorder %s10, 1
    %p63 = scmp.ne.s32.totalorder %s58, %s60
    %p64 = scmp.eq.s32.totalorder %s10, 0
    %p65 = por %p63, %p64
    %p66 = scmp.ne.s32.totalorder %s58, %s60
    %p67 = scmp.eq.s32.totalorder %s15, 1
    %p68 = por %p66, %p67
    %p69 = scmp.ne.s32.totalorder %s60, %s61
    %p70 = scmp.eq.s32.totalorder %s15, 0
    %p71 = por %p69, %p70
    %p72 = scmp.ne.s32.totalorder %s60, %s61
    %p73 = scmp.eq.s32.totalorder %s16, 1
    %p74 = por %p72, %p73
    %p76 = scmp.ne.s32.totalorder %s61, %s75
    %p77 = scmp.eq.s32.totalorder %s16, 0
    %p78 = por %p76, %p77
    %s79 = ssub.s32 %s18, %s32
    %p80 = scmp.eq.s32.totalorder %s79, 0
    %s82 = sadd.s32 %s81, 1
    %s83 = scalar_select %p80, %s81, %s82
    %p86 = pneg %p80
    %p87 = scmp.eq.s32.totalorder %s10, 1
    %p88 = por %p86, %p87
    %p89 = scmp.ne.s32.totalorder %s81, %s84
    %p90 = scmp.eq.s32.totalorder %s10, 0
    %p91 = por %p89, %p90
    %p92 = scmp.ne.s32.totalorder %s81, %s84
    %p93 = scmp.eq.s32.totalorder %s15, 1
    %p94 = por %p92, %p93
    %p95 = scmp.ne.s32.totalorder %s84, %s85
    %p96 = scmp.eq.s32.totalorder %s15, 0
    %p97 = por %p95, %p96
    %p98 = scmp.ne.s32.totalorder %s84, %s85
    %p99 = scmp.eq.s32.totalorder %s16, 1
    %p100 = por %p98, %p99
    %p102 = scmp.ne.s32.totalorder %s85, %s101
    %p103 = scmp.eq.s32.totalorder %s16, 0
    %p104 = por %p102, %p103
    %p105 = scmp.le.s32.totalorder 1, %s10
    %p106 = scmp.lt.s32.totalorder %s10, 3
    %p107 = pnand %p105, %p106
    %p108 = pneg %p107
    // Predicated region
    $region9: #{cheb_graph_conv.1} parent=5 // pred_check
      _
    $region10: #{cheb_graph_conv.1} parent=5 // pred_check_branch
      %110 = sbr.rel (%p107) target = $region12
    $region11: #{cheb_graph_conv.1} parent=5 // pred_region
      %s111 = ssub.s32 %s10, 1
      // Predicated region
      $region13: #{cheb_graph_conv.1} parent=11 // pred_check
        %p112 = pneg %p50
      $region14: #{cheb_graph_conv.1} parent=11 // pred_check_branch
        %114 = sbr.rel (%p112) target = $region16
      $region15: #{cheb_graph_conv.1} parent=11 // pred_region
        _
      $region16: #{cheb_graph_conv.1} parent=11 // pred_fallthru
        _
      // Predicated region
      $region17: #{cheb_graph_conv.1} parent=11 // pred_check
        %p115 = pneg %p71
      $region18: #{cheb_graph_conv.1} parent=11 // pred_check_branch
        %117 = sbr.rel (%p115) target = $region20
      $region19: #{cheb_graph_conv.1} parent=11 // pred_region
        _
      $region20: #{cheb_graph_conv.1} parent=11 // pred_fallthru
        _
    $region12: #{cheb_graph_conv.1} parent=5 // pred_fallthru
      _
    %p118 = scmp.lt.s32.totalorder %s10, 2
    // Predicated region
    $region21: #{cheb_graph_conv.1} parent=5 // pred_check
      %p119 = pneg %p118
    $region22: #{cheb_graph_conv.1} parent=5 // pred_check_branch
      %121 = sbr.rel (%p119) target = $region24
    $region23: #{cheb_graph_conv.1} parent=5 // pred_region
      _
    $region24: #{cheb_graph_conv.1} parent=5 // pred_fallthru
      _
    %p122 = scmp.le.s32.totalorder 1, %s10
    %p123 = scmp.lt.s32.totalorder %s10, 3
    %p124 = pnand %p122, %p123
    %p125 = pneg %p124
    // Predicated region
    $region25: #{cheb_graph_conv.1} parent=5 // pred_check
      _
    $region26: #{cheb_graph_conv.1} parent=5 // pred_check_branch
      %127 = sbr.rel (%p124) target = $region28
    $region27: #{cheb_graph_conv.1} parent=5 // pred_region
      %s128 = ssub.s32 %s10, 1
      %p129 = pneg %p50
      %p130 = pneg %p47
      %p131 = pneg %p71
      %p132 = pneg %p68
      %p133 = pneg %p97
      %p134 = pneg %p94
      %s135 = smul.u32 48, %s21
      %p136 = scmp.lt.s32.totalorder %s135, 47
      %s137 = scalar_select %p136, %s135, 47
      %s138 = smul.addr %s137, 8
      %s139 = scalar_lea.vmem %s4, %s138
      %s140 = smul.u32 48, %s21
      %p141 = scmp.lt.s32.totalorder %s140, 47
      %s142 = scalar_select %p141, %s140, 47
      %s143 = smul.addr %s142, 8
      %s144 = scalar_lea.vmem %s4, %s143
      %s145 = smul.u32 48, %s21
      %s146 = smul.u32 %s21, 384
      %s147 = smul.u32 %s22, 384
      %p148 = scmp.eq.s32.totalorder %s20, 0
      %p149 = scmp.eq.s32.totalorder %s21, 0
      %p150 = pnand %p148, %p149
      %p151 = pneg %p150
      %p152 = scmp.eq.s32.totalorder %s22, 0
      %p153 = pnand %p151, %p152
      %p154 = pneg %p153
      // Predicated region
      $region29: #{cheb_graph_conv.1} parent=27 // pred_check
        _
      $region30: #{cheb_graph_conv.1} parent=27 // pred_check_branch
        %156 = sbr.rel (%p153) target = $region32
      $region31: #{cheb_graph_conv.1} parent=27 // pred_region
        // Predicated region
        $region33: #{cheb_graph_conv.1} parent=31 // pred_check
          _
        $region34: #{cheb_graph_conv.1} parent=31 // pred_check_branch
          %158 = sbr.rel (0) target = $region36
        $region35: #{cheb_graph_conv.1} parent=31 // pred_region
          loop: start=0, step=1, limit=1
          $region37: #{cheb_graph_conv.1} parent=35 // loop_pre_header
            _
          $region38: #{cheb_graph_conv.1} parent=35 // loop_header
            %s160 = sphi 0, %s164
            %p161 = scmp.ge.s32.totalorder %s160, 1
            %s165 = sphi %s0, %s0
            %s166 = sphi [#allocation2], [#allocation2]
          $region39: #{cheb_graph_conv.1} parent=35 // loop_header_branch
            %163 = sbr.rel (%p161) target = $region43
          $region40: #{cheb_graph_conv.1} parent=35 // loop_body
            %v167 = vld [vmem:[%s165] sm:$0xff]
            %168 = vst [vmem:[%s166] sm:$0xff] %v167
            %v169 = vld [vmem:[%s165 + $0x8] sm:$0xff]
            %170 = vst [vmem:[%s166 + $0x8] sm:$0xff] %v169
            %v171 = vld [vmem:[%s165 + $0x10] sm:$0xff]
            %172 = vst [vmem:[%s166 + $0x10] sm:$0xff] %v171
            %v173 = vld [vmem:[%s165 + $0x18] sm:$0xff]
            %174 = vst [vmem:[%s166 + $0x18] sm:$0xff] %v173
            %v175 = vld [vmem:[%s165 + $0x20] sm:$0xff]
            %176 = vst [vmem:[%s166 + $0x20] sm:$0xff] %v175
            %v177 = vld [vmem:[%s165 + $0x28] sm:$0xff]
            %178 = vst [vmem:[%s166 + $0x28] sm:$0xff] %v177
            %v179 = vld [vmem:[%s165 + $0x30] sm:$0xff]
            %180 = vst [vmem:[%s166 + $0x30] sm:$0xff] %v179
            %v181 = vld [vmem:[%s165 + $0x38] sm:$0xff]
            %182 = vst [vmem:[%s166 + $0x38] sm:$0xff] %v181
            %v183 = vld [vmem:[%s165 + $0x40] sm:$0xff]
            %184 = vst [vmem:[%s166 + $0x40] sm:$0xff] %v183
            %v185 = vld [vmem:[%s165 + $0x48] sm:$0xff]
            %186 = vst [vmem:[%s166 + $0x48] sm:$0xff] %v185
            %v187 = vld [vmem:[%s165 + $0x50] sm:$0xff]
            %188 = vst [vmem:[%s166 + $0x50] sm:$0xff] %v187
            %v189 = vld [vmem:[%s165 + $0x58] sm:$0xff]
            %190 = vst [vmem:[%s166 + $0x58] sm:$0xff] %v189
            %v191 = vld [vmem:[%s165 + $0x60] sm:$0xff]
            %192 = vst [vmem:[%s166 + $0x60] sm:$0xff] %v191
            %v193 = vld [vmem:[%s165 + $0x68] sm:$0xff]
            %194 = vst [vmem:[%s166 + $0x68] sm:$0xff] %v193
            %v195 = vld [vmem:[%s165 + $0x70] sm:$0xff]
            %196 = vst [vmem:[%s166 + $0x70] sm:$0xff] %v195
            %v197 = vld [vmem:[%s165 + $0x78] sm:$0xff]
            %198 = vst [vmem:[%s166 + $0x78] sm:$0xff] %v197
            %v199 = vld [vmem:[%s165 + $0x80] sm:$0xff]
            %200 = vst [vmem:[%s166 + $0x80] sm:$0xff] %v199
            %v201 = vld [vmem:[%s165 + $0x88] sm:$0xff]
            %202 = vst [vmem:[%s166 + $0x88] sm:$0xff] %v201
            %v203 = vld [vmem:[%s165 + $0x90] sm:$0xff]
            %204 = vst [vmem:[%s166 + $0x90] sm:$0xff] %v203
            %v205 = vld [vmem:[%s165 + $0x98] sm:$0xff]
            %206 = vst [vmem:[%s166 + $0x98] sm:$0xff] %v205
            %v207 = vld [vmem:[%s165 + $0xa0] sm:$0xff]
            %208 = vst [vmem:[%s166 + $0xa0] sm:$0xff] %v207
            %v209 = vld [vmem:[%s165 + $0xa8] sm:$0xff]
            %210 = vst [vmem:[%s166 + $0xa8] sm:$0xff] %v209
            %v211 = vld [vmem:[%s165 + $0xb0] sm:$0xff]
            %212 = vst [vmem:[%s166 + $0xb0] sm:$0xff] %v211
            %v213 = vld [vmem:[%s165 + $0xb8] sm:$0xff]
            %214 = vst [vmem:[%s166 + $0xb8] sm:$0xff] %v213
            %v215 = vld [vmem:[%s165 + $0xc0] sm:$0xff]
            %216 = vst [vmem:[%s166 + $0xc0] sm:$0xff] %v215
            %v217 = vld [vmem:[%s165 + $0xc8] sm:$0xff]
            %218 = vst [vmem:[%s166 + $0xc8] sm:$0xff] %v217
            %v219 = vld [vmem:[%s165 + $0xd0] sm:$0xff]
            %220 = vst [vmem:[%s166 + $0xd0] sm:$0xff] %v219
            %v221 = vld [vmem:[%s165 + $0xd8] sm:$0xff]
            %222 = vst [vmem:[%s166 + $0xd8] sm:$0xff] %v221
            %v223 = vld [vmem:[%s165 + $0xe0] sm:$0xff]
            %224 = vst [vmem:[%s166 + $0xe0] sm:$0xff] %v223
            %v225 = vld [vmem:[%s165 + $0xe8] sm:$0xff]
            %226 = vst [vmem:[%s166 + $0xe8] sm:$0xff] %v225
            %v227 = vld [vmem:[%s165 + $0xf0] sm:$0xff]
            %228 = vst [vmem:[%s166 + $0xf0] sm:$0xff] %v227
            %v229 = vld [vmem:[%s165 + $0xf8] sm:$0xff]
            %230 = vst [vmem:[%s166 + $0xf8] sm:$0xff] %v229
            %v231 = vld [vmem:[%s165 + $0x100] sm:$0xff]
            %232 = vst [vmem:[%s166 + $0x100] sm:$0xff] %v231
            %v233 = vld [vmem:[%s165 + $0x108] sm:$0xff]
            %234 = vst [vmem:[%s166 + $0x108] sm:$0xff] %v233
            %v235 = vld [vmem:[%s165 + $0x110] sm:$0xff]
            %236 = vst [vmem:[%s166 + $0x110] sm:$0xff] %v235
            %v237 = vld [vmem:[%s165 + $0x118] sm:$0xff]
            %238 = vst [vmem:[%s166 + $0x118] sm:$0xff] %v237
            %v239 = vld [vmem:[%s165 + $0x120] sm:$0xff]
            %240 = vst [vmem:[%s166 + $0x120] sm:$0xff] %v239
            %v241 = vld [vmem:[%s165 + $0x128] sm:$0xff]
            %242 = vst [vmem:[%s166 + $0x128] sm:$0xff] %v241
            %v243 = vld [vmem:[%s165 + $0x130] sm:$0xff]
            %244 = vst [vmem:[%s166 + $0x130] sm:$0xff] %v243
            %v245 = vld [vmem:[%s165 + $0x138] sm:$0xff]
            %246 = vst [vmem:[%s166 + $0x138] sm:$0xff] %v245
            %v247 = vld [vmem:[%s165 + $0x140] sm:$0xff]
            %248 = vst [vmem:[%s166 + $0x140] sm:$0xff] %v247
            %v249 = vld [vmem:[%s165 + $0x148] sm:$0xff]
            %250 = vst [vmem:[%s166 + $0x148] sm:$0xff] %v249
            %v251 = vld [vmem:[%s165 + $0x150] sm:$0xff]
            %252 = vst [vmem:[%s166 + $0x150] sm:$0xff] %v251
            %v253 = vld [vmem:[%s165 + $0x158] sm:$0xff]
            %254 = vst [vmem:[%s166 + $0x158] sm:$0xff] %v253
            %v255 = vld [vmem:[%s165 + $0x160] sm:$0xff]
            %256 = vst [vmem:[%s166 + $0x160] sm:$0xff] %v255
            %v257 = vld [vmem:[%s165 + $0x168] sm:$0xff]
            %258 = vst [vmem:[%s166 + $0x168] sm:$0xff] %v257
            %v259 = vld [vmem:[%s165 + $0x170] sm:$0xff]
            %260 = vst [vmem:[%s166 + $0x170] sm:$0xff] %v259
            %v261 = vld [vmem:[%s165 + $0x178] sm:$0xff]
            %262 = vst [vmem:[%s166 + $0x178] sm:$0xff] %v261
          $region41: #{cheb_graph_conv.1} parent=35 // loop_footer
            %s164 = sadd.s32 1, %s160
          $region42: #{cheb_graph_conv.1} parent=35 // loop_footer_branch
            %159 = sbr.rel target = $region38
          $region43: #{cheb_graph_conv.1} parent=35 // loop_exit
            _
        $region36: #{cheb_graph_conv.1} parent=31 // pred_fallthru
          _
        // Predicated region
        $region44: #{cheb_graph_conv.1} parent=31 // pred_check
          _
        $region45: #{cheb_graph_conv.1} parent=31 // pred_check_branch
          %264 = sbr.rel target = $region47
        $region46: #{cheb_graph_conv.1} parent=31 // pred_region
          _
        $region47: #{cheb_graph_conv.1} parent=31 // pred_fallthru
          _
        // Predicated region
        $region48: #{cheb_graph_conv.1} parent=31 // pred_check
          _
        $region49: #{cheb_graph_conv.1} parent=31 // pred_check_branch
          %267 = sbr.rel (0) target = $region51
        $region50: #{cheb_graph_conv.1} parent=31 // pred_region
          %268 = vsyncadd [#allocation6], 6144
        $region51: #{cheb_graph_conv.1} parent=31 // pred_fallthru
          _
        %s269 = scalar_lea.sflag [#allocation6], 1
        // Predicated region
        $region52: #{cheb_graph_conv.1} parent=31 // pred_check
          _
        $region53: #{cheb_graph_conv.1} parent=31 // pred_check_branch
          %271 = sbr.rel (0) target = $region55
        $region54: #{cheb_graph_conv.1} parent=31 // pred_region
          loop: start=0, step=1, limit=1
          $region56: #{cheb_graph_conv.1} parent=54 // loop_pre_header
            _
          $region57: #{cheb_graph_conv.1} parent=54 // loop_header
            %s273 = sphi 0, %s277
            %p274 = scmp.ge.s32.totalorder %s273, 1
            %s278 = sphi %s1, %s1
            %s279 = sphi [#allocation5], [#allocation5]
          $region58: #{cheb_graph_conv.1} parent=54 // loop_header_branch
            %276 = sbr.rel (%p274) target = $region62
          $region59: #{cheb_graph_conv.1} parent=54 // loop_body
            %v280 = vld [vmem:[%s278] sm:$0xff]
            %281 = vst [vmem:[%s279] sm:$0xff] %v280
            %v282 = vld [vmem:[%s278 + $0x8] sm:$0xff]
            %283 = vst [vmem:[%s279 + $0x8] sm:$0xff] %v282
            %v284 = vld [vmem:[%s278 + $0x10] sm:$0xff]
            %285 = vst [vmem:[%s279 + $0x10] sm:$0xff] %v284
            %v286 = vld [vmem:[%s278 + $0x18] sm:$0xff]
            %287 = vst [vmem:[%s279 + $0x18] sm:$0xff] %v286
            %v288 = vld [vmem:[%s278 + $0x20] sm:$0xff]
            %289 = vst [vmem:[%s279 + $0x20] sm:$0xff] %v288
            %v290 = vld [vmem:[%s278 + $0x28] sm:$0xff]
            %291 = vst [vmem:[%s279 + $0x28] sm:$0xff] %v290
            %v292 = vld [vmem:[%s278 + $0x30] sm:$0xff]
            %293 = vst [vmem:[%s279 + $0x30] sm:$0xff] %v292
            %v294 = vld [vmem:[%s278 + $0x38] sm:$0xff]
            %295 = vst [vmem:[%s279 + $0x38] sm:$0xff] %v294
            %v296 = vld [vmem:[%s278 + $0x40] sm:$0xff]
            %297 = vst [vmem:[%s279 + $0x40] sm:$0xff] %v296
            %v298 = vld [vmem:[%s278 + $0x48] sm:$0xff]
            %299 = vst [vmem:[%s279 + $0x48] sm:$0xff] %v298
            %v300 = vld [vmem:[%s278 + $0x50] sm:$0xff]
            %301 = vst [vmem:[%s279 + $0x50] sm:$0xff] %v300
            %v302 = vld [vmem:[%s278 + $0x58] sm:$0xff]
            %303 = vst [vmem:[%s279 + $0x58] sm:$0xff] %v302
            %v304 = vld [vmem:[%s278 + $0x60] sm:$0xff]
            %305 = vst [vmem:[%s279 + $0x60] sm:$0xff] %v304
            %v306 = vld [vmem:[%s278 + $0x68] sm:$0xff]
            %307 = vst [vmem:[%s279 + $0x68] sm:$0xff] %v306
            %v308 = vld [vmem:[%s278 + $0x70] sm:$0xff]
            %309 = vst [vmem:[%s279 + $0x70] sm:$0xff] %v308
            %v310 = vld [vmem:[%s278 + $0x78] sm:$0xff]
            %311 = vst [vmem:[%s279 + $0x78] sm:$0xff] %v310
            %v312 = vld [vmem:[%s278 + $0x80] sm:$0xff]
            %313 = vst [vmem:[%s279 + $0x80] sm:$0xff] %v312
            %v314 = vld [vmem:[%s278 + $0x88] sm:$0xff]
            %315 = vst [vmem:[%s279 + $0x88] sm:$0xff] %v314
            %v316 = vld [vmem:[%s278 + $0x90] sm:$0xff]
            %317 = vst [vmem:[%s279 + $0x90] sm:$0xff] %v316
            %v318 = vld [vmem:[%s278 + $0x98] sm:$0xff]
            %319 = vst [vmem:[%s279 + $0x98] sm:$0xff] %v318
            %v320 = vld [vmem:[%s278 + $0xa0] sm:$0xff]
            %321 = vst [vmem:[%s279 + $0xa0] sm:$0xff] %v320
            %v322 = vld [vmem:[%s278 + $0xa8] sm:$0xff]
            %323 = vst [vmem:[%s279 + $0xa8] sm:$0xff] %v322
            %v324 = vld [vmem:[%s278 + $0xb0] sm:$0xff]
            %325 = vst [vmem:[%s279 + $0xb0] sm:$0xff] %v324
            %v326 = vld [vmem:[%s278 + $0xb8] sm:$0xff]
            %327 = vst [vmem:[%s279 + $0xb8] sm:$0xff] %v326
            %v328 = vld [vmem:[%s278 + $0xc0] sm:$0xff]
            %329 = vst [vmem:[%s279 + $0xc0] sm:$0xff] %v328
            %v330 = vld [vmem:[%s278 + $0xc8] sm:$0xff]
            %331 = vst [vmem:[%s279 + $0xc8] sm:$0xff] %v330
            %v332 = vld [vmem:[%s278 + $0xd0] sm:$0xff]
            %333 = vst [vmem:[%s279 + $0xd0] sm:$0xff] %v332
            %v334 = vld [vmem:[%s278 + $0xd8] sm:$0xff]
            %335 = vst [vmem:[%s279 + $0xd8] sm:$0xff] %v334
            %v336 = vld [vmem:[%s278 + $0xe0] sm:$0xff]
            %337 = vst [vmem:[%s279 + $0xe0] sm:$0xff] %v336
            %v338 = vld [vmem:[%s278 + $0xe8] sm:$0xff]
            %339 = vst [vmem:[%s279 + $0xe8] sm:$0xff] %v338
            %v340 = vld [vmem:[%s278 + $0xf0] sm:$0xff]
            %341 = vst [vmem:[%s279 + $0xf0] sm:$0xff] %v340
            %v342 = vld [vmem:[%s278 + $0xf8] sm:$0xff]
            %343 = vst [vmem:[%s279 + $0xf8] sm:$0xff] %v342
            %v344 = vld [vmem:[%s278 + $0x100] sm:$0xff]
            %345 = vst [vmem:[%s279 + $0x100] sm:$0xff] %v344
            %v346 = vld [vmem:[%s278 + $0x108] sm:$0xff]
            %347 = vst [vmem:[%s279 + $0x108] sm:$0xff] %v346
            %v348 = vld [vmem:[%s278 + $0x110] sm:$0xff]
            %349 = vst [vmem:[%s279 + $0x110] sm:$0xff] %v348
            %v350 = vld [vmem:[%s278 + $0x118] sm:$0xff]
            %351 = vst [vmem:[%s279 + $0x118] sm:$0xff] %v350
            %v352 = vld [vmem:[%s278 + $0x120] sm:$0xff]
            %353 = vst [vmem:[%s279 + $0x120] sm:$0xff] %v352
            %v354 = vld [vmem:[%s278 + $0x128] sm:$0xff]
            %355 = vst [vmem:[%s279 + $0x128] sm:$0xff] %v354
            %v356 = vld [vmem:[%s278 + $0x130] sm:$0xff]
            %357 = vst [vmem:[%s279 + $0x130] sm:$0xff] %v356
            %v358 = vld [vmem:[%s278 + $0x138] sm:$0xff]
            %359 = vst [vmem:[%s279 + $0x138] sm:$0xff] %v358
            %v360 = vld [vmem:[%s278 + $0x140] sm:$0xff]
            %361 = vst [vmem:[%s279 + $0x140] sm:$0xff] %v360
            %v362 = vld [vmem:[%s278 + $0x148] sm:$0xff]
            %363 = vst [vmem:[%s279 + $0x148] sm:$0xff] %v362
            %v364 = vld [vmem:[%s278 + $0x150] sm:$0xff]
            %365 = vst [vmem:[%s279 + $0x150] sm:$0xff] %v364
            %v366 = vld [vmem:[%s278 + $0x158] sm:$0xff]
            %367 = vst [vmem:[%s279 + $0x158] sm:$0xff] %v366
            %v368 = vld [vmem:[%s278 + $0x160] sm:$0xff]
            %369 = vst [vmem:[%s279 + $0x160] sm:$0xff] %v368
            %v370 = vld [vmem:[%s278 + $0x168] sm:$0xff]
            %371 = vst [vmem:[%s279 + $0x168] sm:$0xff] %v370
            %v372 = vld [vmem:[%s278 + $0x170] sm:$0xff]
            %373 = vst [vmem:[%s279 + $0x170] sm:$0xff] %v372
            %v374 = vld [vmem:[%s278 + $0x178] sm:$0xff]
            %375 = vst [vmem:[%s279 + $0x178] sm:$0xff] %v374
            %v376 = vld [vmem:[%s278 + $0x180] sm:$0xff]
            %377 = vst [vmem:[%s279 + $0x180] sm:$0xff] %v376
            %v378 = vld [vmem:[%s278 + $0x188] sm:$0xff]
            %379 = vst [vmem:[%s279 + $0x188] sm:$0xff] %v378
            %v380 = vld [vmem:[%s278 + $0x190] sm:$0xff]
            %381 = vst [vmem:[%s279 + $0x190] sm:$0xff] %v380
            %v382 = vld [vmem:[%s278 + $0x198] sm:$0xff]
            %383 = vst [vmem:[%s279 + $0x198] sm:$0xff] %v382
            %v384 = vld [vmem:[%s278 + $0x1a0] sm:$0xff]
            %385 = vst [vmem:[%s279 + $0x1a0] sm:$0xff] %v384
            %v386 = vld [vmem:[%s278 + $0x1a8] sm:$0xff]
            %387 = vst [vmem:[%s279 + $0x1a8] sm:$0xff] %v386
            %v388 = vld [vmem:[%s278 + $0x1b0] sm:$0xff]
            %389 = vst [vmem:[%s279 + $0x1b0] sm:$0xff] %v388
            %v390 = vld [vmem:[%s278 + $0x1b8] sm:$0xff]
            %391 = vst [vmem:[%s279 + $0x1b8] sm:$0xff] %v390
            %v392 = vld [vmem:[%s278 + $0x1c0] sm:$0xff]
            %393 = vst [vmem:[%s279 + $0x1c0] sm:$0xff] %v392
            %v394 = vld [vmem:[%s278 + $0x1c8] sm:$0xff]
            %395 = vst [vmem:[%s279 + $0x1c8] sm:$0xff] %v394
            %v396 = vld [vmem:[%s278 + $0x1d0] sm:$0xff]
            %397 = vst [vmem:[%s279 + $0x1d0] sm:$0xff] %v396
            %v398 = vld [vmem:[%s278 + $0x1d8] sm:$0xff]
            %399 = vst [vmem:[%s279 + $0x1d8] sm:$0xff] %v398
            %v400 = vld [vmem:[%s278 + $0x1e0] sm:$0xff]
            %401 = vst [vmem:[%s279 + $0x1e0] sm:$0xff] %v400
            %v402 = vld [vmem:[%s278 + $0x1e8] sm:$0xff]
            %403 = vst [vmem:[%s279 + $0x1e8] sm:$0xff] %v402
            %v404 = vld [vmem:[%s278 + $0x1f0] sm:$0xff]
            %405 = vst [vmem:[%s279 + $0x1f0] sm:$0xff] %v404
            %v406 = vld [vmem:[%s278 + $0x1f8] sm:$0xff]
            %407 = vst [vmem:[%s279 + $0x1f8] sm:$0xff] %v406
            %v408 = vld [vmem:[%s278 + $0x200] sm:$0xff]
            %409 = vst [vmem:[%s279 + $0x200] sm:$0xff] %v408
            %v410 = vld [vmem:[%s278 + $0x208] sm:$0xff]
            %411 = vst [vmem:[%s279 + $0x208] sm:$0xff] %v410
            %v412 = vld [vmem:[%s278 + $0x210] sm:$0xff]
            %413 = vst [vmem:[%s279 + $0x210] sm:$0xff] %v412
            %v414 = vld [vmem:[%s278 + $0x218] sm:$0xff]
            %415 = vst [vmem:[%s279 + $0x218] sm:$0xff] %v414
            %v416 = vld [vmem:[%s278 + $0x220] sm:$0xff]
            %417 = vst [vmem:[%s279 + $0x220] sm:$0xff] %v416
            %v418 = vld [vmem:[%s278 + $0x228] sm:$0xff]
            %419 = vst [vmem:[%s279 + $0x228] sm:$0xff] %v418
            %v420 = vld [vmem:[%s278 + $0x230] sm:$0xff]
            %421 = vst [vmem:[%s279 + $0x230] sm:$0xff] %v420
            %v422 = vld [vmem:[%s278 + $0x238] sm:$0xff]
            %423 = vst [vmem:[%s279 + $0x238] sm:$0xff] %v422
            %v424 = vld [vmem:[%s278 + $0x240] sm:$0xff]
            %425 = vst [vmem:[%s279 + $0x240] sm:$0xff] %v424
            %v426 = vld [vmem:[%s278 + $0x248] sm:$0xff]
            %427 = vst [vmem:[%s279 + $0x248] sm:$0xff] %v426
            %v428 = vld [vmem:[%s278 + $0x250] sm:$0xff]
            %429 = vst [vmem:[%s279 + $0x250] sm:$0xff] %v428
            %v430 = vld [vmem:[%s278 + $0x258] sm:$0xff]
            %431 = vst [vmem:[%s279 + $0x258] sm:$0xff] %v430
            %v432 = vld [vmem:[%s278 + $0x260] sm:$0xff]
            %433 = vst [vmem:[%s279 + $0x260] sm:$0xff] %v432
            %v434 = vld [vmem:[%s278 + $0x268] sm:$0xff]
            %435 = vst [vmem:[%s279 + $0x268] sm:$0xff] %v434
            %v436 = vld [vmem:[%s278 + $0x270] sm:$0xff]
            %437 = vst [vmem:[%s279 + $0x270] sm:$0xff] %v436
            %v438 = vld [vmem:[%s278 + $0x278] sm:$0xff]
            %439 = vst [vmem:[%s279 + $0x278] sm:$0xff] %v438
            %v440 = vld [vmem:[%s278 + $0x280] sm:$0xff]
            %441 = vst [vmem:[%s279 + $0x280] sm:$0xff] %v440
            %v442 = vld [vmem:[%s278 + $0x288] sm:$0xff]
            %443 = vst [vmem:[%s279 + $0x288] sm:$0xff] %v442
            %v444 = vld [vmem:[%s278 + $0x290] sm:$0xff]
            %445 = vst [vmem:[%s279 + $0x290] sm:$0xff] %v444
            %v446 = vld [vmem:[%s278 + $0x298] sm:$0xff]
            %447 = vst [vmem:[%s279 + $0x298] sm:$0xff] %v446
            %v448 = vld [vmem:[%s278 + $0x2a0] sm:$0xff]
            %449 = vst [vmem:[%s279 + $0x2a0] sm:$0xff] %v448
            %v450 = vld [vmem:[%s278 + $0x2a8] sm:$0xff]
            %451 = vst [vmem:[%s279 + $0x2a8] sm:$0xff] %v450
            %v452 = vld [vmem:[%s278 + $0x2b0] sm:$0xff]
            %453 = vst [vmem:[%s279 + $0x2b0] sm:$0xff] %v452
            %v454 = vld [vmem:[%s278 + $0x2b8] sm:$0xff]
            %455 = vst [vmem:[%s279 + $0x2b8] sm:$0xff] %v454
            %v456 = vld [vmem:[%s278 + $0x2c0] sm:$0xff]
            %457 = vst [vmem:[%s279 + $0x2c0] sm:$0xff] %v456
            %v458 = vld [vmem:[%s278 + $0x2c8] sm:$0xff]
            %459 = vst [vmem:[%s279 + $0x2c8] sm:$0xff] %v458
            %v460 = vld [vmem:[%s278 + $0x2d0] sm:$0xff]
            %461 = vst [vmem:[%s279 + $0x2d0] sm:$0xff] %v460
            %v462 = vld [vmem:[%s278 + $0x2d8] sm:$0xff]
            %463 = vst [vmem:[%s279 + $0x2d8] sm:$0xff] %v462
            %v464 = vld [vmem:[%s278 + $0x2e0] sm:$0xff]
            %465 = vst [vmem:[%s279 + $0x2e0] sm:$0xff] %v464
            %v466 = vld [vmem:[%s278 + $0x2e8] sm:$0xff]
            %467 = vst [vmem:[%s279 + $0x2e8] sm:$0xff] %v466
            %v468 = vld [vmem:[%s278 + $0x2f0] sm:$0xff]
            %469 = vst [vmem:[%s279 + $0x2f0] sm:$0xff] %v468
            %v470 = vld [vmem:[%s278 + $0x2f8] sm:$0xff]
            %471 = vst [vmem:[%s279 + $0x2f8] sm:$0xff] %v470
            %v472 = vld [vmem:[%s278 + $0x300] sm:$0xff]
            %473 = vst [vmem:[%s279 + $0x300] sm:$0xff] %v472
            %v474 = vld [vmem:[%s278 + $0x308] sm:$0xff]
            %475 = vst [vmem:[%s279 + $0x308] sm:$0xff] %v474
            %v476 = vld [vmem:[%s278 + $0x310] sm:$0xff]
            %477 = vst [vmem:[%s279 + $0x310] sm:$0xff] %v476
            %v478 = vld [vmem:[%s278 + $0x318] sm:$0xff]
            %479 = vst [vmem:[%s279 + $0x318] sm:$0xff] %v478
            %v480 = vld [vmem:[%s278 + $0x320] sm:$0xff]
            %481 = vst [vmem:[%s279 + $0x320] sm:$0xff] %v480
            %v482 = vld [vmem:[%s278 + $0x328] sm:$0xff]
            %483 = vst [vmem:[%s279 + $0x328] sm:$0xff] %v482
            %v484 = vld [vmem:[%s278 + $0x330] sm:$0xff]
            %485 = vst [vmem:[%s279 + $0x330] sm:$0xff] %v484
            %v486 = vld [vmem:[%s278 + $0x338] sm:$0xff]
            %487 = vst [vmem:[%s279 + $0x338] sm:$0xff] %v486
            %v488 = vld [vmem:[%s278 + $0x340] sm:$0xff]
            %489 = vst [vmem:[%s279 + $0x340] sm:$0xff] %v488
            %v490 = vld [vmem:[%s278 + $0x348] sm:$0xff]
            %491 = vst [vmem:[%s279 + $0x348] sm:$0xff] %v490
            %v492 = vld [vmem:[%s278 + $0x350] sm:$0xff]
            %493 = vst [vmem:[%s279 + $0x350] sm:$0xff] %v492
            %v494 = vld [vmem:[%s278 + $0x358] sm:$0xff]
            %495 = vst [vmem:[%s279 + $0x358] sm:$0xff] %v494
            %v496 = vld [vmem:[%s278 + $0x360] sm:$0xff]
            %497 = vst [vmem:[%s279 + $0x360] sm:$0xff] %v496
            %v498 = vld [vmem:[%s278 + $0x368] sm:$0xff]
            %499 = vst [vmem:[%s279 + $0x368] sm:$0xff] %v498
            %v500 = vld [vmem:[%s278 + $0x370] sm:$0xff]
            %501 = vst [vmem:[%s279 + $0x370] sm:$0xff] %v500
            %v502 = vld [vmem:[%s278 + $0x378] sm:$0xff]
            %503 = vst [vmem:[%s279 + $0x378] sm:$0xff] %v502
            %v504 = vld [vmem:[%s278 + $0x380] sm:$0xff]
            %505 = vst [vmem:[%s279 + $0x380] sm:$0xff] %v504
            %v506 = vld [vmem:[%s278 + $0x388] sm:$0xff]
            %507 = vst [vmem:[%s279 + $0x388] sm:$0xff] %v506
            %v508 = vld [vmem:[%s278 + $0x390] sm:$0xff]
            %509 = vst [vmem:[%s279 + $0x390] sm:$0xff] %v508
            %v510 = vld [vmem:[%s278 + $0x398] sm:$0xff]
            %511 = vst [vmem:[%s279 + $0x398] sm:$0xff] %v510
            %v512 = vld [vmem:[%s278 + $0x3a0] sm:$0xff]
            %513 = vst [vmem:[%s279 + $0x3a0] sm:$0xff] %v512
            %v514 = vld [vmem:[%s278 + $0x3a8] sm:$0xff]
            %515 = vst [vmem:[%s279 + $0x3a8] sm:$0xff] %v514
            %v516 = vld [vmem:[%s278 + $0x3b0] sm:$0xff]
            %517 = vst [vmem:[%s279 + $0x3b0] sm:$0xff] %v516
            %v518 = vld [vmem:[%s278 + $0x3b8] sm:$0xff]
            %519 = vst [vmem:[%s279 + $0x3b8] sm:$0xff] %v518
            %v520 = vld [vmem:[%s278 + $0x3c0] sm:$0xff]
            %521 = vst [vmem:[%s279 + $0x3c0] sm:$0xff] %v520
            %v522 = vld [vmem:[%s278 + $0x3c8] sm:$0xff]
            %523 = vst [vmem:[%s279 + $0x3c8] sm:$0xff] %v522
            %v524 = vld [vmem:[%s278 + $0x3d0] sm:$0xff]
            %525 = vst [vmem:[%s279 + $0x3d0] sm:$0xff] %v524
            %v526 = vld [vmem:[%s278 + $0x3d8] sm:$0xff]
            %527 = vst [vmem:[%s279 + $0x3d8] sm:$0xff] %v526
            %v528 = vld [vmem:[%s278 + $0x3e0] sm:$0xff]
            %529 = vst [vmem:[%s279 + $0x3e0] sm:$0xff] %v528
            %v530 = vld [vmem:[%s278 + $0x3e8] sm:$0xff]
            %531 = vst [vmem:[%s279 + $0x3e8] sm:$0xff] %v530
            %v532 = vld [vmem:[%s278 + $0x3f0] sm:$0xff]
            %533 = vst [vmem:[%s279 + $0x3f0] sm:$0xff] %v532
            %v534 = vld [vmem:[%s278 + $0x3f8] sm:$0xff]
            %535 = vst [vmem:[%s279 + $0x3f8] sm:$0xff] %v534
            %v536 = vld [vmem:[%s278 + $0x400] sm:$0xff]
            %537 = vst [vmem:[%s279 + $0x400] sm:$0xff] %v536
            %v538 = vld [vmem:[%s278 + $0x408] sm:$0xff]
            %539 = vst [vmem:[%s279 + $0x408] sm:$0xff] %v538
            %v540 = vld [vmem:[%s278 + $0x410] sm:$0xff]
            %541 = vst [vmem:[%s279 + $0x410] sm:$0xff] %v540
            %v542 = vld [vmem:[%s278 + $0x418] sm:$0xff]
            %543 = vst [vmem:[%s279 + $0x418] sm:$0xff] %v542
            %v544 = vld [vmem:[%s278 + $0x420] sm:$0xff]
            %545 = vst [vmem:[%s279 + $0x420] sm:$0xff] %v544
            %v546 = vld [vmem:[%s278 + $0x428] sm:$0xff]
            %547 = vst [vmem:[%s279 + $0x428] sm:$0xff] %v546
            %v548 = vld [vmem:[%s278 + $0x430] sm:$0xff]
            %549 = vst [vmem:[%s279 + $0x430] sm:$0xff] %v548
            %v550 = vld [vmem:[%s278 + $0x438] sm:$0xff]
            %551 = vst [vmem:[%s279 + $0x438] sm:$0xff] %v550
            %v552 = vld [vmem:[%s278 + $0x440] sm:$0xff]
            %553 = vst [vmem:[%s279 + $0x440] sm:$0xff] %v552
            %v554 = vld [vmem:[%s278 + $0x448] sm:$0xff]
            %555 = vst [vmem:[%s279 + $0x448] sm:$0xff] %v554
            %v556 = vld [vmem:[%s278 + $0x450] sm:$0xff]
            %557 = vst [vmem:[%s279 + $0x450] sm:$0xff] %v556
            %v558 = vld [vmem:[%s278 + $0x458] sm:$0xff]
            %559 = vst [vmem:[%s279 + $0x458] sm:$0xff] %v558
            %v560 = vld [vmem:[%s278 + $0x460] sm:$0xff]
            %561 = vst [vmem:[%s279 + $0x460] sm:$0xff] %v560
            %v562 = vld [vmem:[%s278 + $0x468] sm:$0xff]
            %563 = vst [vmem:[%s279 + $0x468] sm:$0xff] %v562
            %v564 = vld [vmem:[%s278 + $0x470] sm:$0xff]
            %565 = vst [vmem:[%s279 + $0x470] sm:$0xff] %v564
            %v566 = vld [vmem:[%s278 + $0x478] sm:$0xff]
            %567 = vst [vmem:[%s279 + $0x478] sm:$0xff] %v566
          $region60: #{cheb_graph_conv.1} parent=54 // loop_footer
            %s277 = sadd.s32 1, %s273
          $region61: #{cheb_graph_conv.1} parent=54 // loop_footer_branch
            %272 = sbr.rel target = $region57
          $region62: #{cheb_graph_conv.1} parent=54 // loop_exit
            _
        $region55: #{cheb_graph_conv.1} parent=31 // pred_fallthru
          _
        // Predicated region
        $region63: #{cheb_graph_conv.1} parent=31 // pred_check
          _
        $region64: #{cheb_graph_conv.1} parent=31 // pred_check_branch
          %569 = sbr.rel target = $region66
        $region65: #{cheb_graph_conv.1} parent=31 // pred_region
          _
        $region66: #{cheb_graph_conv.1} parent=31 // pred_fallthru
          _
        // Predicated region
        $region67: #{cheb_graph_conv.1} parent=31 // pred_check
          _
        $region68: #{cheb_graph_conv.1} parent=31 // pred_check_branch
          %572 = sbr.rel (0) target = $region70
        $region69: #{cheb_graph_conv.1} parent=31 // pred_region
          %573 = vsyncadd %s269, 18432
        $region70: #{cheb_graph_conv.1} parent=31 // pred_fallthru
          _
        %s574 = smul.u32 8, 48
        %s575 = smul.u32 %s574, 3
        %s576 = sshll.u32 %s575, 4
        %577 = dma.done %s269, %s576
        %s578 = smul.u32 384, 1
        %s579 = sshll.u32 %s578, 4
        %580 = dma.done [#allocation6], %s579
      $region32: #{cheb_graph_conv.1} parent=27 // pred_fallthru
        _
      // Predicated region
      $region71: #{cheb_graph_conv.1} parent=27 // pred_check
        %p581 = pneg %p152
      $region72: #{cheb_graph_conv.1} parent=27 // pred_check_branch
        %583 = sbr.rel (%p581) target = $region74
      $region73: #{cheb_graph_conv.1} parent=27 // pred_region
        %584 = vst [vmem:[#allocation4] sm:$0xff] 0.0
        %585 = vst [vmem:[#allocation4 + $0x8] sm:$0xff] 0.0
        %586 = vst [vmem:[#allocation4 + $0x10] sm:$0xff] 0.0
        %587 = vst [vmem:[#allocation4 + $0x18] sm:$0xff] 0.0
        %588 = vst [vmem:[#allocation4 + $0x20] sm:$0xff] 0.0
        %589 = vst [vmem:[#allocation4 + $0x28] sm:$0xff] 0.0
        %590 = vst [vmem:[#allocation4 + $0x30] sm:$0xff] 0.0
        %591 = vst [vmem:[#allocation4 + $0x38] sm:$0xff] 0.0
        %592 = vst [vmem:[#allocation4 + $0x40] sm:$0xff] 0.0
        %593 = vst [vmem:[#allocation4 + $0x48] sm:$0xff] 0.0
        %594 = vst [vmem:[#allocation4 + $0x50] sm:$0xff] 0.0
        %595 = vst [vmem:[#allocation4 + $0x58] sm:$0xff] 0.0
        %596 = vst [vmem:[#allocation4 + $0x60] sm:$0xff] 0.0
        %597 = vst [vmem:[#allocation4 + $0x68] sm:$0xff] 0.0
        %598 = vst [vmem:[#allocation4 + $0x70] sm:$0xff] 0.0
        %599 = vst [vmem:[#allocation4 + $0x78] sm:$0xff] 0.0
        %600 = vst [vmem:[#allocation4 + $0x80] sm:$0xff] 0.0
        %601 = vst [vmem:[#allocation4 + $0x88] sm:$0xff] 0.0
        %602 = vst [vmem:[#allocation4 + $0x90] sm:$0xff] 0.0
        %603 = vst [vmem:[#allocation4 + $0x98] sm:$0xff] 0.0
        %604 = vst [vmem:[#allocation4 + $0xa0] sm:$0xff] 0.0
        %605 = vst [vmem:[#allocation4 + $0xa8] sm:$0xff] 0.0
        %606 = vst [vmem:[#allocation4 + $0xb0] sm:$0xff] 0.0
        %607 = vst [vmem:[#allocation4 + $0xb8] sm:$0xff] 0.0
        %608 = vst [vmem:[#allocation4 + $0xc0] sm:$0xff] 0.0
        %609 = vst [vmem:[#allocation4 + $0xc8] sm:$0xff] 0.0
        %610 = vst [vmem:[#allocation4 + $0xd0] sm:$0xff] 0.0
        %611 = vst [vmem:[#allocation4 + $0xd8] sm:$0xff] 0.0
        %612 = vst [vmem:[#allocation4 + $0xe0] sm:$0xff] 0.0
        %613 = vst [vmem:[#allocation4 + $0xe8] sm:$0xff] 0.0
        %614 = vst [vmem:[#allocation4 + $0xf0] sm:$0xff] 0.0
        %615 = vst [vmem:[#allocation4 + $0xf8] sm:$0xff] 0.0
        %616 = vst [vmem:[#allocation4 + $0x100] sm:$0xff] 0.0
        %617 = vst [vmem:[#allocation4 + $0x108] sm:$0xff] 0.0
        %618 = vst [vmem:[#allocation4 + $0x110] sm:$0xff] 0.0
        %619 = vst [vmem:[#allocation4 + $0x118] sm:$0xff] 0.0
        %620 = vst [vmem:[#allocation4 + $0x120] sm:$0xff] 0.0
        %621 = vst [vmem:[#allocation4 + $0x128] sm:$0xff] 0.0
        %622 = vst [vmem:[#allocation4 + $0x130] sm:$0xff] 0.0
        %623 = vst [vmem:[#allocation4 + $0x138] sm:$0xff] 0.0
        %624 = vst [vmem:[#allocation4 + $0x140] sm:$0xff] 0.0
        %625 = vst [vmem:[#allocation4 + $0x148] sm:$0xff] 0.0
        %626 = vst [vmem:[#allocation4 + $0x150] sm:$0xff] 0.0
        %627 = vst [vmem:[#allocation4 + $0x158] sm:$0xff] 0.0
        %628 = vst [vmem:[#allocation4 + $0x160] sm:$0xff] 0.0
        %629 = vst [vmem:[#allocation4 + $0x168] sm:$0xff] 0.0
        %630 = vst [vmem:[#allocation4 + $0x170] sm:$0xff] 0.0
        %631 = vst [vmem:[#allocation4 + $0x178] sm:$0xff] 0.0
      $region74: #{cheb_graph_conv.1} parent=27 // pred_fallthru
        _
      %s632 = sshra.s32 %s147, 7
      %s633 = sand.u32 %s147, 127
      %s634 = sshra.s32 %s146, 3
      %s635 = sand.u32 %s146, 7
      %s636 = smul.u32 %s634, 3
      %s637 = sadd.s32 %s632, %s636
      %s638 = smul.addr %s637, 8
      %s639 = scalar_lea.vmem [#allocation5], %s638
      %v640 = vld [vmem:[%s639] sm:$0xff]
      %v641 = vld [vmem:[%s639 + $0x8] sm:$0xff]
      %v642 = vld [vmem:[%s639 + $0x10] sm:$0xff]
      %v643 = vld [vmem:[%s639 + $0x18] sm:$0xff]
      %v644 = vld [vmem:[%s639 + $0x20] sm:$0xff]
      %v645 = vld [vmem:[%s639 + $0x28] sm:$0xff]
      %v646 = vld [vmem:[%s639 + $0x30] sm:$0xff]
      %v647 = vld [vmem:[%s639 + $0x38] sm:$0xff]
      %v648 = vld [vmem:[%s639 + $0x40] sm:$0xff]
      %v649 = vld [vmem:[%s639 + $0x48] sm:$0xff]
      %v650 = vld [vmem:[%s639 + $0x50] sm:$0xff]
      %v651 = vld [vmem:[%s639 + $0x58] sm:$0xff]
      %v652 = vld [vmem:[%s639 + $0x60] sm:$0xff]
      %v653 = vld [vmem:[%s639 + $0x68] sm:$0xff]
      %v654 = vld [vmem:[%s639 + $0x70] sm:$0xff]
      %v655 = vld [vmem:[%s639 + $0x78] sm:$0xff]
      %v656 = vld [vmem:[%s639 + $0x80] sm:$0xff]
      %v657 = vld [vmem:[%s639 + $0x88] sm:$0xff]
      %v658 = vld [vmem:[%s639 + $0x90] sm:$0xff]
      %v659 = vld [vmem:[%s639 + $0x98] sm:$0xff]
      %v660 = vld [vmem:[%s639 + $0xa0] sm:$0xff]
      %v661 = vld [vmem:[%s639 + $0xa8] sm:$0xff]
      %v662 = vld [vmem:[%s639 + $0xb0] sm:$0xff]
      %v663 = vld [vmem:[%s639 + $0xb8] sm:$0xff]
      %v664 = vld [vmem:[%s639 + $0xc0] sm:$0xff]
      %v665 = vld [vmem:[%s639 + $0xc8] sm:$0xff]
      %v666 = vld [vmem:[%s639 + $0xd0] sm:$0xff]
      %v667 = vld [vmem:[%s639 + $0xd8] sm:$0xff]
      %v668 = vld [vmem:[%s639 + $0xe0] sm:$0xff]
      %v669 = vld [vmem:[%s639 + $0xe8] sm:$0xff]
      %v670 = vld [vmem:[%s639 + $0xf0] sm:$0xff]
      %v671 = vld [vmem:[%s639 + $0xf8] sm:$0xff]
      %v672 = vld [vmem:[%s639 + $0x100] sm:$0xff]
      %v673 = vld [vmem:[%s639 + $0x108] sm:$0xff]
      %v674 = vld [vmem:[%s639 + $0x110] sm:$0xff]
      %v675 = vld [vmem:[%s639 + $0x118] sm:$0xff]
      %v676 = vld [vmem:[%s639 + $0x120] sm:$0xff]
      %v677 = vld [vmem:[%s639 + $0x128] sm:$0xff]
      %v678 = vld [vmem:[%s639 + $0x130] sm:$0xff]
      %v679 = vld [vmem:[%s639 + $0x138] sm:$0xff]
      %v680 = vld [vmem:[%s639 + $0x140] sm:$0xff]
      %v681 = vld [vmem:[%s639 + $0x148] sm:$0xff]
      %v682 = vld [vmem:[%s639 + $0x150] sm:$0xff]
      %v683 = vld [vmem:[%s639 + $0x158] sm:$0xff]
      %v684 = vld [vmem:[%s639 + $0x160] sm:$0xff]
      %v685 = vld [vmem:[%s639 + $0x168] sm:$0xff]
      %v686 = vld [vmem:[%s639 + $0x170] sm:$0xff]
      %v687 = vld [vmem:[%s639 + $0x178] sm:$0xff]
      %v688 = vld [vmem:[%s639 + $0x180] sm:$0xff]
      %v689 = vld [vmem:[%s639 + $0x188] sm:$0xff]
      %v690 = vld [vmem:[%s639 + $0x190] sm:$0xff]
      %v691 = vld [vmem:[%s639 + $0x198] sm:$0xff]
      %v692 = vld [vmem:[%s639 + $0x1a0] sm:$0xff]
      %v693 = vld [vmem:[%s639 + $0x1a8] sm:$0xff]
      %v694 = vld [vmem:[%s639 + $0x1b0] sm:$0xff]
      %v695 = vld [vmem:[%s639 + $0x1b8] sm:$0xff]
      %v696 = vld [vmem:[%s639 + $0x1c0] sm:$0xff]
      %v697 = vld [vmem:[%s639 + $0x1c8] sm:$0xff]
      %v698 = vld [vmem:[%s639 + $0x1d0] sm:$0xff]
      %v699 = vld [vmem:[%s639 + $0x1d8] sm:$0xff]
      %v700 = vld [vmem:[%s639 + $0x1e0] sm:$0xff]
      %v701 = vld [vmem:[%s639 + $0x1e8] sm:$0xff]
      %v702 = vld [vmem:[%s639 + $0x1f0] sm:$0xff]
      %v703 = vld [vmem:[%s639 + $0x1f8] sm:$0xff]
      %v704 = vld [vmem:[%s639 + $0x200] sm:$0xff]
      %v705 = vld [vmem:[%s639 + $0x208] sm:$0xff]
      %v706 = vld [vmem:[%s639 + $0x210] sm:$0xff]
      %v707 = vld [vmem:[%s639 + $0x218] sm:$0xff]
      %v708 = vld [vmem:[%s639 + $0x220] sm:$0xff]
      %v709 = vld [vmem:[%s639 + $0x228] sm:$0xff]
      %v710 = vld [vmem:[%s639 + $0x230] sm:$0xff]
      %v711 = vld [vmem:[%s639 + $0x238] sm:$0xff]
      %v712 = vld [vmem:[%s639 + $0x240] sm:$0xff]
      %v713 = vld [vmem:[%s639 + $0x248] sm:$0xff]
      %v714 = vld [vmem:[%s639 + $0x250] sm:$0xff]
      %v715 = vld [vmem:[%s639 + $0x258] sm:$0xff]
      %v716 = vld [vmem:[%s639 + $0x260] sm:$0xff]
      %v717 = vld [vmem:[%s639 + $0x268] sm:$0xff]
      %v718 = vld [vmem:[%s639 + $0x270] sm:$0xff]
      %v719 = vld [vmem:[%s639 + $0x278] sm:$0xff]
      %v720 = vld [vmem:[%s639 + $0x280] sm:$0xff]
      %v721 = vld [vmem:[%s639 + $0x288] sm:$0xff]
      %v722 = vld [vmem:[%s639 + $0x290] sm:$0xff]
      %v723 = vld [vmem:[%s639 + $0x298] sm:$0xff]
      %v724 = vld [vmem:[%s639 + $0x2a0] sm:$0xff]
      %v725 = vld [vmem:[%s639 + $0x2a8] sm:$0xff]
      %v726 = vld [vmem:[%s639 + $0x2b0] sm:$0xff]
      %v727 = vld [vmem:[%s639 + $0x2b8] sm:$0xff]
      %v728 = vld [vmem:[%s639 + $0x2c0] sm:$0xff]
      %v729 = vld [vmem:[%s639 + $0x2c8] sm:$0xff]
      %v730 = vld [vmem:[%s639 + $0x2d0] sm:$0xff]
      %v731 = vld [vmem:[%s639 + $0x2d8] sm:$0xff]
      %v732 = vld [vmem:[%s639 + $0x2e0] sm:$0xff]
      %v733 = vld [vmem:[%s639 + $0x2e8] sm:$0xff]
      %v734 = vld [vmem:[%s639 + $0x2f0] sm:$0xff]
      %v735 = vld [vmem:[%s639 + $0x2f8] sm:$0xff]
      %v736 = vld [vmem:[%s639 + $0x300] sm:$0xff]
      %v737 = vld [vmem:[%s639 + $0x308] sm:$0xff]
      %v738 = vld [vmem:[%s639 + $0x310] sm:$0xff]
      %v739 = vld [vmem:[%s639 + $0x318] sm:$0xff]
      %v740 = vld [vmem:[%s639 + $0x320] sm:$0xff]
      %v741 = vld [vmem:[%s639 + $0x328] sm:$0xff]
      %v742 = vld [vmem:[%s639 + $0x330] sm:$0xff]
      %v743 = vld [vmem:[%s639 + $0x338] sm:$0xff]
      %v744 = vld [vmem:[%s639 + $0x340] sm:$0xff]
      %v745 = vld [vmem:[%s639 + $0x348] sm:$0xff]
      %v746 = vld [vmem:[%s639 + $0x350] sm:$0xff]
      %v747 = vld [vmem:[%s639 + $0x358] sm:$0xff]
      %v748 = vld [vmem:[%s639 + $0x360] sm:$0xff]
      %v749 = vld [vmem:[%s639 + $0x368] sm:$0xff]
      %v750 = vld [vmem:[%s639 + $0x370] sm:$0xff]
      %v751 = vld [vmem:[%s639 + $0x378] sm:$0xff]
      %v752 = vld [vmem:[%s639 + $0x380] sm:$0xff]
      %v753 = vld [vmem:[%s639 + $0x388] sm:$0xff]
      %v754 = vld [vmem:[%s639 + $0x390] sm:$0xff]
      %v755 = vld [vmem:[%s639 + $0x398] sm:$0xff]
      %v756 = vld [vmem:[%s639 + $0x3a0] sm:$0xff]
      %v757 = vld [vmem:[%s639 + $0x3a8] sm:$0xff]
      %v758 = vld [vmem:[%s639 + $0x3b0] sm:$0xff]
      %v759 = vld [vmem:[%s639 + $0x3b8] sm:$0xff]
      %v760 = vld [vmem:[%s639 + $0x3c0] sm:$0xff]
      %v761 = vld [vmem:[%s639 + $0x3c8] sm:$0xff]
      %v762 = vld [vmem:[%s639 + $0x3d0] sm:$0xff]
      %v763 = vld [vmem:[%s639 + $0x3d8] sm:$0xff]
      %v764 = vld [vmem:[%s639 + $0x3e0] sm:$0xff]
      %v765 = vld [vmem:[%s639 + $0x3e8] sm:$0xff]
      %v766 = vld [vmem:[%s639 + $0x3f0] sm:$0xff]
      %v767 = vld [vmem:[%s639 + $0x3f8] sm:$0xff]
      %v768 = vld [vmem:[%s639 + $0x400] sm:$0xff]
      %v769 = vld [vmem:[%s639 + $0x408] sm:$0xff]
      %v770 = vld [vmem:[%s639 + $0x410] sm:$0xff]
      %v771 = vld [vmem:[%s639 + $0x418] sm:$0xff]
      %v772 = vld [vmem:[%s639 + $0x420] sm:$0xff]
      %v773 = vld [vmem:[%s639 + $0x428] sm:$0xff]
      %v774 = vld [vmem:[%s639 + $0x430] sm:$0xff]
      %v775 = vld [vmem:[%s639 + $0x438] sm:$0xff]
      %v776 = vld [vmem:[%s639 + $0x440] sm:$0xff]
      %v777 = vld [vmem:[%s639 + $0x448] sm:$0xff]
      %v778 = vld [vmem:[%s639 + $0x450] sm:$0xff]
      %v779 = vld [vmem:[%s639 + $0x458] sm:$0xff]
      %v780 = vld [vmem:[%s639 + $0x460] sm:$0xff]
      %v781 = vld [vmem:[%s639 + $0x468] sm:$0xff]
      %v782 = vld [vmem:[%s639 + $0x470] sm:$0xff]
      %v783 = vld [vmem:[%s639 + $0x478] sm:$0xff]
      %p784 = scmp.lt.s32.totalorder %s20, 0
      %s785 = ssub.s32 0, %s20
      %s786 = scalar_select %p784, %s785, %s20
      %s787 = sdiv.u32.pop %s786, 3
      %s788 = srem.u32.pop %s786, 3
      %s789 = ssub.s32 0, %s788
      %s790 = scalar_select %p784, %s789, %s788
      %p791 = scmp.ne.s32.totalorder %s790, 0
      %p792 = scmp.lt.s32.totalorder %s790, 0
      %p793 = pnand %p792, %p791
      %p794 = pneg %p793
      %s795 = sadd.s32 %s790, 3
      %s796 = scalar_select %p794, %s795, %s790
      %s797 = smul.u32 %s796, 384
      %s798 = sadd.s32 %s147, %s797
      %s799 = scalar_lea.vmem [#allocation2], %s798
      %v800 = vld [vmem:[%s799] sm:$0xff]
      %v801 = vld [vmem:[%s799 + $0x8] sm:$0xff]
      %v802 = vld [vmem:[%s799 + $0x10] sm:$0xff]
      %v803 = vld [vmem:[%s799 + $0x18] sm:$0xff]
      %v804 = vld [vmem:[%s799 + $0x20] sm:$0xff]
      %v805 = vld [vmem:[%s799 + $0x28] sm:$0xff]
      %v806 = vld [vmem:[%s799 + $0x30] sm:$0xff]
      %v807 = vld [vmem:[%s799 + $0x38] sm:$0xff]
      %v808 = vld [vmem:[%s799 + $0x40] sm:$0xff]
      %v809 = vld [vmem:[%s799 + $0x48] sm:$0xff]
      %v810 = vld [vmem:[%s799 + $0x50] sm:$0xff]
      %v811 = vld [vmem:[%s799 + $0x58] sm:$0xff]
      %v812 = vld [vmem:[%s799 + $0x60] sm:$0xff]
      %v813 = vld [vmem:[%s799 + $0x68] sm:$0xff]
      %v814 = vld [vmem:[%s799 + $0x70] sm:$0xff]
      %v815 = vld [vmem:[%s799 + $0x78] sm:$0xff]
      %v816 = vld [vmem:[%s799 + $0x80] sm:$0xff]
      %v817 = vld [vmem:[%s799 + $0x88] sm:$0xff]
      %v818 = vld [vmem:[%s799 + $0x90] sm:$0xff]
      %v819 = vld [vmem:[%s799 + $0x98] sm:$0xff]
      %v820 = vld [vmem:[%s799 + $0xa0] sm:$0xff]
      %v821 = vld [vmem:[%s799 + $0xa8] sm:$0xff]
      %v822 = vld [vmem:[%s799 + $0xb0] sm:$0xff]
      %v823 = vld [vmem:[%s799 + $0xb8] sm:$0xff]
      %v824 = vld [vmem:[%s799 + $0xc0] sm:$0xff]
      %v825 = vld [vmem:[%s799 + $0xc8] sm:$0xff]
      %v826 = vld [vmem:[%s799 + $0xd0] sm:$0xff]
      %v827 = vld [vmem:[%s799 + $0xd8] sm:$0xff]
      %v828 = vld [vmem:[%s799 + $0xe0] sm:$0xff]
      %v829 = vld [vmem:[%s799 + $0xe8] sm:$0xff]
      %v830 = vld [vmem:[%s799 + $0xf0] sm:$0xff]
      %v831 = vld [vmem:[%s799 + $0xf8] sm:$0xff]
      %v832 = vld [vmem:[%s799 + $0x100] sm:$0xff]
      %v833 = vld [vmem:[%s799 + $0x108] sm:$0xff]
      %v834 = vld [vmem:[%s799 + $0x110] sm:$0xff]
      %v835 = vld [vmem:[%s799 + $0x118] sm:$0xff]
      %v836 = vld [vmem:[%s799 + $0x120] sm:$0xff]
      %v837 = vld [vmem:[%s799 + $0x128] sm:$0xff]
      %v838 = vld [vmem:[%s799 + $0x130] sm:$0xff]
      %v839 = vld [vmem:[%s799 + $0x138] sm:$0xff]
      %v840 = vld [vmem:[%s799 + $0x140] sm:$0xff]
      %v841 = vld [vmem:[%s799 + $0x148] sm:$0xff]
      %v842 = vld [vmem:[%s799 + $0x150] sm:$0xff]
      %v843 = vld [vmem:[%s799 + $0x158] sm:$0xff]
      %v844 = vld [vmem:[%s799 + $0x160] sm:$0xff]
      %v845 = vld [vmem:[%s799 + $0x168] sm:$0xff]
      %v846 = vld [vmem:[%s799 + $0x170] sm:$0xff]
      %v847 = vld [vmem:[%s799 + $0x178] sm:$0xff]
      %v848 = vld [vmem:[#allocation4] sm:$0xff]
      %v849 = vld [vmem:[#allocation4 + $0x8] sm:$0xff]
      %v850 = vld [vmem:[#allocation4 + $0x10] sm:$0xff]
      %v851 = vld [vmem:[#allocation4 + $0x18] sm:$0xff]
      %v852 = vld [vmem:[#allocation4 + $0x20] sm:$0xff]
      %v853 = vld [vmem:[#allocation4 + $0x28] sm:$0xff]
      %v854 = vld [vmem:[#allocation4 + $0x30] sm:$0xff]
      %v855 = vld [vmem:[#allocation4 + $0x38] sm:$0xff]
      %v856 = vld [vmem:[#allocation4 + $0x40] sm:$0xff]
      %v857 = vld [vmem:[#allocation4 + $0x48] sm:$0xff]
      %v858 = vld [vmem:[#allocation4 + $0x50] sm:$0xff]
      %v859 = vld [vmem:[#allocation4 + $0x58] sm:$0xff]
      %v860 = vld [vmem:[#allocation4 + $0x60] sm:$0xff]
      %v861 = vld [vmem:[#allocation4 + $0x68] sm:$0xff]
      %v862 = vld [vmem:[#allocation4 + $0x70] sm:$0xff]
      %v863 = vld [vmem:[#allocation4 + $0x78] sm:$0xff]
      %v864 = vld [vmem:[#allocation4 + $0x80] sm:$0xff]
      %v865 = vld [vmem:[#allocation4 + $0x88] sm:$0xff]
      %v866 = vld [vmem:[#allocation4 + $0x90] sm:$0xff]
      %v867 = vld [vmem:[#allocation4 + $0x98] sm:$0xff]
      %v868 = vld [vmem:[#allocation4 + $0xa0] sm:$0xff]
      %v869 = vld [vmem:[#allocation4 + $0xa8] sm:$0xff]
      %v870 = vld [vmem:[#allocation4 + $0xb0] sm:$0xff]
      %v871 = vld [vmem:[#allocation4 + $0xb8] sm:$0xff]
      %v872 = vld [vmem:[#allocation4 + $0xc0] sm:$0xff]
      %v873 = vld [vmem:[#allocation4 + $0xc8] sm:$0xff]
      %v874 = vld [vmem:[#allocation4 + $0xd0] sm:$0xff]
      %v875 = vld [vmem:[#allocation4 + $0xd8] sm:$0xff]
      %v876 = vld [vmem:[#allocation4 + $0xe0] sm:$0xff]
      %v877 = vld [vmem:[#allocation4 + $0xe8] sm:$0xff]
      %v878 = vld [vmem:[#allocation4 + $0xf0] sm:$0xff]
      %v879 = vld [vmem:[#allocation4 + $0xf8] sm:$0xff]
      %v880 = vld [vmem:[#allocation4 + $0x100] sm:$0xff]
      %v881 = vld [vmem:[#allocation4 + $0x108] sm:$0xff]
      %v882 = vld [vmem:[#allocation4 + $0x110] sm:$0xff]
      %v883 = vld [vmem:[#allocation4 + $0x118] sm:$0xff]
      %v884 = vld [vmem:[#allocation4 + $0x120] sm:$0xff]
      %v885 = vld [vmem:[#allocation4 + $0x128] sm:$0xff]
      %v886 = vld [vmem:[#allocation4 + $0x130] sm:$0xff]
      %v887 = vld [vmem:[#allocation4 + $0x138] sm:$0xff]
      %v888 = vld [vmem:[#allocation4 + $0x140] sm:$0xff]
      %v889 = vld [vmem:[#allocation4 + $0x148] sm:$0xff]
      %v890 = vld [vmem:[#allocation4 + $0x150] sm:$0xff]
      %v891 = vld [vmem:[#allocation4 + $0x158] sm:$0xff]
      %v892 = vld [vmem:[#allocation4 + $0x160] sm:$0xff]
      %v893 = vld [vmem:[#allocation4 + $0x168] sm:$0xff]
      %v894 = vld [vmem:[#allocation4 + $0x170] sm:$0xff]
      %v895 = vld [vmem:[#allocation4 + $0x178] sm:$0xff]
      %896 = vmatpush.msra.mxu0 %v815
      %897 = vmatpush.msra.mxu0 %v814
      %898 = vmatpush.msra.mxu0 %v813
      %899 = vmatpush.msra.mxu0 %v812
      %900 = vmatpush.msra.mxu0 %v811
      %901 = vmatpush.msra.mxu0 %v810
      %902 = vmatpush.msra.mxu0 %v809
      %903 = vmatpush.msra.mxu0 %v808
      %904 = vmatpush.msra.mxu0 %v807
      %905 = vmatpush.msra.mxu0 %v806
      %906 = vmatpush.msra.mxu0 %v805
      %907 = vmatpush.msra.mxu0 %v804
      %908 = vmatpush.msra.mxu0 %v803
      %909 = vmatpush.msra.mxu0 %v802
      %910 = vmatpush.msra.mxu0 %v801
      %911 = vmatpush.msra.mxu0 %v800
      %912 = vmatmul.f32.gmra.mxu0 %v640
      %v913 = vpop.f32.mrf.mxu0
      %v914 = vadd.f32 0.0, %v913
      %915 = vmatmul.f32.gmra.mxu0 %v643
      %v916 = vpop.f32.mrf.mxu0
      %v917 = vadd.f32 0.0, %v916
      %918 = vmatmul.f32.gmra.mxu0 %v646
      %v919 = vpop.f32.mrf.mxu0
      %v920 = vadd.f32 0.0, %v919
      %921 = vmatmul.f32.gmra.mxu0 %v649
      %v922 = vpop.f32.mrf.mxu0
      %v923 = vadd.f32 0.0, %v922
      %924 = vmatmul.f32.gmra.mxu0 %v652
      %v925 = vpop.f32.mrf.mxu0
      %v926 = vadd.f32 0.0, %v925
      %927 = vmatmul.f32.gmra.mxu0 %v655
      %v928 = vpop.f32.mrf.mxu0
      %v929 = vadd.f32 0.0, %v928
      %930 = vmatmul.f32.gmra.mxu0 %v658
      %v931 = vpop.f32.mrf.mxu0
      %v932 = vadd.f32 0.0, %v931
      %933 = vmatmul.f32.gmra.mxu0 %v661
      %v934 = vpop.f32.mrf.mxu0
      %v935 = vadd.f32 0.0, %v934
      %936 = vmatmul.f32.gmra.mxu0 %v664
      %v937 = vpop.f32.mrf.mxu0
      %v938 = vadd.f32 0.0, %v937
      %939 = vmatmul.f32.gmra.mxu0 %v667
      %v940 = vpop.f32.mrf.mxu0
      %v941 = vadd.f32 0.0, %v940
      %942 = vmatmul.f32.gmra.mxu0 %v670
      %v943 = vpop.f32.mrf.mxu0
      %v944 = vadd.f32 0.0, %v943
      %945 = vmatmul.f32.gmra.mxu0 %v673
      %v946 = vpop.f32.mrf.mxu0
      %v947 = vadd.f32 0.0, %v946
      %948 = vmatmul.f32.gmra.mxu0 %v676
      %v949 = vpop.f32.mrf.mxu0
      %v950 = vadd.f32 0.0, %v949
      %951 = vmatmul.f32.gmra.mxu0 %v679
      %v952 = vpop.f32.mrf.mxu0
      %v953 = vadd.f32 0.0, %v952
      %954 = vmatmul.f32.gmra.mxu0 %v682
      %v955 = vpop.f32.mrf.mxu0
      %v956 = vadd.f32 0.0, %v955
      %957 = vmatmul.f32.gmra.mxu0 %v685
      %v958 = vpop.f32.mrf.mxu0
      %v959 = vadd.f32 0.0, %v958
      %960 = vmatmul.f32.gmra.mxu0 %v688
      %v961 = vpop.f32.mrf.mxu0
      %v962 = vadd.f32 0.0, %v961
      %963 = vmatmul.f32.gmra.mxu0 %v691
      %v964 = vpop.f32.mrf.mxu0
      %v965 = vadd.f32 0.0, %v964
      %966 = vmatmul.f32.gmra.mxu0 %v694
      %v967 = vpop.f32.mrf.mxu0
      %v968 = vadd.f32 0.0, %v967
      %969 = vmatmul.f32.gmra.mxu0 %v697
      %v970 = vpop.f32.mrf.mxu0
      %v971 = vadd.f32 0.0, %v970
      %972 = vmatmul.f32.gmra.mxu0 %v700
      %v973 = vpop.f32.mrf.mxu0
      %v974 = vadd.f32 0.0, %v973
      %975 = vmatmul.f32.gmra.mxu0 %v703
      %v976 = vpop.f32.mrf.mxu0
      %v977 = vadd.f32 0.0, %v976
      %978 = vmatmul.f32.gmra.mxu0 %v706
      %v979 = vpop.f32.mrf.mxu0
      %v980 = vadd.f32 0.0, %v979
      %981 = vmatmul.f32.gmra.mxu0 %v709
      %v982 = vpop.f32.mrf.mxu0
      %v983 = vadd.f32 0.0, %v982
      %984 = vmatmul.f32.gmra.mxu0 %v712
      %v985 = vpop.f32.mrf.mxu0
      %v986 = vadd.f32 0.0, %v985
      %987 = vmatmul.f32.gmra.mxu0 %v715
      %v988 = vpop.f32.mrf.mxu0
      %v989 = vadd.f32 0.0, %v988
      %990 = vmatmul.f32.gmra.mxu0 %v718
      %v991 = vpop.f32.mrf.mxu0
      %v992 = vadd.f32 0.0, %v991
      %993 = vmatmul.f32.gmra.mxu0 %v721
      %v994 = vpop.f32.mrf.mxu0
      %v995 = vadd.f32 0.0, %v994
      %996 = vmatmul.f32.gmra.mxu0 %v724
      %v997 = vpop.f32.mrf.mxu0
      %v998 = vadd.f32 0.0, %v997
      %999 = vmatmul.f32.gmra.mxu0 %v727
      %v1000 = vpop.f32.mrf.mxu0
      %v1001 = vadd.f32 0.0, %v1000
      %1002 = vmatmul.f32.gmra.mxu0 %v730
      %v1003 = vpop.f32.mrf.mxu0
      %v1004 = vadd.f32 0.0, %v1003
      %1005 = vmatmul.f32.gmra.mxu0 %v733
      %v1006 = vpop.f32.mrf.mxu0
      %v1007 = vadd.f32 0.0, %v1006
      %1008 = vmatmul.f32.gmra.mxu0 %v736
      %v1009 = vpop.f32.mrf.mxu0
      %v1010 = vadd.f32 0.0, %v1009
      %1011 = vmatmul.f32.gmra.mxu0 %v739
      %v1012 = vpop.f32.mrf.mxu0
      %v1013 = vadd.f32 0.0, %v1012
      %1014 = vmatmul.f32.gmra.mxu0 %v742
      %v1015 = vpop.f32.mrf.mxu0
      %v1016 = vadd.f32 0.0, %v1015
      %1017 = vmatmul.f32.gmra.mxu0 %v745
      %v1018 = vpop.f32.mrf.mxu0
      %v1019 = vadd.f32 0.0, %v1018
      %1020 = vmatmul.f32.gmra.mxu0 %v748
      %v1021 = vpop.f32.mrf.mxu0
      %v1022 = vadd.f32 0.0, %v1021
      %1023 = vmatmul.f32.gmra.mxu0 %v751
      %v1024 = vpop.f32.mrf.mxu0
      %v1025 = vadd.f32 0.0, %v1024
      %1026 = vmatmul.f32.gmra.mxu0 %v754
      %v1027 = vpop.f32.mrf.mxu0
      %v1028 = vadd.f32 0.0, %v1027
      %1029 = vmatmul.f32.gmra.mxu0 %v757
      %v1030 = vpop.f32.mrf.mxu0
      %v1031 = vadd.f32 0.0, %v1030
      %1032 = vmatmul.f32.gmra.mxu0 %v760
      %v1033 = vpop.f32.mrf.mxu0
      %v1034 = vadd.f32 0.0, %v1033
      %1035 = vmatmul.f32.gmra.mxu0 %v763
      %v1036 = vpop.f32.mrf.mxu0
      %v1037 = vadd.f32 0.0, %v1036
      %1038 = vmatmul.f32.gmra.mxu0 %v766
      %v1039 = vpop.f32.mrf.mxu0
      %v1040 = vadd.f32 0.0, %v1039
      %1041 = vmatmul.f32.gmra.mxu0 %v769
      %v1042 = vpop.f32.mrf.mxu0
      %v1043 = vadd.f32 0.0, %v1042
      %1044 = vmatmul.f32.gmra.mxu0 %v772
      %v1045 = vpop.f32.mrf.mxu0
      %v1046 = vadd.f32 0.0, %v1045
      %1047 = vmatmul.f32.gmra.mxu0 %v775
      %v1048 = vpop.f32.mrf.mxu0
      %v1049 = vadd.f32 0.0, %v1048
      %1050 = vmatmul.f32.gmra.mxu0 %v778
      %v1051 = vpop.f32.mrf.mxu0
      %v1052 = vadd.f32 0.0, %v1051
      %1053 = vmatmul.f32.gmra.mxu0 %v781
      %v1054 = vpop.f32.mrf.mxu0
      %v1055 = vadd.f32 0.0, %v1054
      %1056 = vdwg.mxu0
      %1057 = vmatpush.msra.mxu0 %v831
      %1058 = vmatpush.msra.mxu0 %v830
      %1059 = vmatpush.msra.mxu0 %v829
      %1060 = vmatpush.msra.mxu0 %v828
      %1061 = vmatpush.msra.mxu0 %v827
      %1062 = vmatpush.msra.mxu0 %v826
      %1063 = vmatpush.msra.mxu0 %v825
      %1064 = vmatpush.msra.mxu0 %v824
      %1065 = vmatpush.msra.mxu0 %v823
      %1066 = vmatpush.msra.mxu0 %v822
      %1067 = vmatpush.msra.mxu0 %v821
      %1068 = vmatpush.msra.mxu0 %v820
      %1069 = vmatpush.msra.mxu0 %v819
      %1070 = vmatpush.msra.mxu0 %v818
      %1071 = vmatpush.msra.mxu0 %v817
      %1072 = vmatpush.msra.mxu0 %v816
      %1073 = vmatmul.f32.gmra.mxu0 %v641
      %v1074 = vpop.f32.mrf.mxu0
      %v1075 = vadd.f32 %v914, %v1074
      %1076 = vmatmul.f32.gmra.mxu0 %v644
      %v1077 = vpop.f32.mrf.mxu0
      %v1078 = vadd.f32 %v917, %v1077
      %1079 = vmatmul.f32.gmra.mxu0 %v647
      %v1080 = vpop.f32.mrf.mxu0
      %v1081 = vadd.f32 %v920, %v1080
      %1082 = vmatmul.f32.gmra.mxu0 %v650
      %v1083 = vpop.f32.mrf.mxu0
      %v1084 = vadd.f32 %v923, %v1083
      %1085 = vmatmul.f32.gmra.mxu0 %v653
      %v1086 = vpop.f32.mrf.mxu0
      %v1087 = vadd.f32 %v926, %v1086
      %1088 = vmatmul.f32.gmra.mxu0 %v656
      %v1089 = vpop.f32.mrf.mxu0
      %v1090 = vadd.f32 %v929, %v1089
      %1091 = vmatmul.f32.gmra.mxu0 %v659
      %v1092 = vpop.f32.mrf.mxu0
      %v1093 = vadd.f32 %v932, %v1092
      %1094 = vmatmul.f32.gmra.mxu0 %v662
      %v1095 = vpop.f32.mrf.mxu0
      %v1096 = vadd.f32 %v935, %v1095
      %1097 = vmatmul.f32.gmra.mxu0 %v665
      %v1098 = vpop.f32.mrf.mxu0
      %v1099 = vadd.f32 %v938, %v1098
      %1100 = vmatmul.f32.gmra.mxu0 %v668
      %v1101 = vpop.f32.mrf.mxu0
      %v1102 = vadd.f32 %v941, %v1101
      %1103 = vmatmul.f32.gmra.mxu0 %v671
      %v1104 = vpop.f32.mrf.mxu0
      %v1105 = vadd.f32 %v944, %v1104
      %1106 = vmatmul.f32.gmra.mxu0 %v674
      %v1107 = vpop.f32.mrf.mxu0
      %v1108 = vadd.f32 %v947, %v1107
      %1109 = vmatmul.f32.gmra.mxu0 %v677
      %v1110 = vpop.f32.mrf.mxu0
      %v1111 = vadd.f32 %v950, %v1110
      %1112 = vmatmul.f32.gmra.mxu0 %v680
      %v1113 = vpop.f32.mrf.mxu0
      %v1114 = vadd.f32 %v953, %v1113
      %1115 = vmatmul.f32.gmra.mxu0 %v683
      %v1116 = vpop.f32.mrf.mxu0
      %v1117 = vadd.f32 %v956, %v1116
      %1118 = vmatmul.f32.gmra.mxu0 %v686
      %v1119 = vpop.f32.mrf.mxu0
      %v1120 = vadd.f32 %v959, %v1119
      %1121 = vmatmul.f32.gmra.mxu0 %v689
      %v1122 = vpop.f32.mrf.mxu0
      %v1123 = vadd.f32 %v962, %v1122
      %1124 = vmatmul.f32.gmra.mxu0 %v692
      %v1125 = vpop.f32.mrf.mxu0
      %v1126 = vadd.f32 %v965, %v1125
      %1127 = vmatmul.f32.gmra.mxu0 %v695
      %v1128 = vpop.f32.mrf.mxu0
      %v1129 = vadd.f32 %v968, %v1128
      %1130 = vmatmul.f32.gmra.mxu0 %v698
      %v1131 = vpop.f32.mrf.mxu0
      %v1132 = vadd.f32 %v971, %v1131
      %1133 = vmatmul.f32.gmra.mxu0 %v701
      %v1134 = vpop.f32.mrf.mxu0
      %v1135 = vadd.f32 %v974, %v1134
      %1136 = vmatmul.f32.gmra.mxu0 %v704
      %v1137 = vpop.f32.mrf.mxu0
      %v1138 = vadd.f32 %v977, %v1137
      %1139 = vmatmul.f32.gmra.mxu0 %v707
      %v1140 = vpop.f32.mrf.mxu0
      %v1141 = vadd.f32 %v980, %v1140
      %1142 = vmatmul.f32.gmra.mxu0 %v710
      %v1143 = vpop.f32.mrf.mxu0
      %v1144 = vadd.f32 %v983, %v1143
      %1145 = vmatmul.f32.gmra.mxu0 %v713
      %v1146 = vpop.f32.mrf.mxu0
      %v1147 = vadd.f32 %v986, %v1146
      %1148 = vmatmul.f32.gmra.mxu0 %v716
      %v1149 = vpop.f32.mrf.mxu0
      %v1150 = vadd.f32 %v989, %v1149
      %1151 = vmatmul.f32.gmra.mxu0 %v719
      %v1152 = vpop.f32.mrf.mxu0
      %v1153 = vadd.f32 %v992, %v1152
      %1154 = vmatmul.f32.gmra.mxu0 %v722
      %v1155 = vpop.f32.mrf.mxu0
      %v1156 = vadd.f32 %v995, %v1155
      %1157 = vmatmul.f32.gmra.mxu0 %v725
      %v1158 = vpop.f32.mrf.mxu0
      %v1159 = vadd.f32 %v998, %v1158
      %1160 = vmatmul.f32.gmra.mxu0 %v728
      %v1161 = vpop.f32.mrf.mxu0
      %v1162 = vadd.f32 %v1001, %v1161
      %1163 = vmatmul.f32.gmra.mxu0 %v731
      %v1164 = vpop.f32.mrf.mxu0
      %v1165 = vadd.f32 %v1004, %v1164
      %1166 = vmatmul.f32.gmra.mxu0 %v734
      %v1167 = vpop.f32.mrf.mxu0
      %v1168 = vadd.f32 %v1007, %v1167
      %1169 = vmatmul.f32.gmra.mxu0 %v737
      %v1170 = vpop.f32.mrf.mxu0
      %v1171 = vadd.f32 %v1010, %v1170
      %1172 = vmatmul.f32.gmra.mxu0 %v740
      %v1173 = vpop.f32.mrf.mxu0
      %v1174 = vadd.f32 %v1013, %v1173
      %1175 = vmatmul.f32.gmra.mxu0 %v743
      %v1176 = vpop.f32.mrf.mxu0
      %v1177 = vadd.f32 %v1016, %v1176
      %1178 = vmatmul.f32.gmra.mxu0 %v746
      %v1179 = vpop.f32.mrf.mxu0
      %v1180 = vadd.f32 %v1019, %v1179
      %1181 = vmatmul.f32.gmra.mxu0 %v749
      %v1182 = vpop.f32.mrf.mxu0
      %v1183 = vadd.f32 %v1022, %v1182
      %1184 = vmatmul.f32.gmra.mxu0 %v752
      %v1185 = vpop.f32.mrf.mxu0
      %v1186 = vadd.f32 %v1025, %v1185
      %1187 = vmatmul.f32.gmra.mxu0 %v755
      %v1188 = vpop.f32.mrf.mxu0
      %v1189 = vadd.f32 %v1028, %v1188
      %1190 = vmatmul.f32.gmra.mxu0 %v758
      %v1191 = vpop.f32.mrf.mxu0
      %v1192 = vadd.f32 %v1031, %v1191
      %1193 = vmatmul.f32.gmra.mxu0 %v761
      %v1194 = vpop.f32.mrf.mxu0
      %v1195 = vadd.f32 %v1034, %v1194
      %1196 = vmatmul.f32.gmra.mxu0 %v764
      %v1197 = vpop.f32.mrf.mxu0
      %v1198 = vadd.f32 %v1037, %v1197
      %1199 = vmatmul.f32.gmra.mxu0 %v767
      %v1200 = vpop.f32.mrf.mxu0
      %v1201 = vadd.f32 %v1040, %v1200
      %1202 = vmatmul.f32.gmra.mxu0 %v770
      %v1203 = vpop.f32.mrf.mxu0
      %v1204 = vadd.f32 %v1043, %v1203
      %1205 = vmatmul.f32.gmra.mxu0 %v773
      %v1206 = vpop.f32.mrf.mxu0
      %v1207 = vadd.f32 %v1046, %v1206
      %1208 = vmatmul.f32.gmra.mxu0 %v776
      %v1209 = vpop.f32.mrf.mxu0
      %v1210 = vadd.f32 %v1049, %v1209
      %1211 = vmatmul.f32.gmra.mxu0 %v779
      %v1212 = vpop.f32.mrf.mxu0
      %v1213 = vadd.f32 %v1052, %v1212
      %1214 = vmatmul.f32.gmra.mxu0 %v782
      %v1215 = vpop.f32.mrf.mxu0
      %v1216 = vadd.f32 %v1055, %v1215
      %1217 = vdwg.mxu0
      %1218 = vmatpush.msra.mxu0 %v847
      %1219 = vmatpush.msra.mxu0 %v846
      %1220 = vmatpush.msra.mxu0 %v845
      %1221 = vmatpush.msra.mxu0 %v844
      %1222 = vmatpush.msra.mxu0 %v843
      %1223 = vmatpush.msra.mxu0 %v842
      %1224 = vmatpush.msra.mxu0 %v841
      %1225 = vmatpush.msra.mxu0 %v840
      %1226 = vmatpush.msra.mxu0 %v839
      %1227 = vmatpush.msra.mxu0 %v838
      %1228 = vmatpush.msra.mxu0 %v837
      %1229 = vmatpush.msra.mxu0 %v836
      %1230 = vmatpush.msra.mxu0 %v835
      %1231 = vmatpush.msra.mxu0 %v834
      %1232 = vmatpush.msra.mxu0 %v833
      %1233 = vmatpush.msra.mxu0 %v832
      %1234 = vmatmul.f32.gmra.mxu0 %v642
      %v1235 = vpop.f32.mrf.mxu0
      %v1236 = vadd.f32 %v1075, %v1235
      %1237 = vmatmul.f32.gmra.mxu0 %v645
      %v1238 = vpop.f32.mrf.mxu0
      %v1239 = vadd.f32 %v1078, %v1238
      %1240 = vmatmul.f32.gmra.mxu0 %v648
      %v1241 = vpop.f32.mrf.mxu0
      %v1242 = vadd.f32 %v1081, %v1241
      %1243 = vmatmul.f32.gmra.mxu0 %v651
      %v1244 = vpop.f32.mrf.mxu0
      %v1245 = vadd.f32 %v1084, %v1244
      %1246 = vmatmul.f32.gmra.mxu0 %v654
      %v1247 = vpop.f32.mrf.mxu0
      %v1248 = vadd.f32 %v1087, %v1247
      %1249 = vmatmul.f32.gmra.mxu0 %v657
      %v1250 = vpop.f32.mrf.mxu0
      %v1251 = vadd.f32 %v1090, %v1250
      %1252 = vmatmul.f32.gmra.mxu0 %v660
      %v1253 = vpop.f32.mrf.mxu0
      %v1254 = vadd.f32 %v1093, %v1253
      %1255 = vmatmul.f32.gmra.mxu0 %v663
      %v1256 = vpop.f32.mrf.mxu0
      %v1257 = vadd.f32 %v1096, %v1256
      %1258 = vmatmul.f32.gmra.mxu0 %v666
      %v1259 = vpop.f32.mrf.mxu0
      %v1260 = vadd.f32 %v1099, %v1259
      %1261 = vmatmul.f32.gmra.mxu0 %v669
      %v1262 = vpop.f32.mrf.mxu0
      %v1263 = vadd.f32 %v1102, %v1262
      %1264 = vmatmul.f32.gmra.mxu0 %v672
      %v1265 = vpop.f32.mrf.mxu0
      %v1266 = vadd.f32 %v1105, %v1265
      %1267 = vmatmul.f32.gmra.mxu0 %v675
      %v1268 = vpop.f32.mrf.mxu0
      %v1269 = vadd.f32 %v1108, %v1268
      %1270 = vmatmul.f32.gmra.mxu0 %v678
      %v1271 = vpop.f32.mrf.mxu0
      %v1272 = vadd.f32 %v1111, %v1271
      %1273 = vmatmul.f32.gmra.mxu0 %v681
      %v1274 = vpop.f32.mrf.mxu0
      %v1275 = vadd.f32 %v1114, %v1274
      %1276 = vmatmul.f32.gmra.mxu0 %v684
      %v1277 = vpop.f32.mrf.mxu0
      %v1278 = vadd.f32 %v1117, %v1277
      %1279 = vmatmul.f32.gmra.mxu0 %v687
      %v1280 = vpop.f32.mrf.mxu0
      %v1281 = vadd.f32 %v1120, %v1280
      %1282 = vmatmul.f32.gmra.mxu0 %v690
      %v1283 = vpop.f32.mrf.mxu0
      %v1284 = vadd.f32 %v1123, %v1283
      %1285 = vmatmul.f32.gmra.mxu0 %v693
      %v1286 = vpop.f32.mrf.mxu0
      %v1287 = vadd.f32 %v1126, %v1286
      %1288 = vmatmul.f32.gmra.mxu0 %v696
      %v1289 = vpop.f32.mrf.mxu0
      %v1290 = vadd.f32 %v1129, %v1289
      %1291 = vmatmul.f32.gmra.mxu0 %v699
      %v1292 = vpop.f32.mrf.mxu0
      %v1293 = vadd.f32 %v1132, %v1292
      %1294 = vmatmul.f32.gmra.mxu0 %v702
      %v1295 = vpop.f32.mrf.mxu0
      %v1296 = vadd.f32 %v1135, %v1295
      %1297 = vmatmul.f32.gmra.mxu0 %v705
      %v1298 = vpop.f32.mrf.mxu0
      %v1299 = vadd.f32 %v1138, %v1298
      %1300 = vmatmul.f32.gmra.mxu0 %v708
      %v1301 = vpop.f32.mrf.mxu0
      %v1302 = vadd.f32 %v1141, %v1301
      %1303 = vmatmul.f32.gmra.mxu0 %v711
      %v1304 = vpop.f32.mrf.mxu0
      %v1305 = vadd.f32 %v1144, %v1304
      %1306 = vmatmul.f32.gmra.mxu0 %v714
      %v1307 = vpop.f32.mrf.mxu0
      %v1308 = vadd.f32 %v1147, %v1307
      %1309 = vmatmul.f32.gmra.mxu0 %v717
      %v1310 = vpop.f32.mrf.mxu0
      %v1311 = vadd.f32 %v1150, %v1310
      %1312 = vmatmul.f32.gmra.mxu0 %v720
      %v1313 = vpop.f32.mrf.mxu0
      %v1314 = vadd.f32 %v1153, %v1313
      %1315 = vmatmul.f32.gmra.mxu0 %v723
      %v1316 = vpop.f32.mrf.mxu0
      %v1317 = vadd.f32 %v1156, %v1316
      %1318 = vmatmul.f32.gmra.mxu0 %v726
      %v1319 = vpop.f32.mrf.mxu0
      %v1320 = vadd.f32 %v1159, %v1319
      %1321 = vmatmul.f32.gmra.mxu0 %v729
      %v1322 = vpop.f32.mrf.mxu0
      %v1323 = vadd.f32 %v1162, %v1322
      %1324 = vmatmul.f32.gmra.mxu0 %v732
      %v1325 = vpop.f32.mrf.mxu0
      %v1326 = vadd.f32 %v1165, %v1325
      %1327 = vmatmul.f32.gmra.mxu0 %v735
      %v1328 = vpop.f32.mrf.mxu0
      %v1329 = vadd.f32 %v1168, %v1328
      %1330 = vmatmul.f32.gmra.mxu0 %v738
      %v1331 = vpop.f32.mrf.mxu0
      %v1332 = vadd.f32 %v1171, %v1331
      %1333 = vmatmul.f32.gmra.mxu0 %v741
      %v1334 = vpop.f32.mrf.mxu0
      %v1335 = vadd.f32 %v1174, %v1334
      %1336 = vmatmul.f32.gmra.mxu0 %v744
      %v1337 = vpop.f32.mrf.mxu0
      %v1338 = vadd.f32 %v1177, %v1337
      %1339 = vmatmul.f32.gmra.mxu0 %v747
      %v1340 = vpop.f32.mrf.mxu0
      %v1341 = vadd.f32 %v1180, %v1340
      %1342 = vmatmul.f32.gmra.mxu0 %v750
      %v1343 = vpop.f32.mrf.mxu0
      %v1344 = vadd.f32 %v1183, %v1343
      %1345 = vmatmul.f32.gmra.mxu0 %v753
      %v1346 = vpop.f32.mrf.mxu0
      %v1347 = vadd.f32 %v1186, %v1346
      %1348 = vmatmul.f32.gmra.mxu0 %v756
      %v1349 = vpop.f32.mrf.mxu0
      %v1350 = vadd.f32 %v1189, %v1349
      %1351 = vmatmul.f32.gmra.mxu0 %v759
      %v1352 = vpop.f32.mrf.mxu0
      %v1353 = vadd.f32 %v1192, %v1352
      %1354 = vmatmul.f32.gmra.mxu0 %v762
      %v1355 = vpop.f32.mrf.mxu0
      %v1356 = vadd.f32 %v1195, %v1355
      %1357 = vmatmul.f32.gmra.mxu0 %v765
      %v1358 = vpop.f32.mrf.mxu0
      %v1359 = vadd.f32 %v1198, %v1358
      %1360 = vmatmul.f32.gmra.mxu0 %v768
      %v1361 = vpop.f32.mrf.mxu0
      %v1362 = vadd.f32 %v1201, %v1361
      %1363 = vmatmul.f32.gmra.mxu0 %v771
      %v1364 = vpop.f32.mrf.mxu0
      %v1365 = vadd.f32 %v1204, %v1364
      %1366 = vmatmul.f32.gmra.mxu0 %v774
      %v1367 = vpop.f32.mrf.mxu0
      %v1368 = vadd.f32 %v1207, %v1367
      %1369 = vmatmul.f32.gmra.mxu0 %v777
      %v1370 = vpop.f32.mrf.mxu0
      %v1371 = vadd.f32 %v1210, %v1370
      %1372 = vmatmul.f32.gmra.mxu0 %v780
      %v1373 = vpop.f32.mrf.mxu0
      %v1374 = vadd.f32 %v1213, %v1373
      %1375 = vmatmul.f32.gmra.mxu0 %v783
      %v1376 = vpop.f32.mrf.mxu0
      %v1377 = vadd.f32 %v1216, %v1376
      %1378 = vdwg.mxu0
      %v1379 = vadd.f32 %v848, %v1236
      %v1380 = vadd.f32 %v849, %v1239
      %v1381 = vadd.f32 %v850, %v1242
      %v1382 = vadd.f32 %v851, %v1245
      %v1383 = vadd.f32 %v852, %v1248
      %v1384 = vadd.f32 %v853, %v1251
      %v1385 = vadd.f32 %v854, %v1254
      %v1386 = vadd.f32 %v855, %v1257
      %v1387 = vadd.f32 %v856, %v1260
      %v1388 = vadd.f32 %v857, %v1263
      %v1389 = vadd.f32 %v858, %v1266
      %v1390 = vadd.f32 %v859, %v1269
      %v1391 = vadd.f32 %v860, %v1272
      %v1392 = vadd.f32 %v861, %v1275
      %v1393 = vadd.f32 %v862, %v1278
      %v1394 = vadd.f32 %v863, %v1281
      %v1395 = vadd.f32 %v864, %v1284
      %v1396 = vadd.f32 %v865, %v1287
      %v1397 = vadd.f32 %v866, %v1290
      %v1398 = vadd.f32 %v867, %v1293
      %v1399 = vadd.f32 %v868, %v1296
      %v1400 = vadd.f32 %v869, %v1299
      %v1401 = vadd.f32 %v870, %v1302
      %v1402 = vadd.f32 %v871, %v1305
      %v1403 = vadd.f32 %v872, %v1308
      %v1404 = vadd.f32 %v873, %v1311
      %v1405 = vadd.f32 %v874, %v1314
      %v1406 = vadd.f32 %v875, %v1317
      %v1407 = vadd.f32 %v876, %v1320
      %v1408 = vadd.f32 %v877, %v1323
      %v1409 = vadd.f32 %v878, %v1326
      %v1410 = vadd.f32 %v879, %v1329
      %v1411 = vadd.f32 %v880, %v1332
      %v1412 = vadd.f32 %v881, %v1335
      %v1413 = vadd.f32 %v882, %v1338
      %v1414 = vadd.f32 %v883, %v1341
      %v1415 = vadd.f32 %v884, %v1344
      %v1416 = vadd.f32 %v885, %v1347
      %v1417 = vadd.f32 %v886, %v1350
      %v1418 = vadd.f32 %v887, %v1353
      %v1419 = vadd.f32 %v888, %v1356
      %v1420 = vadd.f32 %v889, %v1359
      %v1421 = vadd.f32 %v890, %v1362
      %v1422 = vadd.f32 %v891, %v1365
      %v1423 = vadd.f32 %v892, %v1368
      %v1424 = vadd.f32 %v893, %v1371
      %v1425 = vadd.f32 %v894, %v1374
      %v1426 = vadd.f32 %v895, %v1377
      %1427 = vst [vmem:[#allocation4] sm:$0xff] %v1379
      %1428 = vst [vmem:[#allocation4 + $0x8] sm:$0xff] %v1380
      %1429 = vst [vmem:[#allocation4 + $0x10] sm:$0xff] %v1381
      %1430 = vst [vmem:[#allocation4 + $0x18] sm:$0xff] %v1382
      %1431 = vst [vmem:[#allocation4 + $0x20] sm:$0xff] %v1383
      %1432 = vst [vmem:[#allocation4 + $0x28] sm:$0xff] %v1384
      %1433 = vst [vmem:[#allocation4 + $0x30] sm:$0xff] %v1385
      %1434 = vst [vmem:[#allocation4 + $0x38] sm:$0xff] %v1386
      %1435 = vst [vmem:[#allocation4 + $0x40] sm:$0xff] %v1387
      %1436 = vst [vmem:[#allocation4 + $0x48] sm:$0xff] %v1388
      %1437 = vst [vmem:[#allocation4 + $0x50] sm:$0xff] %v1389
      %1438 = vst [vmem:[#allocation4 + $0x58] sm:$0xff] %v1390
      %1439 = vst [vmem:[#allocation4 + $0x60] sm:$0xff] %v1391
      %1440 = vst [vmem:[#allocation4 + $0x68] sm:$0xff] %v1392
      %1441 = vst [vmem:[#allocation4 + $0x70] sm:$0xff] %v1393
      %1442 = vst [vmem:[#allocation4 + $0x78] sm:$0xff] %v1394
      %1443 = vst [vmem:[#allocation4 + $0x80] sm:$0xff] %v1395
      %1444 = vst [vmem:[#allocation4 + $0x88] sm:$0xff] %v1396
      %1445 = vst [vmem:[#allocation4 + $0x90] sm:$0xff] %v1397
      %1446 = vst [vmem:[#allocation4 + $0x98] sm:$0xff] %v1398
      %1447 = vst [vmem:[#allocation4 + $0xa0] sm:$0xff] %v1399
      %1448 = vst [vmem:[#allocation4 + $0xa8] sm:$0xff] %v1400
      %1449 = vst [vmem:[#allocation4 + $0xb0] sm:$0xff] %v1401
      %1450 = vst [vmem:[#allocation4 + $0xb8] sm:$0xff] %v1402
      %1451 = vst [vmem:[#allocation4 + $0xc0] sm:$0xff] %v1403
      %1452 = vst [vmem:[#allocation4 + $0xc8] sm:$0xff] %v1404
      %1453 = vst [vmem:[#allocation4 + $0xd0] sm:$0xff] %v1405
      %1454 = vst [vmem:[#allocation4 + $0xd8] sm:$0xff] %v1406
      %1455 = vst [vmem:[#allocation4 + $0xe0] sm:$0xff] %v1407
      %1456 = vst [vmem:[#allocation4 + $0xe8] sm:$0xff] %v1408
      %1457 = vst [vmem:[#allocation4 + $0xf0] sm:$0xff] %v1409
      %1458 = vst [vmem:[#allocation4 + $0xf8] sm:$0xff] %v1410
      %1459 = vst [vmem:[#allocation4 + $0x100] sm:$0xff] %v1411
      %1460 = vst [vmem:[#allocation4 + $0x108] sm:$0xff] %v1412
      %1461 = vst [vmem:[#allocation4 + $0x110] sm:$0xff] %v1413
      %1462 = vst [vmem:[#allocation4 + $0x118] sm:$0xff] %v1414
      %1463 = vst [vmem:[#allocation4 + $0x120] sm:$0xff] %v1415
      %1464 = vst [vmem:[#allocation4 + $0x128] sm:$0xff] %v1416
      %1465 = vst [vmem:[#allocation4 + $0x130] sm:$0xff] %v1417
      %1466 = vst [vmem:[#allocation4 + $0x138] sm:$0xff] %v1418
      %1467 = vst [vmem:[#allocation4 + $0x140] sm:$0xff] %v1419
      %1468 = vst [vmem:[#allocation4 + $0x148] sm:$0xff] %v1420
      %1469 = vst [vmem:[#allocation4 + $0x150] sm:$0xff] %v1421
      %1470 = vst [vmem:[#allocation4 + $0x158] sm:$0xff] %v1422
      %1471 = vst [vmem:[#allocation4 + $0x160] sm:$0xff] %v1423
      %1472 = vst [vmem:[#allocation4 + $0x168] sm:$0xff] %v1424
      %1473 = vst [vmem:[#allocation4 + $0x170] sm:$0xff] %v1425
      %1474 = vst [vmem:[#allocation4 + $0x178] sm:$0xff] %v1426
      // Predicated region
      $region75: #{cheb_graph_conv.1} parent=27 // pred_check
        %p1475 = pneg %p152
      $region76: #{cheb_graph_conv.1} parent=27 // pred_check_branch
        %1477 = sbr.rel (%p1475) target = $region78
      $region77: #{cheb_graph_conv.1} parent=27 // pred_region
        %s1478 = sadd.s32 %s20, 1
        %p1479 = scmp.lt.s32.totalorder %s1478, 0
        %s1480 = ssub.s32 0, %s1478
        %s1481 = scalar_select %p1479, %s1480, %s1478
        %s1482 = sdiv.u32.pop %s1481, 3
        %s1483 = srem.u32.pop %s1481, 3
        %s1484 = ssub.s32 0, %s1483
        %s1485 = scalar_select %p1479, %s1484, %s1483
        %p1486 = scmp.ne.s32.totalorder %s1485, 0
        %p1487 = scmp.lt.s32.totalorder %s1485, 0
        %p1488 = pnand %p1487, %p1486
        %p1489 = pneg %p1488
        %s1490 = sadd.s32 %s1485, 3
        %s1491 = scalar_select %p1489, %s1490, %s1485
        %s1492 = ssub.s32 %s20, 1
        %p1493 = scmp.gt.s32.totalorder %s1492, 0
        %s1494 = scalar_select %p1493, %s1492, 0
        %p1495 = scmp.lt.s32.totalorder %s1494, 0
        %s1496 = ssub.s32 0, %s1494
        %s1497 = scalar_select %p1495, %s1496, %s1494
        %s1498 = sdiv.u32.pop %s1497, 3
        %s1499 = srem.u32.pop %s1497, 3
        %s1500 = ssub.s32 0, %s1499
        %s1501 = scalar_select %p1495, %s1500, %s1499
        %p1502 = scmp.ne.s32.totalorder %s1501, 0
        %p1503 = scmp.lt.s32.totalorder %s1501, 0
        %p1504 = pnand %p1503, %p1502
        %p1505 = pneg %p1504
        %s1506 = sadd.s32 %s1501, 3
        %s1507 = scalar_select %p1505, %s1506, %s1501
        %s1508 = scalar_select %p148, 1.0, 2.0
        %s1509 = scalar_select %p148, 0.0, 1.0
        %v1510 = vld [vmem:[#allocation4] sm:$0xff]
        %v1511 = vld [vmem:[#allocation4 + $0x8] sm:$0xff]
        %v1512 = vld [vmem:[#allocation4 + $0x10] sm:$0xff]
        %v1513 = vld [vmem:[#allocation4 + $0x18] sm:$0xff]
        %v1514 = vld [vmem:[#allocation4 + $0x20] sm:$0xff]
        %v1515 = vld [vmem:[#allocation4 + $0x28] sm:$0xff]
        %v1516 = vld [vmem:[#allocation4 + $0x30] sm:$0xff]
        %v1517 = vld [vmem:[#allocation4 + $0x38] sm:$0xff]
        %v1518 = vld [vmem:[#allocation4 + $0x40] sm:$0xff]
        %v1519 = vld [vmem:[#allocation4 + $0x48] sm:$0xff]
        %v1520 = vld [vmem:[#allocation4 + $0x50] sm:$0xff]
        %v1521 = vld [vmem:[#allocation4 + $0x58] sm:$0xff]
        %v1522 = vld [vmem:[#allocation4 + $0x60] sm:$0xff]
        %v1523 = vld [vmem:[#allocation4 + $0x68] sm:$0xff]
        %v1524 = vld [vmem:[#allocation4 + $0x70] sm:$0xff]
        %v1525 = vld [vmem:[#allocation4 + $0x78] sm:$0xff]
        %v1526 = vld [vmem:[#allocation4 + $0x80] sm:$0xff]
        %v1527 = vld [vmem:[#allocation4 + $0x88] sm:$0xff]
        %v1528 = vld [vmem:[#allocation4 + $0x90] sm:$0xff]
        %v1529 = vld [vmem:[#allocation4 + $0x98] sm:$0xff]
        %v1530 = vld [vmem:[#allocation4 + $0xa0] sm:$0xff]
        %v1531 = vld [vmem:[#allocation4 + $0xa8] sm:$0xff]
        %v1532 = vld [vmem:[#allocation4 + $0xb0] sm:$0xff]
        %v1533 = vld [vmem:[#allocation4 + $0xb8] sm:$0xff]
        %v1534 = vld [vmem:[#allocation4 + $0xc0] sm:$0xff]
        %v1535 = vld [vmem:[#allocation4 + $0xc8] sm:$0xff]
        %v1536 = vld [vmem:[#allocation4 + $0xd0] sm:$0xff]
        %v1537 = vld [vmem:[#allocation4 + $0xd8] sm:$0xff]
        %v1538 = vld [vmem:[#allocation4 + $0xe0] sm:$0xff]
        %v1539 = vld [vmem:[#allocation4 + $0xe8] sm:$0xff]
        %v1540 = vld [vmem:[#allocation4 + $0xf0] sm:$0xff]
        %v1541 = vld [vmem:[#allocation4 + $0xf8] sm:$0xff]
        %v1542 = vld [vmem:[#allocation4 + $0x100] sm:$0xff]
        %v1543 = vld [vmem:[#allocation4 + $0x108] sm:$0xff]
        %v1544 = vld [vmem:[#allocation4 + $0x110] sm:$0xff]
        %v1545 = vld [vmem:[#allocation4 + $0x118] sm:$0xff]
        %v1546 = vld [vmem:[#allocation4 + $0x120] sm:$0xff]
        %v1547 = vld [vmem:[#allocation4 + $0x128] sm:$0xff]
        %v1548 = vld [vmem:[#allocation4 + $0x130] sm:$0xff]
        %v1549 = vld [vmem:[#allocation4 + $0x138] sm:$0xff]
        %v1550 = vld [vmem:[#allocation4 + $0x140] sm:$0xff]
        %v1551 = vld [vmem:[#allocation4 + $0x148] sm:$0xff]
        %v1552 = vld [vmem:[#allocation4 + $0x150] sm:$0xff]
        %v1553 = vld [vmem:[#allocation4 + $0x158] sm:$0xff]
        %v1554 = vld [vmem:[#allocation4 + $0x160] sm:$0xff]
        %v1555 = vld [vmem:[#allocation4 + $0x168] sm:$0xff]
        %v1556 = vld [vmem:[#allocation4 + $0x170] sm:$0xff]
        %v1557 = vld [vmem:[#allocation4 + $0x178] sm:$0xff]
        %v1558 = vstv %s1508
        %v1559 = vmul.f32 %v1558, %v1510
        %v1560 = vmul.f32 %v1558, %v1511
        %v1561 = vmul.f32 %v1558, %v1512
        %v1562 = vmul.f32 %v1558, %v1513
        %v1563 = vmul.f32 %v1558, %v1514
        %v1564 = vmul.f32 %v1558, %v1515
        %v1565 = vmul.f32 %v1558, %v1516
        %v1566 = vmul.f32 %v1558, %v1517
        %v1567 = vmul.f32 %v1558, %v1518
        %v1568 = vmul.f32 %v1558, %v1519
        %v1569 = vmul.f32 %v1558, %v1520
        %v1570 = vmul.f32 %v1558, %v1521
        %v1571 = vmul.f32 %v1558, %v1522
        %v1572 = vmul.f32 %v1558, %v1523
        %v1573 = vmul.f32 %v1558, %v1524
        %v1574 = vmul.f32 %v1558, %v1525
        %v1575 = vmul.f32 %v1558, %v1526
        %v1576 = vmul.f32 %v1558, %v1527
        %v1577 = vmul.f32 %v1558, %v1528
        %v1578 = vmul.f32 %v1558, %v1529
        %v1579 = vmul.f32 %v1558, %v1530
        %v1580 = vmul.f32 %v1558, %v1531
        %v1581 = vmul.f32 %v1558, %v1532
        %v1582 = vmul.f32 %v1558, %v1533
        %v1583 = vmul.f32 %v1558, %v1534
        %v1584 = vmul.f32 %v1558, %v1535
        %v1585 = vmul.f32 %v1558, %v1536
        %v1586 = vmul.f32 %v1558, %v1537
        %v1587 = vmul.f32 %v1558, %v1538
        %v1588 = vmul.f32 %v1558, %v1539
        %v1589 = vmul.f32 %v1558, %v1540
        %v1590 = vmul.f32 %v1558, %v1541
        %v1591 = vmul.f32 %v1558, %v1542
        %v1592 = vmul.f32 %v1558, %v1543
        %v1593 = vmul.f32 %v1558, %v1544
        %v1594 = vmul.f32 %v1558, %v1545
        %v1595 = vmul.f32 %v1558, %v1546
        %v1596 = vmul.f32 %v1558, %v1547
        %v1597 = vmul.f32 %v1558, %v1548
        %v1598 = vmul.f32 %v1558, %v1549
        %v1599 = vmul.f32 %v1558, %v1550
        %v1600 = vmul.f32 %v1558, %v1551
        %v1601 = vmul.f32 %v1558, %v1552
        %v1602 = vmul.f32 %v1558, %v1553
        %v1603 = vmul.f32 %v1558, %v1554
        %v1604 = vmul.f32 %v1558, %v1555
        %v1605 = vmul.f32 %v1558, %v1556
        %v1606 = vmul.f32 %v1558, %v1557
        %s1607 = smul.u32 %s1507, 384
        %s1608 = sadd.s32 %s146, %s1607
        %s1609 = scalar_lea.vmem [#allocation2], %s1608
        %v1610 = vld [vmem:[%s1609] sm:$0xff]
        %v1611 = vld [vmem:[%s1609 + $0x8] sm:$0xff]
        %v1612 = vld [vmem:[%s1609 + $0x10] sm:$0xff]
        %v1613 = vld [vmem:[%s1609 + $0x18] sm:$0xff]
        %v1614 = vld [vmem:[%s1609 + $0x20] sm:$0xff]
        %v1615 = vld [vmem:[%s1609 + $0x28] sm:$0xff]
        %v1616 = vld [vmem:[%s1609 + $0x30] sm:$0xff]
        %v1617 = vld [vmem:[%s1609 + $0x38] sm:$0xff]
        %v1618 = vld [vmem:[%s1609 + $0x40] sm:$0xff]
        %v1619 = vld [vmem:[%s1609 + $0x48] sm:$0xff]
        %v1620 = vld [vmem:[%s1609 + $0x50] sm:$0xff]
        %v1621 = vld [vmem:[%s1609 + $0x58] sm:$0xff]
        %v1622 = vld [vmem:[%s1609 + $0x60] sm:$0xff]
        %v1623 = vld [vmem:[%s1609 + $0x68] sm:$0xff]
        %v1624 = vld [vmem:[%s1609 + $0x70] sm:$0xff]
        %v1625 = vld [vmem:[%s1609 + $0x78] sm:$0xff]
        %v1626 = vld [vmem:[%s1609 + $0x80] sm:$0xff]
        %v1627 = vld [vmem:[%s1609 + $0x88] sm:$0xff]
        %v1628 = vld [vmem:[%s1609 + $0x90] sm:$0xff]
        %v1629 = vld [vmem:[%s1609 + $0x98] sm:$0xff]
        %v1630 = vld [vmem:[%s1609 + $0xa0] sm:$0xff]
        %v1631 = vld [vmem:[%s1609 + $0xa8] sm:$0xff]
        %v1632 = vld [vmem:[%s1609 + $0xb0] sm:$0xff]
        %v1633 = vld [vmem:[%s1609 + $0xb8] sm:$0xff]
        %v1634 = vld [vmem:[%s1609 + $0xc0] sm:$0xff]
        %v1635 = vld [vmem:[%s1609 + $0xc8] sm:$0xff]
        %v1636 = vld [vmem:[%s1609 + $0xd0] sm:$0xff]
        %v1637 = vld [vmem:[%s1609 + $0xd8] sm:$0xff]
        %v1638 = vld [vmem:[%s1609 + $0xe0] sm:$0xff]
        %v1639 = vld [vmem:[%s1609 + $0xe8] sm:$0xff]
        %v1640 = vld [vmem:[%s1609 + $0xf0] sm:$0xff]
        %v1641 = vld [vmem:[%s1609 + $0xf8] sm:$0xff]
        %v1642 = vld [vmem:[%s1609 + $0x100] sm:$0xff]
        %v1643 = vld [vmem:[%s1609 + $0x108] sm:$0xff]
        %v1644 = vld [vmem:[%s1609 + $0x110] sm:$0xff]
        %v1645 = vld [vmem:[%s1609 + $0x118] sm:$0xff]
        %v1646 = vld [vmem:[%s1609 + $0x120] sm:$0xff]
        %v1647 = vld [vmem:[%s1609 + $0x128] sm:$0xff]
        %v1648 = vld [vmem:[%s1609 + $0x130] sm:$0xff]
        %v1649 = vld [vmem:[%s1609 + $0x138] sm:$0xff]
        %v1650 = vld [vmem:[%s1609 + $0x140] sm:$0xff]
        %v1651 = vld [vmem:[%s1609 + $0x148] sm:$0xff]
        %v1652 = vld [vmem:[%s1609 + $0x150] sm:$0xff]
        %v1653 = vld [vmem:[%s1609 + $0x158] sm:$0xff]
        %v1654 = vld [vmem:[%s1609 + $0x160] sm:$0xff]
        %v1655 = vld [vmem:[%s1609 + $0x168] sm:$0xff]
        %v1656 = vld [vmem:[%s1609 + $0x170] sm:$0xff]
        %v1657 = vld [vmem:[%s1609 + $0x178] sm:$0xff]
        %v1658 = vstv %s1509
        %v1659 = vmul.f32 %v1658, %v1610
        %v1660 = vmul.f32 %v1658, %v1611
        %v1661 = vmul.f32 %v1658, %v1612
        %v1662 = vmul.f32 %v1658, %v1613
        %v1663 = vmul.f32 %v1658, %v1614
        %v1664 = vmul.f32 %v1658, %v1615
        %v1665 = vmul.f32 %v1658, %v1616
        %v1666 = vmul.f32 %v1658, %v1617
        %v1667 = vmul.f32 %v1658, %v1618
        %v1668 = vmul.f32 %v1658, %v1619
        %v1669 = vmul.f32 %v1658, %v1620
        %v1670 = vmul.f32 %v1658, %v1621
        %v1671 = vmul.f32 %v1658, %v1622
        %v1672 = vmul.f32 %v1658, %v1623
        %v1673 = vmul.f32 %v1658, %v1624
        %v1674 = vmul.f32 %v1658, %v1625
        %v1675 = vmul.f32 %v1658, %v1626
        %v1676 = vmul.f32 %v1658, %v1627
        %v1677 = vmul.f32 %v1658, %v1628
        %v1678 = vmul.f32 %v1658, %v1629
        %v1679 = vmul.f32 %v1658, %v1630
        %v1680 = vmul.f32 %v1658, %v1631
        %v1681 = vmul.f32 %v1658, %v1632
        %v1682 = vmul.f32 %v1658, %v1633
        %v1683 = vmul.f32 %v1658, %v1634
        %v1684 = vmul.f32 %v1658, %v1635
        %v1685 = vmul.f32 %v1658, %v1636
        %v1686 = vmul.f32 %v1658, %v1637
        %v1687 = vmul.f32 %v1658, %v1638
        %v1688 = vmul.f32 %v1658, %v1639
        %v1689 = vmul.f32 %v1658, %v1640
        %v1690 = vmul.f32 %v1658, %v1641
        %v1691 = vmul.f32 %v1658, %v1642
        %v1692 = vmul.f32 %v1658, %v1643
        %v1693 = vmul.f32 %v1658, %v1644
        %v1694 = vmul.f32 %v1658, %v1645
        %v1695 = vmul.f32 %v1658, %v1646
        %v1696 = vmul.f32 %v1658, %v1647
        %v1697 = vmul.f32 %v1658, %v1648
        %v1698 = vmul.f32 %v1658, %v1649
        %v1699 = vmul.f32 %v1658, %v1650
        %v1700 = vmul.f32 %v1658, %v1651
        %v1701 = vmul.f32 %v1658, %v1652
        %v1702 = vmul.f32 %v1658, %v1653
        %v1703 = vmul.f32 %v1658, %v1654
        %v1704 = vmul.f32 %v1658, %v1655
        %v1705 = vmul.f32 %v1658, %v1656
        %v1706 = vmul.f32 %v1658, %v1657
        %v1707 = vsub.f32 %v1559, %v1659
        %v1708 = vsub.f32 %v1560, %v1660
        %v1709 = vsub.f32 %v1561, %v1661
        %v1710 = vsub.f32 %v1562, %v1662
        %v1711 = vsub.f32 %v1563, %v1663
        %v1712 = vsub.f32 %v1564, %v1664
        %v1713 = vsub.f32 %v1565, %v1665
        %v1714 = vsub.f32 %v1566, %v1666
        %v1715 = vsub.f32 %v1567, %v1667
        %v1716 = vsub.f32 %v1568, %v1668
        %v1717 = vsub.f32 %v1569, %v1669
        %v1718 = vsub.f32 %v1570, %v1670
        %v1719 = vsub.f32 %v1571, %v1671
        %v1720 = vsub.f32 %v1572, %v1672
        %v1721 = vsub.f32 %v1573, %v1673
        %v1722 = vsub.f32 %v1574, %v1674
        %v1723 = vsub.f32 %v1575, %v1675
        %v1724 = vsub.f32 %v1576, %v1676
        %v1725 = vsub.f32 %v1577, %v1677
        %v1726 = vsub.f32 %v1578, %v1678
        %v1727 = vsub.f32 %v1579, %v1679
        %v1728 = vsub.f32 %v1580, %v1680
        %v1729 = vsub.f32 %v1581, %v1681
        %v1730 = vsub.f32 %v1582, %v1682
        %v1731 = vsub.f32 %v1583, %v1683
        %v1732 = vsub.f32 %v1584, %v1684
        %v1733 = vsub.f32 %v1585, %v1685
        %v1734 = vsub.f32 %v1586, %v1686
        %v1735 = vsub.f32 %v1587, %v1687
        %v1736 = vsub.f32 %v1588, %v1688
        %v1737 = vsub.f32 %v1589, %v1689
        %v1738 = vsub.f32 %v1590, %v1690
        %v1739 = vsub.f32 %v1591, %v1691
        %v1740 = vsub.f32 %v1592, %v1692
        %v1741 = vsub.f32 %v1593, %v1693
        %v1742 = vsub.f32 %v1594, %v1694
        %v1743 = vsub.f32 %v1595, %v1695
        %v1744 = vsub.f32 %v1596, %v1696
        %v1745 = vsub.f32 %v1597, %v1697
        %v1746 = vsub.f32 %v1598, %v1698
        %v1747 = vsub.f32 %v1599, %v1699
        %v1748 = vsub.f32 %v1600, %v1700
        %v1749 = vsub.f32 %v1601, %v1701
        %v1750 = vsub.f32 %v1602, %v1702
        %v1751 = vsub.f32 %v1603, %v1703
        %v1752 = vsub.f32 %v1604, %v1704
        %v1753 = vsub.f32 %v1605, %v1705
        %v1754 = vsub.f32 %v1606, %v1706
        %s1755 = smul.u32 %s1491, 384
        %s1756 = sadd.s32 %s146, %s1755
        %s1757 = scalar_lea.vmem [#allocation2], %s1756
        %1758 = vst [vmem:[%s1757] sm:$0xff] %v1707
        %1759 = vst [vmem:[%s1757 + $0x8] sm:$0xff] %v1708
        %1760 = vst [vmem:[%s1757 + $0x10] sm:$0xff] %v1709
        %1761 = vst [vmem:[%s1757 + $0x18] sm:$0xff] %v1710
        %1762 = vst [vmem:[%s1757 + $0x20] sm:$0xff] %v1711
        %1763 = vst [vmem:[%s1757 + $0x28] sm:$0xff] %v1712
        %1764 = vst [vmem:[%s1757 + $0x30] sm:$0xff] %v1713
        %1765 = vst [vmem:[%s1757 + $0x38] sm:$0xff] %v1714
        %1766 = vst [vmem:[%s1757 + $0x40] sm:$0xff] %v1715
        %1767 = vst [vmem:[%s1757 + $0x48] sm:$0xff] %v1716
        %1768 = vst [vmem:[%s1757 + $0x50] sm:$0xff] %v1717
        %1769 = vst [vmem:[%s1757 + $0x58] sm:$0xff] %v1718
        %1770 = vst [vmem:[%s1757 + $0x60] sm:$0xff] %v1719
        %1771 = vst [vmem:[%s1757 + $0x68] sm:$0xff] %v1720
        %1772 = vst [vmem:[%s1757 + $0x70] sm:$0xff] %v1721
        %1773 = vst [vmem:[%s1757 + $0x78] sm:$0xff] %v1722
        %1774 = vst [vmem:[%s1757 + $0x80] sm:$0xff] %v1723
        %1775 = vst [vmem:[%s1757 + $0x88] sm:$0xff] %v1724
        %1776 = vst [vmem:[%s1757 + $0x90] sm:$0xff] %v1725
        %1777 = vst [vmem:[%s1757 + $0x98] sm:$0xff] %v1726
        %1778 = vst [vmem:[%s1757 + $0xa0] sm:$0xff] %v1727
        %1779 = vst [vmem:[%s1757 + $0xa8] sm:$0xff] %v1728
        %1780 = vst [vmem:[%s1757 + $0xb0] sm:$0xff] %v1729
        %1781 = vst [vmem:[%s1757 + $0xb8] sm:$0xff] %v1730
        %1782 = vst [vmem:[%s1757 + $0xc0] sm:$0xff] %v1731
        %1783 = vst [vmem:[%s1757 + $0xc8] sm:$0xff] %v1732
        %1784 = vst [vmem:[%s1757 + $0xd0] sm:$0xff] %v1733
        %1785 = vst [vmem:[%s1757 + $0xd8] sm:$0xff] %v1734
        %1786 = vst [vmem:[%s1757 + $0xe0] sm:$0xff] %v1735
        %1787 = vst [vmem:[%s1757 + $0xe8] sm:$0xff] %v1736
        %1788 = vst [vmem:[%s1757 + $0xf0] sm:$0xff] %v1737
        %1789 = vst [vmem:[%s1757 + $0xf8] sm:$0xff] %v1738
        %1790 = vst [vmem:[%s1757 + $0x100] sm:$0xff] %v1739
        %1791 = vst [vmem:[%s1757 + $0x108] sm:$0xff] %v1740
        %1792 = vst [vmem:[%s1757 + $0x110] sm:$0xff] %v1741
        %1793 = vst [vmem:[%s1757 + $0x118] sm:$0xff] %v1742
        %1794 = vst [vmem:[%s1757 + $0x120] sm:$0xff] %v1743
        %1795 = vst [vmem:[%s1757 + $0x128] sm:$0xff] %v1744
        %1796 = vst [vmem:[%s1757 + $0x130] sm:$0xff] %v1745
        %1797 = vst [vmem:[%s1757 + $0x138] sm:$0xff] %v1746
        %1798 = vst [vmem:[%s1757 + $0x140] sm:$0xff] %v1747
        %1799 = vst [vmem:[%s1757 + $0x148] sm:$0xff] %v1748
        %1800 = vst [vmem:[%s1757 + $0x150] sm:$0xff] %v1749
        %1801 = vst [vmem:[%s1757 + $0x158] sm:$0xff] %v1750
        %1802 = vst [vmem:[%s1757 + $0x160] sm:$0xff] %v1751
        %1803 = vst [vmem:[%s1757 + $0x168] sm:$0xff] %v1752
        %1804 = vst [vmem:[%s1757 + $0x170] sm:$0xff] %v1753
        %1805 = vst [vmem:[%s1757 + $0x178] sm:$0xff] %v1754
        // Predicated region
        $region79: #{cheb_graph_conv.1} parent=77 // pred_check
          %p1806 = pneg %p148
        $region80: #{cheb_graph_conv.1} parent=77 // pred_check_branch
          %1808 = sbr.rel (%p1806) target = $region82
        $region81: #{cheb_graph_conv.1} parent=77 // pred_region
          %v1809 = vld [vmem:[%s3] sm:$0x1]
          %s1810 = scalar_lea.vmem [#allocation2], %s146
          %v1811 = vld [vmem:[%s1810] sm:$0xff]
          %v1812 = vld [vmem:[%s1810 + $0x8] sm:$0xff]
          %v1813 = vld [vmem:[%s1810 + $0x10] sm:$0xff]
          %v1814 = vld [vmem:[%s1810 + $0x18] sm:$0xff]
          %v1815 = vld [vmem:[%s1810 + $0x20] sm:$0xff]
          %v1816 = vld [vmem:[%s1810 + $0x28] sm:$0xff]
          %v1817 = vld [vmem:[%s1810 + $0x30] sm:$0xff]
          %v1818 = vld [vmem:[%s1810 + $0x38] sm:$0xff]
          %v1819 = vld [vmem:[%s1810 + $0x40] sm:$0xff]
          %v1820 = vld [vmem:[%s1810 + $0x48] sm:$0xff]
          %v1821 = vld [vmem:[%s1810 + $0x50] sm:$0xff]
          %v1822 = vld [vmem:[%s1810 + $0x58] sm:$0xff]
          %v1823 = vld [vmem:[%s1810 + $0x60] sm:$0xff]
          %v1824 = vld [vmem:[%s1810 + $0x68] sm:$0xff]
          %v1825 = vld [vmem:[%s1810 + $0x70] sm:$0xff]
          %v1826 = vld [vmem:[%s1810 + $0x78] sm:$0xff]
          %v1827 = vld [vmem:[%s1810 + $0x80] sm:$0xff]
          %v1828 = vld [vmem:[%s1810 + $0x88] sm:$0xff]
          %v1829 = vld [vmem:[%s1810 + $0x90] sm:$0xff]
          %v1830 = vld [vmem:[%s1810 + $0x98] sm:$0xff]
          %v1831 = vld [vmem:[%s1810 + $0xa0] sm:$0xff]
          %v1832 = vld [vmem:[%s1810 + $0xa8] sm:$0xff]
          %v1833 = vld [vmem:[%s1810 + $0xb0] sm:$0xff]
          %v1834 = vld [vmem:[%s1810 + $0xb8] sm:$0xff]
          %v1835 = vld [vmem:[%s1810 + $0xc0] sm:$0xff]
          %v1836 = vld [vmem:[%s1810 + $0xc8] sm:$0xff]
          %v1837 = vld [vmem:[%s1810 + $0xd0] sm:$0xff]
          %v1838 = vld [vmem:[%s1810 + $0xd8] sm:$0xff]
          %v1839 = vld [vmem:[%s1810 + $0xe0] sm:$0xff]
          %v1840 = vld [vmem:[%s1810 + $0xe8] sm:$0xff]
          %v1841 = vld [vmem:[%s1810 + $0xf0] sm:$0xff]
          %v1842 = vld [vmem:[%s1810 + $0xf8] sm:$0xff]
          %v1843 = vld [vmem:[%s1810 + $0x100] sm:$0xff]
          %v1844 = vld [vmem:[%s1810 + $0x108] sm:$0xff]
          %v1845 = vld [vmem:[%s1810 + $0x110] sm:$0xff]
          %v1846 = vld [vmem:[%s1810 + $0x118] sm:$0xff]
          %v1847 = vld [vmem:[%s1810 + $0x120] sm:$0xff]
          %v1848 = vld [vmem:[%s1810 + $0x128] sm:$0xff]
          %v1849 = vld [vmem:[%s1810 + $0x130] sm:$0xff]
          %v1850 = vld [vmem:[%s1810 + $0x138] sm:$0xff]
          %v1851 = vld [vmem:[%s1810 + $0x140] sm:$0xff]
          %v1852 = vld [vmem:[%s1810 + $0x148] sm:$0xff]
          %v1853 = vld [vmem:[%s1810 + $0x150] sm:$0xff]
          %v1854 = vld [vmem:[%s1810 + $0x158] sm:$0xff]
          %v1855 = vld [vmem:[%s1810 + $0x160] sm:$0xff]
          %v1856 = vld [vmem:[%s1810 + $0x168] sm:$0xff]
          %v1857 = vld [vmem:[%s1810 + $0x170] sm:$0xff]
          %v1858 = vld [vmem:[%s1810 + $0x178] sm:$0xff]
          %v1859 = vld [vmem:[%s2] sm:$0xff]
          %v1860 = vld [vmem:[%s2 + $0x8] sm:$0xff]
          %v1861 = vld [vmem:[%s2 + $0x10] sm:$0xff]
          %v1862 = vld [vmem:[%s2 + $0x18] sm:$0xff]
          %v1863 = vld [vmem:[%s2 + $0x20] sm:$0xff]
          %v1864 = vld [vmem:[%s2 + $0x28] sm:$0xff]
          %v1865 = vld [vmem:[%s2 + $0x30] sm:$0xff]
          %v1866 = vld [vmem:[%s2 + $0x38] sm:$0xff]
          %v1867 = vld [vmem:[%s2 + $0x40] sm:$0xff]
          %v1868 = vld [vmem:[%s2 + $0x48] sm:$0xff]
          %v1869 = vld [vmem:[%s2 + $0x50] sm:$0xff]
          %v1870 = vld [vmem:[%s2 + $0x58] sm:$0xff]
          %v1871 = vld [vmem:[%s2 + $0x60] sm:$0xff]
          %v1872 = vld [vmem:[%s2 + $0x68] sm:$0xff]
          %v1873 = vld [vmem:[%s2 + $0x70] sm:$0xff]
          %v1874 = vld [vmem:[%s2 + $0x78] sm:$0xff]
          %1875 = vmatpush.msra.mxu0 %v1874
          %1876 = vmatpush.msra.mxu0 %v1873
          %1877 = vmatpush.msra.mxu0 %v1872
          %1878 = vmatpush.msra.mxu0 %v1871
          %1879 = vmatpush.msra.mxu0 %v1870
          %1880 = vmatpush.msra.mxu0 %v1869
          %1881 = vmatpush.msra.mxu0 %v1868
          %1882 = vmatpush.msra.mxu0 %v1867
          %1883 = vmatpush.msra.mxu0 %v1866
          %1884 = vmatpush.msra.mxu0 %v1865
          %1885 = vmatpush.msra.mxu0 %v1864
          %1886 = vmatpush.msra.mxu0 %v1863
          %1887 = vmatpush.msra.mxu0 %v1862
          %1888 = vmatpush.msra.mxu0 %v1861
          %1889 = vmatpush.msra.mxu0 %v1860
          %1890 = vmatpush.msra.mxu0 %v1859
          %1891 = vmatmul.f32.gmra.mxu0 %v1811
          %v1892 = vpop.f32.mrf.mxu0
          %v1893 = vadd.f32 0.0, %v1892
          %1894 = vmatmul.f32.gmra.mxu0 %v1812
          %v1895 = vpop.f32.mrf.mxu0
          %v1896 = vadd.f32 0.0, %v1895
          %1897 = vmatmul.f32.gmra.mxu0 %v1813
          %v1898 = vpop.f32.mrf.mxu0
          %v1899 = vadd.f32 0.0, %v1898
          %1900 = vmatmul.f32.gmra.mxu0 %v1814
          %v1901 = vpop.f32.mrf.mxu0
          %v1902 = vadd.f32 0.0, %v1901
          %1903 = vmatmul.f32.gmra.mxu0 %v1815
          %v1904 = vpop.f32.mrf.mxu0
          %v1905 = vadd.f32 0.0, %v1904
          %1906 = vmatmul.f32.gmra.mxu0 %v1816
          %v1907 = vpop.f32.mrf.mxu0
          %v1908 = vadd.f32 0.0, %v1907
          %1909 = vmatmul.f32.gmra.mxu0 %v1817
          %v1910 = vpop.f32.mrf.mxu0
          %v1911 = vadd.f32 0.0, %v1910
          %1912 = vmatmul.f32.gmra.mxu0 %v1818
          %v1913 = vpop.f32.mrf.mxu0
          %v1914 = vadd.f32 0.0, %v1913
          %1915 = vmatmul.f32.gmra.mxu0 %v1819
          %v1916 = vpop.f32.mrf.mxu0
          %v1917 = vadd.f32 0.0, %v1916
          %1918 = vmatmul.f32.gmra.mxu0 %v1820
          %v1919 = vpop.f32.mrf.mxu0
          %v1920 = vadd.f32 0.0, %v1919
          %1921 = vmatmul.f32.gmra.mxu0 %v1821
          %v1922 = vpop.f32.mrf.mxu0
          %v1923 = vadd.f32 0.0, %v1922
          %1924 = vmatmul.f32.gmra.mxu0 %v1822
          %v1925 = vpop.f32.mrf.mxu0
          %v1926 = vadd.f32 0.0, %v1925
          %1927 = vmatmul.f32.gmra.mxu0 %v1823
          %v1928 = vpop.f32.mrf.mxu0
          %v1929 = vadd.f32 0.0, %v1928
          %1930 = vmatmul.f32.gmra.mxu0 %v1824
          %v1931 = vpop.f32.mrf.mxu0
          %v1932 = vadd.f32 0.0, %v1931
          %1933 = vmatmul.f32.gmra.mxu0 %v1825
          %v1934 = vpop.f32.mrf.mxu0
          %v1935 = vadd.f32 0.0, %v1934
          %1936 = vmatmul.f32.gmra.mxu0 %v1826
          %v1937 = vpop.f32.mrf.mxu0
          %v1938 = vadd.f32 0.0, %v1937
          %1939 = vmatmul.f32.gmra.mxu0 %v1827
          %v1940 = vpop.f32.mrf.mxu0
          %v1941 = vadd.f32 0.0, %v1940
          %1942 = vmatmul.f32.gmra.mxu0 %v1828
          %v1943 = vpop.f32.mrf.mxu0
          %v1944 = vadd.f32 0.0, %v1943
          %1945 = vmatmul.f32.gmra.mxu0 %v1829
          %v1946 = vpop.f32.mrf.mxu0
          %v1947 = vadd.f32 0.0, %v1946
          %1948 = vmatmul.f32.gmra.mxu0 %v1830
          %v1949 = vpop.f32.mrf.mxu0
          %v1950 = vadd.f32 0.0, %v1949
          %1951 = vmatmul.f32.gmra.mxu0 %v1831
          %v1952 = vpop.f32.mrf.mxu0
          %v1953 = vadd.f32 0.0, %v1952
          %1954 = vmatmul.f32.gmra.mxu0 %v1832
          %v1955 = vpop.f32.mrf.mxu0
          %v1956 = vadd.f32 0.0, %v1955
          %1957 = vmatmul.f32.gmra.mxu0 %v1833
          %v1958 = vpop.f32.mrf.mxu0
          %v1959 = vadd.f32 0.0, %v1958
          %1960 = vmatmul.f32.gmra.mxu0 %v1834
          %v1961 = vpop.f32.mrf.mxu0
          %v1962 = vadd.f32 0.0, %v1961
          %1963 = vmatmul.f32.gmra.mxu0 %v1835
          %v1964 = vpop.f32.mrf.mxu0
          %v1965 = vadd.f32 0.0, %v1964
          %1966 = vmatmul.f32.gmra.mxu0 %v1836
          %v1967 = vpop.f32.mrf.mxu0
          %v1968 = vadd.f32 0.0, %v1967
          %1969 = vmatmul.f32.gmra.mxu0 %v1837
          %v1970 = vpop.f32.mrf.mxu0
          %v1971 = vadd.f32 0.0, %v1970
          %1972 = vmatmul.f32.gmra.mxu0 %v1838
          %v1973 = vpop.f32.mrf.mxu0
          %v1974 = vadd.f32 0.0, %v1973
          %1975 = vmatmul.f32.gmra.mxu0 %v1839
          %v1976 = vpop.f32.mrf.mxu0
          %v1977 = vadd.f32 0.0, %v1976
          %1978 = vmatmul.f32.gmra.mxu0 %v1840
          %v1979 = vpop.f32.mrf.mxu0
          %v1980 = vadd.f32 0.0, %v1979
          %1981 = vmatmul.f32.gmra.mxu0 %v1841
          %v1982 = vpop.f32.mrf.mxu0
          %v1983 = vadd.f32 0.0, %v1982
          %1984 = vmatmul.f32.gmra.mxu0 %v1842
          %v1985 = vpop.f32.mrf.mxu0
          %v1986 = vadd.f32 0.0, %v1985
          %1987 = vmatmul.f32.gmra.mxu0 %v1843
          %v1988 = vpop.f32.mrf.mxu0
          %v1989 = vadd.f32 0.0, %v1988
          %1990 = vmatmul.f32.gmra.mxu0 %v1844
          %v1991 = vpop.f32.mrf.mxu0
          %v1992 = vadd.f32 0.0, %v1991
          %1993 = vmatmul.f32.gmra.mxu0 %v1845
          %v1994 = vpop.f32.mrf.mxu0
          %v1995 = vadd.f32 0.0, %v1994
          %1996 = vmatmul.f32.gmra.mxu0 %v1846
          %v1997 = vpop.f32.mrf.mxu0
          %v1998 = vadd.f32 0.0, %v1997
          %1999 = vmatmul.f32.gmra.mxu0 %v1847
          %v2000 = vpop.f32.mrf.mxu0
          %v2001 = vadd.f32 0.0, %v2000
          %2002 = vmatmul.f32.gmra.mxu0 %v1848
          %v2003 = vpop.f32.mrf.mxu0
          %v2004 = vadd.f32 0.0, %v2003
          %2005 = vmatmul.f32.gmra.mxu0 %v1849
          %v2006 = vpop.f32.mrf.mxu0
          %v2007 = vadd.f32 0.0, %v2006
          %2008 = vmatmul.f32.gmra.mxu0 %v1850
          %v2009 = vpop.f32.mrf.mxu0
          %v2010 = vadd.f32 0.0, %v2009
          %2011 = vmatmul.f32.gmra.mxu0 %v1851
          %v2012 = vpop.f32.mrf.mxu0
          %v2013 = vadd.f32 0.0, %v2012
          %2014 = vmatmul.f32.gmra.mxu0 %v1852
          %v2015 = vpop.f32.mrf.mxu0
          %v2016 = vadd.f32 0.0, %v2015
          %2017 = vmatmul.f32.gmra.mxu0 %v1853
          %v2018 = vpop.f32.mrf.mxu0
          %v2019 = vadd.f32 0.0, %v2018
          %2020 = vmatmul.f32.gmra.mxu0 %v1854
          %v2021 = vpop.f32.mrf.mxu0
          %v2022 = vadd.f32 0.0, %v2021
          %2023 = vmatmul.f32.gmra.mxu0 %v1855
          %v2024 = vpop.f32.mrf.mxu0
          %v2025 = vadd.f32 0.0, %v2024
          %2026 = vmatmul.f32.gmra.mxu0 %v1856
          %v2027 = vpop.f32.mrf.mxu0
          %v2028 = vadd.f32 0.0, %v2027
          %2029 = vmatmul.f32.gmra.mxu0 %v1857
          %v2030 = vpop.f32.mrf.mxu0
          %v2031 = vadd.f32 0.0, %v2030
          %2032 = vmatmul.f32.gmra.mxu0 %v1858
          %v2033 = vpop.f32.mrf.mxu0
          %v2034 = vadd.f32 0.0, %v2033
          %2035 = vdwg.mxu0
          %v2037 = vperm.slane %v1809, 0
          %v2039 = vadd.f32 %v2037, %v1893
          %v2040 = vadd.f32 %v2037, %v1896
          %v2041 = vadd.f32 %v2037, %v1899
          %v2042 = vadd.f32 %v2037, %v1902
          %v2043 = vadd.f32 %v2037, %v1905
          %v2044 = vadd.f32 %v2037, %v1908
          %v2045 = vadd.f32 %v2037, %v1911
          %v2046 = vadd.f32 %v2037, %v1914
          %v2047 = vadd.f32 %v2037, %v1917
          %v2048 = vadd.f32 %v2037, %v1920
          %v2049 = vadd.f32 %v2037, %v1923
          %v2050 = vadd.f32 %v2037, %v1926
          %v2051 = vadd.f32 %v2037, %v1929
          %v2052 = vadd.f32 %v2037, %v1932
          %v2053 = vadd.f32 %v2037, %v1935
          %v2054 = vadd.f32 %v2037, %v1938
          %v2055 = vadd.f32 %v2037, %v1941
          %v2056 = vadd.f32 %v2037, %v1944
          %v2057 = vadd.f32 %v2037, %v1947
          %v2058 = vadd.f32 %v2037, %v1950
          %v2059 = vadd.f32 %v2037, %v1953
          %v2060 = vadd.f32 %v2037, %v1956
          %v2061 = vadd.f32 %v2037, %v1959
          %v2062 = vadd.f32 %v2037, %v1962
          %v2063 = vadd.f32 %v2037, %v1965
          %v2064 = vadd.f32 %v2037, %v1968
          %v2065 = vadd.f32 %v2037, %v1971
          %v2066 = vadd.f32 %v2037, %v1974
          %v2067 = vadd.f32 %v2037, %v1977
          %v2068 = vadd.f32 %v2037, %v1980
          %v2069 = vadd.f32 %v2037, %v1983
          %v2070 = vadd.f32 %v2037, %v1986
          %v2071 = vadd.f32 %v2037, %v1989
          %v2072 = vadd.f32 %v2037, %v1992
          %v2073 = vadd.f32 %v2037, %v1995
          %v2074 = vadd.f32 %v2037, %v1998
          %v2075 = vadd.f32 %v2037, %v2001
          %v2076 = vadd.f32 %v2037, %v2004
          %v2077 = vadd.f32 %v2037, %v2007
          %v2078 = vadd.f32 %v2037, %v2010
          %v2079 = vadd.f32 %v2037, %v2013
          %v2080 = vadd.f32 %v2037, %v2016
          %v2081 = vadd.f32 %v2037, %v2019
          %v2082 = vadd.f32 %v2037, %v2022
          %v2083 = vadd.f32 %v2037, %v2025
          %v2084 = vadd.f32 %v2037, %v2028
          %v2085 = vadd.f32 %v2037, %v2031
          %v2086 = vadd.f32 %v2037, %v2034
          %s2087 = scalar_lea.vmem %s2, 128
          %v2088 = vld [vmem:[%s2087] sm:$0xff]
          %v2089 = vld [vmem:[%s2087 + $0x8] sm:$0xff]
          %v2090 = vld [vmem:[%s2087 + $0x10] sm:$0xff]
          %v2091 = vld [vmem:[%s2087 + $0x18] sm:$0xff]
          %v2092 = vld [vmem:[%s2087 + $0x20] sm:$0xff]
          %v2093 = vld [vmem:[%s2087 + $0x28] sm:$0xff]
          %v2094 = vld [vmem:[%s2087 + $0x30] sm:$0xff]
          %v2095 = vld [vmem:[%s2087 + $0x38] sm:$0xff]
          %v2096 = vld [vmem:[%s2087 + $0x40] sm:$0xff]
          %v2097 = vld [vmem:[%s2087 + $0x48] sm:$0xff]
          %v2098 = vld [vmem:[%s2087 + $0x50] sm:$0xff]
          %v2099 = vld [vmem:[%s2087 + $0x58] sm:$0xff]
          %v2100 = vld [vmem:[%s2087 + $0x60] sm:$0xff]
          %v2101 = vld [vmem:[%s2087 + $0x68] sm:$0xff]
          %v2102 = vld [vmem:[%s2087 + $0x70] sm:$0xff]
          %v2103 = vld [vmem:[%s2087 + $0x78] sm:$0xff]
          %2104 = vmatpush.msra.mxu0 %v2103
          %2105 = vmatpush.msra.mxu0 %v2102
          %2106 = vmatpush.msra.mxu0 %v2101
          %2107 = vmatpush.msra.mxu0 %v2100
          %2108 = vmatpush.msra.mxu0 %v2099
          %2109 = vmatpush.msra.mxu0 %v2098
          %2110 = vmatpush.msra.mxu0 %v2097
          %2111 = vmatpush.msra.mxu0 %v2096
          %2112 = vmatpush.msra.mxu0 %v2095
          %2113 = vmatpush.msra.mxu0 %v2094
          %2114 = vmatpush.msra.mxu0 %v2093
          %2115 = vmatpush.msra.mxu0 %v2092
          %2116 = vmatpush.msra.mxu0 %v2091
          %2117 = vmatpush.msra.mxu0 %v2090
          %2118 = vmatpush.msra.mxu0 %v2089
          %2119 = vmatpush.msra.mxu0 %v2088
          %2120 = vmatmul.f32.gmra.mxu0 %v1707
          %v2121 = vpop.f32.mrf.mxu0
          %v2122 = vadd.f32 0.0, %v2121
          %2123 = vmatmul.f32.gmra.mxu0 %v1708
          %v2124 = vpop.f32.mrf.mxu0
          %v2125 = vadd.f32 0.0, %v2124
          %2126 = vmatmul.f32.gmra.mxu0 %v1709
          %v2127 = vpop.f32.mrf.mxu0
          %v2128 = vadd.f32 0.0, %v2127
          %2129 = vmatmul.f32.gmra.mxu0 %v1710
          %v2130 = vpop.f32.mrf.mxu0
          %v2131 = vadd.f32 0.0, %v2130
          %2132 = vmatmul.f32.gmra.mxu0 %v1711
          %v2133 = vpop.f32.mrf.mxu0
          %v2134 = vadd.f32 0.0, %v2133
          %2135 = vmatmul.f32.gmra.mxu0 %v1712
          %v2136 = vpop.f32.mrf.mxu0
          %v2137 = vadd.f32 0.0, %v2136
          %2138 = vmatmul.f32.gmra.mxu0 %v1713
          %v2139 = vpop.f32.mrf.mxu0
          %v2140 = vadd.f32 0.0, %v2139
          %2141 = vmatmul.f32.gmra.mxu0 %v1714
          %v2142 = vpop.f32.mrf.mxu0
          %v2143 = vadd.f32 0.0, %v2142
          %2144 = vmatmul.f32.gmra.mxu0 %v1715
          %v2145 = vpop.f32.mrf.mxu0
          %v2146 = vadd.f32 0.0, %v2145
          %2147 = vmatmul.f32.gmra.mxu0 %v1716
          %v2148 = vpop.f32.mrf.mxu0
          %v2149 = vadd.f32 0.0, %v2148
          %2150 = vmatmul.f32.gmra.mxu0 %v1717
          %v2151 = vpop.f32.mrf.mxu0
          %v2152 = vadd.f32 0.0, %v2151
          %2153 = vmatmul.f32.gmra.mxu0 %v1718
          %v2154 = vpop.f32.mrf.mxu0
          %v2155 = vadd.f32 0.0, %v2154
          %2156 = vmatmul.f32.gmra.mxu0 %v1719
          %v2157 = vpop.f32.mrf.mxu0
          %v2158 = vadd.f32 0.0, %v2157
          %2159 = vmatmul.f32.gmra.mxu0 %v1720
          %v2160 = vpop.f32.mrf.mxu0
          %v2161 = vadd.f32 0.0, %v2160
          %2162 = vmatmul.f32.gmra.mxu0 %v1721
          %v2163 = vpop.f32.mrf.mxu0
          %v2164 = vadd.f32 0.0, %v2163
          %2165 = vmatmul.f32.gmra.mxu0 %v1722
          %v2166 = vpop.f32.mrf.mxu0
          %v2167 = vadd.f32 0.0, %v2166
          %2168 = vmatmul.f32.gmra.mxu0 %v1723
          %v2169 = vpop.f32.mrf.mxu0
          %v2170 = vadd.f32 0.0, %v2169
          %2171 = vmatmul.f32.gmra.mxu0 %v1724
          %v2172 = vpop.f32.mrf.mxu0
          %v2173 = vadd.f32 0.0, %v2172
          %2174 = vmatmul.f32.gmra.mxu0 %v1725
          %v2175 = vpop.f32.mrf.mxu0
          %v2176 = vadd.f32 0.0, %v2175
          %2177 = vmatmul.f32.gmra.mxu0 %v1726
          %v2178 = vpop.f32.mrf.mxu0
          %v2179 = vadd.f32 0.0, %v2178
          %2180 = vmatmul.f32.gmra.mxu0 %v1727
          %v2181 = vpop.f32.mrf.mxu0
          %v2182 = vadd.f32 0.0, %v2181
          %2183 = vmatmul.f32.gmra.mxu0 %v1728
          %v2184 = vpop.f32.mrf.mxu0
          %v2185 = vadd.f32 0.0, %v2184
          %2186 = vmatmul.f32.gmra.mxu0 %v1729
          %v2187 = vpop.f32.mrf.mxu0
          %v2188 = vadd.f32 0.0, %v2187
          %2189 = vmatmul.f32.gmra.mxu0 %v1730
          %v2190 = vpop.f32.mrf.mxu0
          %v2191 = vadd.f32 0.0, %v2190
          %2192 = vmatmul.f32.gmra.mxu0 %v1731
          %v2193 = vpop.f32.mrf.mxu0
          %v2194 = vadd.f32 0.0, %v2193
          %2195 = vmatmul.f32.gmra.mxu0 %v1732
          %v2196 = vpop.f32.mrf.mxu0
          %v2197 = vadd.f32 0.0, %v2196
          %2198 = vmatmul.f32.gmra.mxu0 %v1733
          %v2199 = vpop.f32.mrf.mxu0
          %v2200 = vadd.f32 0.0, %v2199
          %2201 = vmatmul.f32.gmra.mxu0 %v1734
          %v2202 = vpop.f32.mrf.mxu0
          %v2203 = vadd.f32 0.0, %v2202
          %2204 = vmatmul.f32.gmra.mxu0 %v1735
          %v2205 = vpop.f32.mrf.mxu0
          %v2206 = vadd.f32 0.0, %v2205
          %2207 = vmatmul.f32.gmra.mxu0 %v1736
          %v2208 = vpop.f32.mrf.mxu0
          %v2209 = vadd.f32 0.0, %v2208
          %2210 = vmatmul.f32.gmra.mxu0 %v1737
          %v2211 = vpop.f32.mrf.mxu0
          %v2212 = vadd.f32 0.0, %v2211
          %2213 = vmatmul.f32.gmra.mxu0 %v1738
          %v2214 = vpop.f32.mrf.mxu0
          %v2215 = vadd.f32 0.0, %v2214
          %2216 = vmatmul.f32.gmra.mxu0 %v1739
          %v2217 = vpop.f32.mrf.mxu0
          %v2218 = vadd.f32 0.0, %v2217
          %2219 = vmatmul.f32.gmra.mxu0 %v1740
          %v2220 = vpop.f32.mrf.mxu0
          %v2221 = vadd.f32 0.0, %v2220
          %2222 = vmatmul.f32.gmra.mxu0 %v1741
          %v2223 = vpop.f32.mrf.mxu0
          %v2224 = vadd.f32 0.0, %v2223
          %2225 = vmatmul.f32.gmra.mxu0 %v1742
          %v2226 = vpop.f32.mrf.mxu0
          %v2227 = vadd.f32 0.0, %v2226
          %2228 = vmatmul.f32.gmra.mxu0 %v1743
          %v2229 = vpop.f32.mrf.mxu0
          %v2230 = vadd.f32 0.0, %v2229
          %2231 = vmatmul.f32.gmra.mxu0 %v1744
          %v2232 = vpop.f32.mrf.mxu0
          %v2233 = vadd.f32 0.0, %v2232
          %2234 = vmatmul.f32.gmra.mxu0 %v1745
          %v2235 = vpop.f32.mrf.mxu0
          %v2236 = vadd.f32 0.0, %v2235
          %2237 = vmatmul.f32.gmra.mxu0 %v1746
          %v2238 = vpop.f32.mrf.mxu0
          %v2239 = vadd.f32 0.0, %v2238
          %2240 = vmatmul.f32.gmra.mxu0 %v1747
          %v2241 = vpop.f32.mrf.mxu0
          %v2242 = vadd.f32 0.0, %v2241
          %2243 = vmatmul.f32.gmra.mxu0 %v1748
          %v2244 = vpop.f32.mrf.mxu0
          %v2245 = vadd.f32 0.0, %v2244
          %2246 = vmatmul.f32.gmra.mxu0 %v1749
          %v2247 = vpop.f32.mrf.mxu0
          %v2248 = vadd.f32 0.0, %v2247
          %2249 = vmatmul.f32.gmra.mxu0 %v1750
          %v2250 = vpop.f32.mrf.mxu0
          %v2251 = vadd.f32 0.0, %v2250
          %2252 = vmatmul.f32.gmra.mxu0 %v1751
          %v2253 = vpop.f32.mrf.mxu0
          %v2254 = vadd.f32 0.0, %v2253
          %2255 = vmatmul.f32.gmra.mxu0 %v1752
          %v2256 = vpop.f32.mrf.mxu0
          %v2257 = vadd.f32 0.0, %v2256
          %2258 = vmatmul.f32.gmra.mxu0 %v1753
          %v2259 = vpop.f32.mrf.mxu0
          %v2260 = vadd.f32 0.0, %v2259
          %2261 = vmatmul.f32.gmra.mxu0 %v1754
          %v2262 = vpop.f32.mrf.mxu0
          %v2263 = vadd.f32 0.0, %v2262
          %2264 = vdwg.mxu0
          %v2265 = vadd.f32 %v2039, %v2122
          %v2266 = vadd.f32 %v2040, %v2125
          %v2267 = vadd.f32 %v2041, %v2128
          %v2268 = vadd.f32 %v2042, %v2131
          %v2269 = vadd.f32 %v2043, %v2134
          %v2270 = vadd.f32 %v2044, %v2137
          %v2271 = vadd.f32 %v2045, %v2140
          %v2272 = vadd.f32 %v2046, %v2143
          %v2273 = vadd.f32 %v2047, %v2146
          %v2274 = vadd.f32 %v2048, %v2149
          %v2275 = vadd.f32 %v2049, %v2152
          %v2276 = vadd.f32 %v2050, %v2155
          %v2277 = vadd.f32 %v2051, %v2158
          %v2278 = vadd.f32 %v2052, %v2161
          %v2279 = vadd.f32 %v2053, %v2164
          %v2280 = vadd.f32 %v2054, %v2167
          %v2281 = vadd.f32 %v2055, %v2170
          %v2282 = vadd.f32 %v2056, %v2173
          %v2283 = vadd.f32 %v2057, %v2176
          %v2284 = vadd.f32 %v2058, %v2179
          %v2285 = vadd.f32 %v2059, %v2182
          %v2286 = vadd.f32 %v2060, %v2185
          %v2287 = vadd.f32 %v2061, %v2188
          %v2288 = vadd.f32 %v2062, %v2191
          %v2289 = vadd.f32 %v2063, %v2194
          %v2290 = vadd.f32 %v2064, %v2197
          %v2291 = vadd.f32 %v2065, %v2200
          %v2292 = vadd.f32 %v2066, %v2203
          %v2293 = vadd.f32 %v2067, %v2206
          %v2294 = vadd.f32 %v2068, %v2209
          %v2295 = vadd.f32 %v2069, %v2212
          %v2296 = vadd.f32 %v2070, %v2215
          %v2297 = vadd.f32 %v2071, %v2218
          %v2298 = vadd.f32 %v2072, %v2221
          %v2299 = vadd.f32 %v2073, %v2224
          %v2300 = vadd.f32 %v2074, %v2227
          %v2301 = vadd.f32 %v2075, %v2230
          %v2302 = vadd.f32 %v2076, %v2233
          %v2303 = vadd.f32 %v2077, %v2236
          %v2304 = vadd.f32 %v2078, %v2239
          %v2305 = vadd.f32 %v2079, %v2242
          %v2306 = vadd.f32 %v2080, %v2245
          %v2307 = vadd.f32 %v2081, %v2248
          %v2308 = vadd.f32 %v2082, %v2251
          %v2309 = vadd.f32 %v2083, %v2254
          %v2310 = vadd.f32 %v2084, %v2257
          %v2311 = vadd.f32 %v2085, %v2260
          %v2312 = vadd.f32 %v2086, %v2263
          %s2313 = scalar_lea.vmem [#allocation3], %s146
          %2314 = vst [vmem:[%s2313] sm:$0xff] %v2265
          %2315 = vst [vmem:[%s2313 + $0x8] sm:$0xff] %v2266
          %2316 = vst [vmem:[%s2313 + $0x10] sm:$0xff] %v2267
          %2317 = vst [vmem:[%s2313 + $0x18] sm:$0xff] %v2268
          %2318 = vst [vmem:[%s2313 + $0x20] sm:$0xff] %v2269
          %2319 = vst [vmem:[%s2313 + $0x28] sm:$0xff] %v2270
          %2320 = vst [vmem:[%s2313 + $0x30] sm:$0xff] %v2271
          %2321 = vst [vmem:[%s2313 + $0x38] sm:$0xff] %v2272
          %2322 = vst [vmem:[%s2313 + $0x40] sm:$0xff] %v2273
          %2323 = vst [vmem:[%s2313 + $0x48] sm:$0xff] %v2274
          %2324 = vst [vmem:[%s2313 + $0x50] sm:$0xff] %v2275
          %2325 = vst [vmem:[%s2313 + $0x58] sm:$0xff] %v2276
          %2326 = vst [vmem:[%s2313 + $0x60] sm:$0xff] %v2277
          %2327 = vst [vmem:[%s2313 + $0x68] sm:$0xff] %v2278
          %2328 = vst [vmem:[%s2313 + $0x70] sm:$0xff] %v2279
          %2329 = vst [vmem:[%s2313 + $0x78] sm:$0xff] %v2280
          %2330 = vst [vmem:[%s2313 + $0x80] sm:$0xff] %v2281
          %2331 = vst [vmem:[%s2313 + $0x88] sm:$0xff] %v2282
          %2332 = vst [vmem:[%s2313 + $0x90] sm:$0xff] %v2283
          %2333 = vst [vmem:[%s2313 + $0x98] sm:$0xff] %v2284
          %2334 = vst [vmem:[%s2313 + $0xa0] sm:$0xff] %v2285
          %2335 = vst [vmem:[%s2313 + $0xa8] sm:$0xff] %v2286
          %2336 = vst [vmem:[%s2313 + $0xb0] sm:$0xff] %v2287
          %2337 = vst [vmem:[%s2313 + $0xb8] sm:$0xff] %v2288
          %2338 = vst [vmem:[%s2313 + $0xc0] sm:$0xff] %v2289
          %2339 = vst [vmem:[%s2313 + $0xc8] sm:$0xff] %v2290
          %2340 = vst [vmem:[%s2313 + $0xd0] sm:$0xff] %v2291
          %2341 = vst [vmem:[%s2313 + $0xd8] sm:$0xff] %v2292
          %2342 = vst [vmem:[%s2313 + $0xe0] sm:$0xff] %v2293
          %2343 = vst [vmem:[%s2313 + $0xe8] sm:$0xff] %v2294
          %2344 = vst [vmem:[%s2313 + $0xf0] sm:$0xff] %v2295
          %2345 = vst [vmem:[%s2313 + $0xf8] sm:$0xff] %v2296
          %2346 = vst [vmem:[%s2313 + $0x100] sm:$0xff] %v2297
          %2347 = vst [vmem:[%s2313 + $0x108] sm:$0xff] %v2298
          %2348 = vst [vmem:[%s2313 + $0x110] sm:$0xff] %v2299
          %2349 = vst [vmem:[%s2313 + $0x118] sm:$0xff] %v2300
          %2350 = vst [vmem:[%s2313 + $0x120] sm:$0xff] %v2301
          %2351 = vst [vmem:[%s2313 + $0x128] sm:$0xff] %v2302
          %2352 = vst [vmem:[%s2313 + $0x130] sm:$0xff] %v2303
          %2353 = vst [vmem:[%s2313 + $0x138] sm:$0xff] %v2304
          %2354 = vst [vmem:[%s2313 + $0x140] sm:$0xff] %v2305
          %2355 = vst [vmem:[%s2313 + $0x148] sm:$0xff] %v2306
          %2356 = vst [vmem:[%s2313 + $0x150] sm:$0xff] %v2307
          %2357 = vst [vmem:[%s2313 + $0x158] sm:$0xff] %v2308
          %2358 = vst [vmem:[%s2313 + $0x160] sm:$0xff] %v2309
          %2359 = vst [vmem:[%s2313 + $0x168] sm:$0xff] %v2310
          %2360 = vst [vmem:[%s2313 + $0x170] sm:$0xff] %v2311
          %2361 = vst [vmem:[%s2313 + $0x178] sm:$0xff] %v2312
        $region82: #{cheb_graph_conv.1} parent=77 // pred_fallthru
          _
        %p2362 = scmp.gt.s32.totalorder %s20, 0
        // Predicated region
        $region83: #{cheb_graph_conv.1} parent=77 // pred_check
          %p2363 = pneg %p2362
        $region84: #{cheb_graph_conv.1} parent=77 // pred_check_branch
          %2365 = sbr.rel (%p2363) target = $region86
        $region85: #{cheb_graph_conv.1} parent=77 // pred_region
          %s2366 = scalar_lea.vmem [#allocation3], %s146
          %v2367 = vld [vmem:[%s2366] sm:$0xff]
          %v2368 = vld [vmem:[%s2366 + $0x8] sm:$0xff]
          %v2369 = vld [vmem:[%s2366 + $0x10] sm:$0xff]
          %v2370 = vld [vmem:[%s2366 + $0x18] sm:$0xff]
          %v2371 = vld [vmem:[%s2366 + $0x20] sm:$0xff]
          %v2372 = vld [vmem:[%s2366 + $0x28] sm:$0xff]
          %v2373 = vld [vmem:[%s2366 + $0x30] sm:$0xff]
          %v2374 = vld [vmem:[%s2366 + $0x38] sm:$0xff]
          %v2375 = vld [vmem:[%s2366 + $0x40] sm:$0xff]
          %v2376 = vld [vmem:[%s2366 + $0x48] sm:$0xff]
          %v2377 = vld [vmem:[%s2366 + $0x50] sm:$0xff]
          %v2378 = vld [vmem:[%s2366 + $0x58] sm:$0xff]
          %v2379 = vld [vmem:[%s2366 + $0x60] sm:$0xff]
          %v2380 = vld [vmem:[%s2366 + $0x68] sm:$0xff]
          %v2381 = vld [vmem:[%s2366 + $0x70] sm:$0xff]
          %v2382 = vld [vmem:[%s2366 + $0x78] sm:$0xff]
          %v2383 = vld [vmem:[%s2366 + $0x80] sm:$0xff]
          %v2384 = vld [vmem:[%s2366 + $0x88] sm:$0xff]
          %v2385 = vld [vmem:[%s2366 + $0x90] sm:$0xff]
          %v2386 = vld [vmem:[%s2366 + $0x98] sm:$0xff]
          %v2387 = vld [vmem:[%s2366 + $0xa0] sm:$0xff]
          %v2388 = vld [vmem:[%s2366 + $0xa8] sm:$0xff]
          %v2389 = vld [vmem:[%s2366 + $0xb0] sm:$0xff]
          %v2390 = vld [vmem:[%s2366 + $0xb8] sm:$0xff]
          %v2391 = vld [vmem:[%s2366 + $0xc0] sm:$0xff]
          %v2392 = vld [vmem:[%s2366 + $0xc8] sm:$0xff]
          %v2393 = vld [vmem:[%s2366 + $0xd0] sm:$0xff]
          %v2394 = vld [vmem:[%s2366 + $0xd8] sm:$0xff]
          %v2395 = vld [vmem:[%s2366 + $0xe0] sm:$0xff]
          %v2396 = vld [vmem:[%s2366 + $0xe8] sm:$0xff]
          %v2397 = vld [vmem:[%s2366 + $0xf0] sm:$0xff]
          %v2398 = vld [vmem:[%s2366 + $0xf8] sm:$0xff]
          %v2399 = vld [vmem:[%s2366 + $0x100] sm:$0xff]
          %v2400 = vld [vmem:[%s2366 + $0x108] sm:$0xff]
          %v2401 = vld [vmem:[%s2366 + $0x110] sm:$0xff]
          %v2402 = vld [vmem:[%s2366 + $0x118] sm:$0xff]
          %v2403 = vld [vmem:[%s2366 + $0x120] sm:$0xff]
          %v2404 = vld [vmem:[%s2366 + $0x128] sm:$0xff]
          %v2405 = vld [vmem:[%s2366 + $0x130] sm:$0xff]
          %v2406 = vld [vmem:[%s2366 + $0x138] sm:$0xff]
          %v2407 = vld [vmem:[%s2366 + $0x140] sm:$0xff]
          %v2408 = vld [vmem:[%s2366 + $0x148] sm:$0xff]
          %v2409 = vld [vmem:[%s2366 + $0x150] sm:$0xff]
          %v2410 = vld [vmem:[%s2366 + $0x158] sm:$0xff]
          %v2411 = vld [vmem:[%s2366 + $0x160] sm:$0xff]
          %v2412 = vld [vmem:[%s2366 + $0x168] sm:$0xff]
          %v2413 = vld [vmem:[%s2366 + $0x170] sm:$0xff]
          %v2414 = vld [vmem:[%s2366 + $0x178] sm:$0xff]
          %s2415 = smul.u32 %s1478, 128
          %s2416 = scalar_lea.vmem %s2, %s2415
          %v2417 = vld [vmem:[%s2416] sm:$0xff]
          %v2418 = vld [vmem:[%s2416 + $0x8] sm:$0xff]
          %v2419 = vld [vmem:[%s2416 + $0x10] sm:$0xff]
          %v2420 = vld [vmem:[%s2416 + $0x18] sm:$0xff]
          %v2421 = vld [vmem:[%s2416 + $0x20] sm:$0xff]
          %v2422 = vld [vmem:[%s2416 + $0x28] sm:$0xff]
          %v2423 = vld [vmem:[%s2416 + $0x30] sm:$0xff]
          %v2424 = vld [vmem:[%s2416 + $0x38] sm:$0xff]
          %v2425 = vld [vmem:[%s2416 + $0x40] sm:$0xff]
          %v2426 = vld [vmem:[%s2416 + $0x48] sm:$0xff]
          %v2427 = vld [vmem:[%s2416 + $0x50] sm:$0xff]
          %v2428 = vld [vmem:[%s2416 + $0x58] sm:$0xff]
          %v2429 = vld [vmem:[%s2416 + $0x60] sm:$0xff]
          %v2430 = vld [vmem:[%s2416 + $0x68] sm:$0xff]
          %v2431 = vld [vmem:[%s2416 + $0x70] sm:$0xff]
          %v2432 = vld [vmem:[%s2416 + $0x78] sm:$0xff]
          %2433 = vmatpush.msra.mxu0 %v2432
          %2434 = vmatpush.msra.mxu0 %v2431
          %2435 = vmatpush.msra.mxu0 %v2430
          %2436 = vmatpush.msra.mxu0 %v2429
          %2437 = vmatpush.msra.mxu0 %v2428
          %2438 = vmatpush.msra.mxu0 %v2427
          %2439 = vmatpush.msra.mxu0 %v2426
          %2440 = vmatpush.msra.mxu0 %v2425
          %2441 = vmatpush.msra.mxu0 %v2424
          %2442 = vmatpush.msra.mxu0 %v2423
          %2443 = vmatpush.msra.mxu0 %v2422
          %2444 = vmatpush.msra.mxu0 %v2421
          %2445 = vmatpush.msra.mxu0 %v2420
          %2446 = vmatpush.msra.mxu0 %v2419
          %2447 = vmatpush.msra.mxu0 %v2418
          %2448 = vmatpush.msra.mxu0 %v2417
          %2449 = vmatmul.f32.gmra.mxu0 %v1707
          %v2450 = vpop.f32.mrf.mxu0
          %v2451 = vadd.f32 0.0, %v2450
          %2452 = vmatmul.f32.gmra.mxu0 %v1708
          %v2453 = vpop.f32.mrf.mxu0
          %v2454 = vadd.f32 0.0, %v2453
          %2455 = vmatmul.f32.gmra.mxu0 %v1709
          %v2456 = vpop.f32.mrf.mxu0
          %v2457 = vadd.f32 0.0, %v2456
          %2458 = vmatmul.f32.gmra.mxu0 %v1710
          %v2459 = vpop.f32.mrf.mxu0
          %v2460 = vadd.f32 0.0, %v2459
          %2461 = vmatmul.f32.gmra.mxu0 %v1711
          %v2462 = vpop.f32.mrf.mxu0
          %v2463 = vadd.f32 0.0, %v2462
          %2464 = vmatmul.f32.gmra.mxu0 %v1712
          %v2465 = vpop.f32.mrf.mxu0
          %v2466 = vadd.f32 0.0, %v2465
          %2467 = vmatmul.f32.gmra.mxu0 %v1713
          %v2468 = vpop.f32.mrf.mxu0
          %v2469 = vadd.f32 0.0, %v2468
          %2470 = vmatmul.f32.gmra.mxu0 %v1714
          %v2471 = vpop.f32.mrf.mxu0
          %v2472 = vadd.f32 0.0, %v2471
          %2473 = vmatmul.f32.gmra.mxu0 %v1715
          %v2474 = vpop.f32.mrf.mxu0
          %v2475 = vadd.f32 0.0, %v2474
          %2476 = vmatmul.f32.gmra.mxu0 %v1716
          %v2477 = vpop.f32.mrf.mxu0
          %v2478 = vadd.f32 0.0, %v2477
          %2479 = vmatmul.f32.gmra.mxu0 %v1717
          %v2480 = vpop.f32.mrf.mxu0
          %v2481 = vadd.f32 0.0, %v2480
          %2482 = vmatmul.f32.gmra.mxu0 %v1718
          %v2483 = vpop.f32.mrf.mxu0
          %v2484 = vadd.f32 0.0, %v2483
          %2485 = vmatmul.f32.gmra.mxu0 %v1719
          %v2486 = vpop.f32.mrf.mxu0
          %v2487 = vadd.f32 0.0, %v2486
          %2488 = vmatmul.f32.gmra.mxu0 %v1720
          %v2489 = vpop.f32.mrf.mxu0
          %v2490 = vadd.f32 0.0, %v2489
          %2491 = vmatmul.f32.gmra.mxu0 %v1721
          %v2492 = vpop.f32.mrf.mxu0
          %v2493 = vadd.f32 0.0, %v2492
          %2494 = vmatmul.f32.gmra.mxu0 %v1722
          %v2495 = vpop.f32.mrf.mxu0
          %v2496 = vadd.f32 0.0, %v2495
          %2497 = vmatmul.f32.gmra.mxu0 %v1723
          %v2498 = vpop.f32.mrf.mxu0
          %v2499 = vadd.f32 0.0, %v2498
          %2500 = vmatmul.f32.gmra.mxu0 %v1724
          %v2501 = vpop.f32.mrf.mxu0
          %v2502 = vadd.f32 0.0, %v2501
          %2503 = vmatmul.f32.gmra.mxu0 %v1725
          %v2504 = vpop.f32.mrf.mxu0
          %v2505 = vadd.f32 0.0, %v2504
          %2506 = vmatmul.f32.gmra.mxu0 %v1726
          %v2507 = vpop.f32.mrf.mxu0
          %v2508 = vadd.f32 0.0, %v2507
          %2509 = vmatmul.f32.gmra.mxu0 %v1727
          %v2510 = vpop.f32.mrf.mxu0
          %v2511 = vadd.f32 0.0, %v2510
          %2512 = vmatmul.f32.gmra.mxu0 %v1728
          %v2513 = vpop.f32.mrf.mxu0
          %v2514 = vadd.f32 0.0, %v2513
          %2515 = vmatmul.f32.gmra.mxu0 %v1729
          %v2516 = vpop.f32.mrf.mxu0
          %v2517 = vadd.f32 0.0, %v2516
          %2518 = vmatmul.f32.gmra.mxu0 %v1730
          %v2519 = vpop.f32.mrf.mxu0
          %v2520 = vadd.f32 0.0, %v2519
          %2521 = vmatmul.f32.gmra.mxu0 %v1731
          %v2522 = vpop.f32.mrf.mxu0
          %v2523 = vadd.f32 0.0, %v2522
          %2524 = vmatmul.f32.gmra.mxu0 %v1732
          %v2525 = vpop.f32.mrf.mxu0
          %v2526 = vadd.f32 0.0, %v2525
          %2527 = vmatmul.f32.gmra.mxu0 %v1733
          %v2528 = vpop.f32.mrf.mxu0
          %v2529 = vadd.f32 0.0, %v2528
          %2530 = vmatmul.f32.gmra.mxu0 %v1734
          %v2531 = vpop.f32.mrf.mxu0
          %v2532 = vadd.f32 0.0, %v2531
          %2533 = vmatmul.f32.gmra.mxu0 %v1735
          %v2534 = vpop.f32.mrf.mxu0
          %v2535 = vadd.f32 0.0, %v2534
          %2536 = vmatmul.f32.gmra.mxu0 %v1736
          %v2537 = vpop.f32.mrf.mxu0
          %v2538 = vadd.f32 0.0, %v2537
          %2539 = vmatmul.f32.gmra.mxu0 %v1737
          %v2540 = vpop.f32.mrf.mxu0
          %v2541 = vadd.f32 0.0, %v2540
          %2542 = vmatmul.f32.gmra.mxu0 %v1738
          %v2543 = vpop.f32.mrf.mxu0
          %v2544 = vadd.f32 0.0, %v2543
          %2545 = vmatmul.f32.gmra.mxu0 %v1739
          %v2546 = vpop.f32.mrf.mxu0
          %v2547 = vadd.f32 0.0, %v2546
          %2548 = vmatmul.f32.gmra.mxu0 %v1740
          %v2549 = vpop.f32.mrf.mxu0
          %v2550 = vadd.f32 0.0, %v2549
          %2551 = vmatmul.f32.gmra.mxu0 %v1741
          %v2552 = vpop.f32.mrf.mxu0
          %v2553 = vadd.f32 0.0, %v2552
          %2554 = vmatmul.f32.gmra.mxu0 %v1742
          %v2555 = vpop.f32.mrf.mxu0
          %v2556 = vadd.f32 0.0, %v2555
          %2557 = vmatmul.f32.gmra.mxu0 %v1743
          %v2558 = vpop.f32.mrf.mxu0
          %v2559 = vadd.f32 0.0, %v2558
          %2560 = vmatmul.f32.gmra.mxu0 %v1744
          %v2561 = vpop.f32.mrf.mxu0
          %v2562 = vadd.f32 0.0, %v2561
          %2563 = vmatmul.f32.gmra.mxu0 %v1745
          %v2564 = vpop.f32.mrf.mxu0
          %v2565 = vadd.f32 0.0, %v2564
          %2566 = vmatmul.f32.gmra.mxu0 %v1746
          %v2567 = vpop.f32.mrf.mxu0
          %v2568 = vadd.f32 0.0, %v2567
          %2569 = vmatmul.f32.gmra.mxu0 %v1747
          %v2570 = vpop.f32.mrf.mxu0
          %v2571 = vadd.f32 0.0, %v2570
          %2572 = vmatmul.f32.gmra.mxu0 %v1748
          %v2573 = vpop.f32.mrf.mxu0
          %v2574 = vadd.f32 0.0, %v2573
          %2575 = vmatmul.f32.gmra.mxu0 %v1749
          %v2576 = vpop.f32.mrf.mxu0
          %v2577 = vadd.f32 0.0, %v2576
          %2578 = vmatmul.f32.gmra.mxu0 %v1750
          %v2579 = vpop.f32.mrf.mxu0
          %v2580 = vadd.f32 0.0, %v2579
          %2581 = vmatmul.f32.gmra.mxu0 %v1751
          %v2582 = vpop.f32.mrf.mxu0
          %v2583 = vadd.f32 0.0, %v2582
          %2584 = vmatmul.f32.gmra.mxu0 %v1752
          %v2585 = vpop.f32.mrf.mxu0
          %v2586 = vadd.f32 0.0, %v2585
          %2587 = vmatmul.f32.gmra.mxu0 %v1753
          %v2588 = vpop.f32.mrf.mxu0
          %v2589 = vadd.f32 0.0, %v2588
          %2590 = vmatmul.f32.gmra.mxu0 %v1754
          %v2591 = vpop.f32.mrf.mxu0
          %v2592 = vadd.f32 0.0, %v2591
          %2593 = vdwg.mxu0
          %v2594 = vadd.f32 %v2367, %v2451
          %v2595 = vadd.f32 %v2368, %v2454
          %v2596 = vadd.f32 %v2369, %v2457
          %v2597 = vadd.f32 %v2370, %v2460
          %v2598 = vadd.f32 %v2371, %v2463
          %v2599 = vadd.f32 %v2372, %v2466
          %v2600 = vadd.f32 %v2373, %v2469
          %v2601 = vadd.f32 %v2374, %v2472
          %v2602 = vadd.f32 %v2375, %v2475
          %v2603 = vadd.f32 %v2376, %v2478
          %v2604 = vadd.f32 %v2377, %v2481
          %v2605 = vadd.f32 %v2378, %v2484
          %v2606 = vadd.f32 %v2379, %v2487
          %v2607 = vadd.f32 %v2380, %v2490
          %v2608 = vadd.f32 %v2381, %v2493
          %v2609 = vadd.f32 %v2382, %v2496
          %v2610 = vadd.f32 %v2383, %v2499
          %v2611 = vadd.f32 %v2384, %v2502
          %v2612 = vadd.f32 %v2385, %v2505
          %v2613 = vadd.f32 %v2386, %v2508
          %v2614 = vadd.f32 %v2387, %v2511
          %v2615 = vadd.f32 %v2388, %v2514
          %v2616 = vadd.f32 %v2389, %v2517
          %v2617 = vadd.f32 %v2390, %v2520
          %v2618 = vadd.f32 %v2391, %v2523
          %v2619 = vadd.f32 %v2392, %v2526
          %v2620 = vadd.f32 %v2393, %v2529
          %v2621 = vadd.f32 %v2394, %v2532
          %v2622 = vadd.f32 %v2395, %v2535
          %v2623 = vadd.f32 %v2396, %v2538
          %v2624 = vadd.f32 %v2397, %v2541
          %v2625 = vadd.f32 %v2398, %v2544
          %v2626 = vadd.f32 %v2399, %v2547
          %v2627 = vadd.f32 %v2400, %v2550
          %v2628 = vadd.f32 %v2401, %v2553
          %v2629 = vadd.f32 %v2402, %v2556
          %v2630 = vadd.f32 %v2403, %v2559
          %v2631 = vadd.f32 %v2404, %v2562
          %v2632 = vadd.f32 %v2405, %v2565
          %v2633 = vadd.f32 %v2406, %v2568
          %v2634 = vadd.f32 %v2407, %v2571
          %v2635 = vadd.f32 %v2408, %v2574
          %v2636 = vadd.f32 %v2409, %v2577
          %v2637 = vadd.f32 %v2410, %v2580
          %v2638 = vadd.f32 %v2411, %v2583
          %v2639 = vadd.f32 %v2412, %v2586
          %v2640 = vadd.f32 %v2413, %v2589
          %v2641 = vadd.f32 %v2414, %v2592
          %2642 = vst [vmem:[%s2366] sm:$0xff] %v2594
          %2643 = vst [vmem:[%s2366 + $0x8] sm:$0xff] %v2595
          %2644 = vst [vmem:[%s2366 + $0x10] sm:$0xff] %v2596
          %2645 = vst [vmem:[%s2366 + $0x18] sm:$0xff] %v2597
          %2646 = vst [vmem:[%s2366 + $0x20] sm:$0xff] %v2598
          %2647 = vst [vmem:[%s2366 + $0x28] sm:$0xff] %v2599
          %2648 = vst [vmem:[%s2366 + $0x30] sm:$0xff] %v2600
          %2649 = vst [vmem:[%s2366 + $0x38] sm:$0xff] %v2601
          %2650 = vst [vmem:[%s2366 + $0x40] sm:$0xff] %v2602
          %2651 = vst [vmem:[%s2366 + $0x48] sm:$0xff] %v2603
          %2652 = vst [vmem:[%s2366 + $0x50] sm:$0xff] %v2604
          %2653 = vst [vmem:[%s2366 + $0x58] sm:$0xff] %v2605
          %2654 = vst [vmem:[%s2366 + $0x60] sm:$0xff] %v2606
          %2655 = vst [vmem:[%s2366 + $0x68] sm:$0xff] %v2607
          %2656 = vst [vmem:[%s2366 + $0x70] sm:$0xff] %v2608
          %2657 = vst [vmem:[%s2366 + $0x78] sm:$0xff] %v2609
          %2658 = vst [vmem:[%s2366 + $0x80] sm:$0xff] %v2610
          %2659 = vst [vmem:[%s2366 + $0x88] sm:$0xff] %v2611
          %2660 = vst [vmem:[%s2366 + $0x90] sm:$0xff] %v2612
          %2661 = vst [vmem:[%s2366 + $0x98] sm:$0xff] %v2613
          %2662 = vst [vmem:[%s2366 + $0xa0] sm:$0xff] %v2614
          %2663 = vst [vmem:[%s2366 + $0xa8] sm:$0xff] %v2615
          %2664 = vst [vmem:[%s2366 + $0xb0] sm:$0xff] %v2616
          %2665 = vst [vmem:[%s2366 + $0xb8] sm:$0xff] %v2617
          %2666 = vst [vmem:[%s2366 + $0xc0] sm:$0xff] %v2618
          %2667 = vst [vmem:[%s2366 + $0xc8] sm:$0xff] %v2619
          %2668 = vst [vmem:[%s2366 + $0xd0] sm:$0xff] %v2620
          %2669 = vst [vmem:[%s2366 + $0xd8] sm:$0xff] %v2621
          %2670 = vst [vmem:[%s2366 + $0xe0] sm:$0xff] %v2622
          %2671 = vst [vmem:[%s2366 + $0xe8] sm:$0xff] %v2623
          %2672 = vst [vmem:[%s2366 + $0xf0] sm:$0xff] %v2624
          %2673 = vst [vmem:[%s2366 + $0xf8] sm:$0xff] %v2625
          %2674 = vst [vmem:[%s2366 + $0x100] sm:$0xff] %v2626
          %2675 = vst [vmem:[%s2366 + $0x108] sm:$0xff] %v2627
          %2676 = vst [vmem:[%s2366 + $0x110] sm:$0xff] %v2628
          %2677 = vst [vmem:[%s2366 + $0x118] sm:$0xff] %v2629
          %2678 = vst [vmem:[%s2366 + $0x120] sm:$0xff] %v2630
          %2679 = vst [vmem:[%s2366 + $0x128] sm:$0xff] %v2631
          %2680 = vst [vmem:[%s2366 + $0x130] sm:$0xff] %v2632
          %2681 = vst [vmem:[%s2366 + $0x138] sm:$0xff] %v2633
          %2682 = vst [vmem:[%s2366 + $0x140] sm:$0xff] %v2634
          %2683 = vst [vmem:[%s2366 + $0x148] sm:$0xff] %v2635
          %2684 = vst [vmem:[%s2366 + $0x150] sm:$0xff] %v2636
          %2685 = vst [vmem:[%s2366 + $0x158] sm:$0xff] %v2637
          %2686 = vst [vmem:[%s2366 + $0x160] sm:$0xff] %v2638
          %2687 = vst [vmem:[%s2366 + $0x168] sm:$0xff] %v2639
          %2688 = vst [vmem:[%s2366 + $0x170] sm:$0xff] %v2640
          %2689 = vst [vmem:[%s2366 + $0x178] sm:$0xff] %v2641
        $region86: #{cheb_graph_conv.1} parent=77 // pred_fallthru
          _
        %s2690 = scalar_lea.vmem [#allocation3], %s146
        %v2691 = vld [vmem:[%s2690] sm:$0xff]
        %v2692 = vld [vmem:[%s2690 + $0x8] sm:$0xff]
        %v2693 = vld [vmem:[%s2690 + $0x10] sm:$0xff]
        %v2694 = vld [vmem:[%s2690 + $0x18] sm:$0xff]
        %v2695 = vld [vmem:[%s2690 + $0x20] sm:$0xff]
        %v2696 = vld [vmem:[%s2690 + $0x28] sm:$0xff]
        %v2697 = vld [vmem:[%s2690 + $0x30] sm:$0xff]
        %v2698 = vld [vmem:[%s2690 + $0x38] sm:$0xff]
        %v2699 = vld [vmem:[%s2690 + $0x40] sm:$0xff]
        %v2700 = vld [vmem:[%s2690 + $0x48] sm:$0xff]
        %v2701 = vld [vmem:[%s2690 + $0x50] sm:$0xff]
        %v2702 = vld [vmem:[%s2690 + $0x58] sm:$0xff]
        %v2703 = vld [vmem:[%s2690 + $0x60] sm:$0xff]
        %v2704 = vld [vmem:[%s2690 + $0x68] sm:$0xff]
        %v2705 = vld [vmem:[%s2690 + $0x70] sm:$0xff]
        %v2706 = vld [vmem:[%s2690 + $0x78] sm:$0xff]
        %v2707 = vld [vmem:[%s2690 + $0x80] sm:$0xff]
        %v2708 = vld [vmem:[%s2690 + $0x88] sm:$0xff]
        %v2709 = vld [vmem:[%s2690 + $0x90] sm:$0xff]
        %v2710 = vld [vmem:[%s2690 + $0x98] sm:$0xff]
        %v2711 = vld [vmem:[%s2690 + $0xa0] sm:$0xff]
        %v2712 = vld [vmem:[%s2690 + $0xa8] sm:$0xff]
        %v2713 = vld [vmem:[%s2690 + $0xb0] sm:$0xff]
        %v2714 = vld [vmem:[%s2690 + $0xb8] sm:$0xff]
        %v2715 = vld [vmem:[%s2690 + $0xc0] sm:$0xff]
        %v2716 = vld [vmem:[%s2690 + $0xc8] sm:$0xff]
        %v2717 = vld [vmem:[%s2690 + $0xd0] sm:$0xff]
        %v2718 = vld [vmem:[%s2690 + $0xd8] sm:$0xff]
        %v2719 = vld [vmem:[%s2690 + $0xe0] sm:$0xff]
        %v2720 = vld [vmem:[%s2690 + $0xe8] sm:$0xff]
        %v2721 = vld [vmem:[%s2690 + $0xf0] sm:$0xff]
        %v2722 = vld [vmem:[%s2690 + $0xf8] sm:$0xff]
        %v2723 = vld [vmem:[%s2690 + $0x100] sm:$0xff]
        %v2724 = vld [vmem:[%s2690 + $0x108] sm:$0xff]
        %v2725 = vld [vmem:[%s2690 + $0x110] sm:$0xff]
        %v2726 = vld [vmem:[%s2690 + $0x118] sm:$0xff]
        %v2727 = vld [vmem:[%s2690 + $0x120] sm:$0xff]
        %v2728 = vld [vmem:[%s2690 + $0x128] sm:$0xff]
        %v2729 = vld [vmem:[%s2690 + $0x130] sm:$0xff]
        %v2730 = vld [vmem:[%s2690 + $0x138] sm:$0xff]
        %v2731 = vld [vmem:[%s2690 + $0x140] sm:$0xff]
        %v2732 = vld [vmem:[%s2690 + $0x148] sm:$0xff]
        %v2733 = vld [vmem:[%s2690 + $0x150] sm:$0xff]
        %v2734 = vld [vmem:[%s2690 + $0x158] sm:$0xff]
        %v2735 = vld [vmem:[%s2690 + $0x160] sm:$0xff]
        %v2736 = vld [vmem:[%s2690 + $0x168] sm:$0xff]
        %v2737 = vld [vmem:[%s2690 + $0x170] sm:$0xff]
        %v2738 = vld [vmem:[%s2690 + $0x178] sm:$0xff]
        %2739 = vst [vmem:[%s144] sm:$0xff] %v2691
        %2740 = vst [vmem:[%s144 + $0x8] sm:$0xff] %v2692
        %2741 = vst [vmem:[%s144 + $0x10] sm:$0xff] %v2693
        %2742 = vst [vmem:[%s144 + $0x18] sm:$0xff] %v2694
        %2743 = vst [vmem:[%s144 + $0x20] sm:$0xff] %v2695
        %2744 = vst [vmem:[%s144 + $0x28] sm:$0xff] %v2696
        %2745 = vst [vmem:[%s144 + $0x30] sm:$0xff] %v2697
        %2746 = vst [vmem:[%s144 + $0x38] sm:$0xff] %v2698
        %2747 = vst [vmem:[%s144 + $0x40] sm:$0xff] %v2699
        %2748 = vst [vmem:[%s144 + $0x48] sm:$0xff] %v2700
        %2749 = vst [vmem:[%s144 + $0x50] sm:$0xff] %v2701
        %2750 = vst [vmem:[%s144 + $0x58] sm:$0xff] %v2702
        %2751 = vst [vmem:[%s144 + $0x60] sm:$0xff] %v2703
        %2752 = vst [vmem:[%s144 + $0x68] sm:$0xff] %v2704
        %2753 = vst [vmem:[%s144 + $0x70] sm:$0xff] %v2705
        %2754 = vst [vmem:[%s144 + $0x78] sm:$0xff] %v2706
        %2755 = vst [vmem:[%s144 + $0x80] sm:$0xff] %v2707
        %2756 = vst [vmem:[%s144 + $0x88] sm:$0xff] %v2708
        %2757 = vst [vmem:[%s144 + $0x90] sm:$0xff] %v2709
        %2758 = vst [vmem:[%s144 + $0x98] sm:$0xff] %v2710
        %2759 = vst [vmem:[%s144 + $0xa0] sm:$0xff] %v2711
        %2760 = vst [vmem:[%s144 + $0xa8] sm:$0xff] %v2712
        %2761 = vst [vmem:[%s144 + $0xb0] sm:$0xff] %v2713
        %2762 = vst [vmem:[%s144 + $0xb8] sm:$0xff] %v2714
        %2763 = vst [vmem:[%s144 + $0xc0] sm:$0xff] %v2715
        %2764 = vst [vmem:[%s144 + $0xc8] sm:$0xff] %v2716
        %2765 = vst [vmem:[%s144 + $0xd0] sm:$0xff] %v2717
        %2766 = vst [vmem:[%s144 + $0xd8] sm:$0xff] %v2718
        %2767 = vst [vmem:[%s144 + $0xe0] sm:$0xff] %v2719
        %2768 = vst [vmem:[%s144 + $0xe8] sm:$0xff] %v2720
        %2769 = vst [vmem:[%s144 + $0xf0] sm:$0xff] %v2721
        %2770 = vst [vmem:[%s144 + $0xf8] sm:$0xff] %v2722
        %2771 = vst [vmem:[%s144 + $0x100] sm:$0xff] %v2723
        %2772 = vst [vmem:[%s144 + $0x108] sm:$0xff] %v2724
        %2773 = vst [vmem:[%s144 + $0x110] sm:$0xff] %v2725
        %2774 = vst [vmem:[%s144 + $0x118] sm:$0xff] %v2726
        %2775 = vst [vmem:[%s144 + $0x120] sm:$0xff] %v2727
        %2776 = vst [vmem:[%s144 + $0x128] sm:$0xff] %v2728
        %2777 = vst [vmem:[%s144 + $0x130] sm:$0xff] %v2729
        %2778 = vst [vmem:[%s144 + $0x138] sm:$0xff] %v2730
        %2779 = vst [vmem:[%s144 + $0x140] sm:$0xff] %v2731
        %2780 = vst [vmem:[%s144 + $0x148] sm:$0xff] %v2732
        %2781 = vst [vmem:[%s144 + $0x150] sm:$0xff] %v2733
        %2782 = vst [vmem:[%s144 + $0x158] sm:$0xff] %v2734
        %2783 = vst [vmem:[%s144 + $0x160] sm:$0xff] %v2735
        %2784 = vst [vmem:[%s144 + $0x168] sm:$0xff] %v2736
        %2785 = vst [vmem:[%s144 + $0x170] sm:$0xff] %v2737
        %2786 = vst [vmem:[%s144 + $0x178] sm:$0xff] %v2738
      $region78: #{cheb_graph_conv.1} parent=27 // pred_fallthru
        _
      %s2787 = smul.u32 48, %s21
      %p2788 = scmp.lt.s32.totalorder %s2787, 47
      %s2789 = scalar_select %p2788, %s2787, 47
      %s2790 = smul.addr %s2789, 8
      %s2791 = scalar_lea.vmem %s4, %s2790
      // Predicated region
      $region87: #{cheb_graph_conv.1} parent=27 // pred_check
        %p2792 = pneg %p94
      $region88: #{cheb_graph_conv.1} parent=27 // pred_check_branch
        %2794 = sbr.rel (%p2792) target = $region90
      $region89: #{cheb_graph_conv.1} parent=27 // pred_region
        %s2795 = smul.u32 48, %s21
      $region90: #{cheb_graph_conv.1} parent=27 // pred_fallthru
        _
      // Predicated region
      $region91: #{cheb_graph_conv.1} parent=27 // pred_check
        %p2796 = pneg %p94
      $region92: #{cheb_graph_conv.1} parent=27 // pred_check_branch
        %2798 = sbr.rel (%p2796) target = $region94
      $region93: #{cheb_graph_conv.1} parent=27 // pred_region
        %s2799 = smul.u32 48, %s21
        %p2800 = scmp.lt.s32.totalorder %s2799, 47
        %s2801 = scalar_select %p2800, %s2799, 47
        %s2802 = smul.addr %s2801, 8
        %s2803 = scalar_lea.vmem %s4, %s2802
      $region94: #{cheb_graph_conv.1} parent=27 // pred_fallthru
        _
    $region28: #{cheb_graph_conv.1} parent=5 // pred_fallthru
      _
    %p2804 = scmp.le.s32.totalorder 2, %s10
    // Predicated region
    $region95: #{cheb_graph_conv.1} parent=5 // pred_check
      %p2805 = pneg %p2804
    $region96: #{cheb_graph_conv.1} parent=5 // pred_check_branch
      %2807 = sbr.rel (%p2805) target = $region98
    $region97: #{cheb_graph_conv.1} parent=5 // pred_region
      %s2808 = ssub.s32 %s10, 2
    $region98: #{cheb_graph_conv.1} parent=5 // pred_fallthru
      _
  $region6: #{cheb_graph_conv.1} parent=0 // loop_footer
    %s14 = sadd.s32 1, %s10
  $region7: #{cheb_graph_conv.1} parent=0 // loop_footer_branch
    %9 = sbr.rel target = $region3
  $region8: #{cheb_graph_conv.1} parent=0 // loop_exit
    _
  %2809 = vsyncmov [#allocation6]
  %s2810 = vpop.sfrf %2809
  %p2811 = scmp.eq.s32.totalorder %s2810, 0
  %p2812 = pneg %p2811
  %2814 = shalt.err (%p2812)
  %s2815 = scalar_lea.sflag [#allocation6], 1
  %2816 = vsyncmov %s2815
  %s2817 = vpop.sfrf %2816
  %p2818 = scmp.eq.s32.totalorder %s2817, 0
  %p2819 = pneg %p2818
  %2821 = shalt.err (%p2819)

</llo_original>
